<compile_context>
chip_gen: v7x
topology: tpu7x:2x2x1
jax: 0.10.0
libtpu: 0.0.40
codegen_flags: <defaults>
</compile_context>

<pallas_src>
import jax
import jax.numpy as jnp
from jax.experimental import pallas as pl
from jax.experimental.pallas import tpu as pltpu

# ---------------- scaled-down ViT-L/16 configuration (toy sizes) -------------
IMG = 32          # image side (real model: 224)
PATCH = 8         # patch side (real model: 16)
C_IN = 3
EMBED_DIM = 64    # real model: 1024 (= num_ftrs of the head)
DEPTH = 2         # real model: 24
NUM_HEADS = 4     # real model: 16
MLP_DIM = 4 * EMBED_DIM
HEAD_H1 = 128     # stands in for 1024 in the custom head
HEAD_H2 = 64      # stands in for 512 in the custom head
NUM_CLASSES = 102
NUM_PATCHES = (IMG // PATCH) ** 2
SEQ = NUM_PATCHES + 1               # +1 class token
HEAD_DIM = EMBED_DIM // NUM_HEADS
PATCH_FEAT = C_IN * PATCH * PATCH   # 192


def _round_up(n, m):
    return ((n + m - 1) // m) * m


# -------- padded ("lane-dense") sizes used by the fused kernel ----------------
D_PAD = _round_up(EMBED_DIM, 128)        # 128 lanes for the token feature dim
S_PAD = _round_up(SEQ, 8)                # 24 token rows
PF_PAD = _round_up(PATCH_FEAT, 128)      # 256 lanes for the patch pixels
H2_PAD = _round_up(HEAD_H2, 128)         # 128
NCLS_PAD = _round_up(NUM_CLASSES, 128)   # 128
HEAD_PAD = 128                           # each head gets its own 128-lane tile
HN = NUM_HEADS * HEAD_PAD                # 512
QKV_N = 3 * HN                           # 1536
Q_OFF, K_OFF, V_OFF = 0, HN, 2 * HN


# ------------------------- in-kernel math helpers -----------------------------
# Exact-GELU via Abramowitz-Stegun 7.1.26 erf approximation (|err| < 1.5e-7).
_ERF_A1, _ERF_A2, _ERF_A3, _ERF_A4, _ERF_A5 = (
    0.254829592, -0.284496736, 1.421413741, -1.453152027, 1.061405429)
_ERF_P = 0.3275911
_INV_SQRT2 = 0.7071067811865476


def _erf(z):
    a = jnp.abs(z)
    t = 1.0 / (1.0 + _ERF_P * a)
    poly = t * (_ERF_A1 + t * (_ERF_A2 + t * (_ERF_A3 + t * (_ERF_A4 + t * _ERF_A5))))
    r = 1.0 - poly * jnp.exp(-a * a)
    return jnp.where(z >= 0, r, -r)


def _gelu_exact(x):
    return 0.5 * x * (1.0 + _erf(x * _INV_SQRT2))


def _layernorm(x, g, b, d_real, eps):
    """LayerNorm over the first `d_real` lanes of a (rows, D_PAD) slab.

    Padded lanes of x are zero by construction, so mean and E[x^2] taken over
    all D_PAD lanes but divided by d_real give the exact (biased) statistics;
    gamma/beta are zero on padded lanes so the zero-lane invariant is kept.
    """
    inv_d = 1.0 / float(d_real)
    mean = jnp.sum(x, axis=-1, keepdims=True) * inv_d
    var = jnp.sum(x * x, axis=-1, keepdims=True) * inv_d - mean * mean
    return (x - mean) * jax.lax.rsqrt(var + eps) * g + b


def _dot(x, w_bf16):
    """bf16 MXU matmul with f32 accumulation."""
    return jnp.dot(x.astype(jnp.bfloat16), w_bf16, preferred_element_type=jnp.float32)


# ------------------------------ fused Pallas kernel ----------------------------
def _vit_kernel(patches_ref, patch_w, pos_cls,
                ln1_g, ln1_b, qkv_w, qkv_b, proj_w, proj_b,
                ln2_g, ln2_b, fc1_w, fc1_b, fc2_w, fc2_b,
                norm_g, norm_b, hln_g, hln_b,
                w1, b1, w2, b2, w3, b3,
                logits_ref, h_ref):
    d = pl.program_id(1)

    # ---- patch embedding (Conv2d k=stride=PATCH == one matmul), depth step 0 ----
    # patches rows are already shifted to token positions (row 0 / pad rows = 0);
    # pos_cls has cls_token folded into row 0 and patch_b folded into rows 1..NP.
    @pl.when(d == 0)
    def _():
        h_ref[...] = _dot(patches_ref[0], patch_w[...]) + pos_cls[...]

    h = h_ref[...]                                                 # (S_PAD, D_PAD) f32

    # masks built once per grid step (hoisted out of the head loop)
    key_mask = jax.lax.broadcasted_iota(jnp.int32, (1, S_PAD), 1) < SEQ
    row_mask = jax.lax.broadcasted_iota(jnp.int32, (S_PAD, 1), 0) < SEQ

    # ---- attention sub-block (pre-LN, eps=1e-6 as in timm ViT) ----
    y = _layernorm(h, ln1_g[0], ln1_b[0], EMBED_DIM, 1e-6)
    qkv = _dot(y, qkv_w[0]) + qkv_b[0]                             # (S_PAD, QKV_N)

    heads = []
    for hd in range(NUM_HEADS):                                    # static, unrolled
        base = hd * HEAD_PAD                                       # 128-lane aligned
        q_h = qkv[:, Q_OFF + base:Q_OFF + base + HEAD_PAD].astype(jnp.bfloat16)
        k_h = qkv[:, K_OFF + base:K_OFF + base + HEAD_PAD].astype(jnp.bfloat16)
        v_h = qkv[:, V_OFF + base:V_OFF + base + HEAD_PAD].astype(jnp.bfloat16)
        s = jax.lax.dot_general(q_h, k_h, (((1,), (1,)), ((), ())),
                                preferred_element_type=jnp.float32)  # (S_PAD, S_PAD)
        s = jnp.where(key_mask, s, -1e30)
        s = s - jnp.max(s, axis=-1, keepdims=True)
        p = jnp.exp(s)
        p = p * pl.reciprocal(jnp.sum(p, axis=-1, keepdims=True), approx=True)
        heads.append(jnp.dot(p.astype(jnp.bfloat16), v_h,
                             preferred_element_type=jnp.float32))  # (S_PAD, HEAD_PAD)
    ctx = jnp.concatenate(heads, axis=-1)                          # (S_PAD, HN)
    h = h + _dot(ctx, proj_w[0]) + proj_b[0]                       # one wide K=HN dot

    # ---- MLP sub-block ----
    y = _layernorm(h, ln2_g[0], ln2_b[0], EMBED_DIM, 1e-6)
    z = _gelu_exact(_dot(y, fc1_w[0]) + fc1_b[0])
    h = h + _dot(z, fc2_w[0]) + fc2_b[0]

    # keep padded token rows exactly zero (beta leaks in via LayerNorm otherwise)
    h = jnp.where(row_mask, h, 0.0)
    h_ref[...] = h

    # ---- final norm + class-token pooling + custom head, last depth step ----
    # Dropout layers are identity in eval mode.
    @pl.when(d == DEPTH - 1)
    def _():
        cls = h[0:1, :]                                            # class token row
        x = _layernorm(cls, norm_g[...], norm_b[...], EMBED_DIM, 1e-6)  # timm norm
        x = _layernorm(x, hln_g[...], hln_b[...], EMBED_DIM, 1e-5)      # head LN
        x = _gelu_exact(_dot(x, w1[...]) + b1[...])
        x = _gelu_exact(_dot(x, w2[...]) + b2[...])
        logits_ref[0] = _dot(x, w3[...]) + b3[...]


# ------------------------------ kernel wrapper --------------------------------
def pallas_vit(patches_slab, p):
    B = patches_slab.shape[0]

    def dvec(n):        # depth-stacked (DEPTH, 1, n)
        return pl.BlockSpec((1, 1, n), lambda b, d: (d, 0, 0))

    def dmat(r, c):     # depth-stacked (DEPTH, r, c)
        return pl.BlockSpec((1, r, c), lambda b, d: (d, 0, 0))

    def hvec(n):        # constant (1, n)
        return pl.BlockSpec((1, n), lambda b, d: (0, 0))

    def hmat(r, c):     # constant (r, c)
        return pl.BlockSpec((r, c), lambda b, d: (0, 0))

    in_specs = [
        pl.BlockSpec((1, S_PAD, PF_PAD), lambda b, d: (b, 0, 0)),   # patches
        hmat(PF_PAD, D_PAD),                                        # patch_w
        hmat(S_PAD, D_PAD),                                         # pos_cls (+bias)
        dvec(D_PAD), dvec(D_PAD),                                   # ln1 g, b
        dmat(D_PAD, QKV_N), dvec(QKV_N),                            # qkv w, b
        dmat(HN, D_PAD), dvec(D_PAD),                               # proj w, b
        dvec(D_PAD), dvec(D_PAD),                                   # ln2 g, b
        dmat(D_PAD, MLP_DIM), dvec(MLP_DIM),                        # fc1 w, b
        dmat(MLP_DIM, D_PAD), dvec(D_PAD),                          # fc2 w, b
        hvec(D_PAD), hvec(D_PAD),                                   # final norm
        hvec(D_PAD), hvec(D_PAD),                                   # head LN
        hmat(D_PAD, HEAD_H1), hvec(HEAD_H1),                        # head fc1
        hmat(HEAD_H1, H2_PAD), hvec(H2_PAD),                        # head fc2
        hmat(H2_PAD, NCLS_PAD), hvec(NCLS_PAD),                     # head fc3
    ]

    return pl.pallas_call(
        _vit_kernel,
        out_shape=jax.ShapeDtypeStruct((B, 1, NCLS_PAD), jnp.float32),
        grid=(B, DEPTH),
        in_specs=in_specs,
        out_specs=pl.BlockSpec((1, 1, NCLS_PAD), lambda b, d: (b, 0, 0)),
        scratch_shapes=[pltpu.VMEM((S_PAD, D_PAD), jnp.float32)],   # resident h
        compiler_params=pltpu.CompilerParams(
            dimension_semantics=("parallel", "arbitrary")),
    )(patches_slab,
      p["patch_w"], p["pos_cls"],
      p["ln1_g"], p["ln1_b"], p["qkv_w"], p["qkv_b"],
      p["proj_w"], p["proj_b"], p["ln2_g"], p["ln2_b"],
      p["fc1_w"], p["fc1_b"], p["fc2_w"], p["fc2_b"],
      p["norm_g"], p["norm_b"], p["head_ln_g"], p["head_ln_b"],
      p["head_fc1_w"], p["head_fc1_b"], p["head_fc2_w"], p["head_fc2_b"],
      p["head_fc3_w"], p["head_fc3_b"])


# ------------------------------ model forward ----------------------------------
def vit_forward(params, x):
    """x: (B, C, H, W) NCHW float32 -> logits (B, NUM_CLASSES)."""
    B = x.shape[0]
    hp = IMG // PATCH

    # patch im2col (Conv2d k=stride=PATCH) in the wrapper; rows shifted to token
    # positions so the kernel needs no concatenate / offset store.
    patches = x.reshape(B, C_IN, hp, PATCH, hp, PATCH)
    patches = patches.transpose(0, 2, 4, 1, 3, 5).reshape(B, NUM_PATCHES, PATCH_FEAT)
    slab = jnp.zeros((B, S_PAD, PF_PAD), jnp.float32)
    slab = slab.at[:, 1:1 + NUM_PATCHES, :PATCH_FEAT].set(patches)

    logits_pad = pallas_vit(slab, params)        # (B, 1, NCLS_PAD), one launch
    return logits_pad[:, 0, :NUM_CLASSES]


# ------------------------------ parameter init ---------------------------------
def init_params(key):
    """Real (unpadded) parameter shapes, matching the PyTorch module layout."""
    keys = iter(jax.random.split(key, 64))

    def nrm(shape, std=0.02):
        return (std * jax.random.normal(next(keys), shape)).astype(jnp.float32)

    def zeros(shape):
        return jnp.zeros(shape, jnp.float32)

    def ones(shape):
        return jnp.ones(shape, jnp.float32)

    params = {
        # linear weights stored (in_features, out_features) for x @ W
        "patch_w": nrm((PATCH_FEAT, EMBED_DIM)),
        "patch_b": zeros((EMBED_DIM,)),
        "cls_token": nrm((1, 1, EMBED_DIM)),
        "pos_embed": nrm((1, SEQ, EMBED_DIM)),
        "blocks": [],
        "norm_g": ones((EMBED_DIM,)), "norm_b": zeros((EMBED_DIM,)),
        "head_ln_g": ones((EMBED_DIM,)), "head_ln_b": zeros((EMBED_DIM,)),
        "head_fc1_w": nrm((EMBED_DIM, HEAD_H1)), "head_fc1_b": zeros((HEAD_H1,)),
        "head_fc2_w": nrm((HEAD_H1, HEAD_H2)), "head_fc2_b": zeros((HEAD_H2,)),
        "head_fc3_w": nrm((HEAD_H2, NUM_CLASSES)), "head_fc3_b": zeros((NUM_CLASSES,)),
    }
    for _ in range(DEPTH):
        params["blocks"].append({
            "ln1_g": ones((EMBED_DIM,)), "ln1_b": zeros((EMBED_DIM,)),
            "qkv_w": nrm((EMBED_DIM, 3 * EMBED_DIM)), "qkv_b": zeros((3 * EMBED_DIM,)),
            "proj_w": nrm((EMBED_DIM, EMBED_DIM)), "proj_b": zeros((EMBED_DIM,)),
            "ln2_g": ones((EMBED_DIM,)), "ln2_b": zeros((EMBED_DIM,)),
            "fc1_w": nrm((EMBED_DIM, MLP_DIM)), "fc1_b": zeros((MLP_DIM,)),
            "fc2_w": nrm((MLP_DIM, EMBED_DIM)), "fc2_b": zeros((EMBED_DIM,)),
        })
    return params


def prepare_params(p):
    """Pad to lane/sublane-dense shapes, lay q/k/v/proj out head-tile aligned,
    fold the attention scale into q, fold cls/pos/patch_b into one embed slab,
    stack per-layer tensors with a leading DEPTH axis, pre-cast matmul weights
    to bf16."""
    scale = HEAD_DIM ** -0.5

    def pad2(w, rows, cols):
        return jnp.zeros((rows, cols), jnp.float32).at[:w.shape[0], :w.shape[1]].set(w)

    def vrow(v, n):
        return jnp.zeros((1, n), jnp.float32).at[0, :v.shape[0]].set(v)

    # cls_token + pos_embed + patch bias folded into one padded slab
    pos = p["pos_embed"].reshape(SEQ, EMBED_DIM)
    pos_cls = jnp.zeros((S_PAD, D_PAD), jnp.float32)
    pos_cls = pos_cls.at[0, :EMBED_DIM].set(pos[0] + p["cls_token"].reshape(EMBED_DIM))
    pos_cls = pos_cls.at[1:SEQ, :EMBED_DIM].set(pos[1:] + p["patch_b"][None, :])

    out = {
        "patch_w": pad2(p["patch_w"], PF_PAD, D_PAD).astype(jnp.bfloat16),
        "pos_cls": pos_cls,
        "norm_g": vrow(p["norm_g"], D_PAD), "norm_b": vrow(p["norm_b"], D_PAD),
        "head_ln_g": vrow(p["head_ln_g"], D_PAD),
        "head_ln_b": vrow(p["head_ln_b"], D_PAD),
        "head_fc1_w": pad2(p["head_fc1_w"], D_PAD, HEAD_H1).astype(jnp.bfloat16),
        "head_fc1_b": vrow(p["head_fc1_b"], HEAD_H1),
        "head_fc2_w": pad2(p["head_fc2_w"], HEAD_H1, H2_PAD).astype(jnp.bfloat16),
        "head_fc2_b": vrow(p["head_fc2_b"], H2_PAD),
        "head_fc3_w": pad2(p["head_fc3_w"], H2_PAD, NCLS_PAD).astype(jnp.bfloat16),
        "head_fc3_b": vrow(p["head_fc3_b"], NCLS_PAD),
    }

    stacks = {k: [] for k in ("ln1_g", "ln1_b", "qkv_w", "qkv_b", "proj_w",
                              "proj_b", "ln2_g", "ln2_b", "fc1_w", "fc1_b",
                              "fc2_w", "fc2_b")}
    for blk in p["blocks"]:
        qw, qb = blk["qkv_w"], blk["qkv_b"]
        qkv_w = jnp.zeros((D_PAD, QKV_N), jnp.float32)
        qkv_b = jnp.zeros((1, QKV_N), jnp.float32)
        proj_w = jnp.zeros((HN, D_PAD), jnp.float32)
        for hd in range(NUM_HEADS):
            src = slice(hd * HEAD_DIM, (hd + 1) * HEAD_DIM)
            base = hd * HEAD_PAD
            # q (pre-scaled), k, v columns of head hd -> their own 128-lane tile
            qkv_w = qkv_w.at[:EMBED_DIM, Q_OFF + base:Q_OFF + base + HEAD_DIM].set(
                qw[:, :EMBED_DIM][:, src] * scale)
            qkv_w = qkv_w.at[:EMBED_DIM, K_OFF + base:K_OFF + base + HEAD_DIM].set(
                qw[:, EMBED_DIM:2 * EMBED_DIM][:, src])
            qkv_w = qkv_w.at[:EMBED_DIM, V_OFF + base:V_OFF + base + HEAD_DIM].set(
                qw[:, 2 * EMBED_DIM:][:, src])
            qkv_b = qkv_b.at[0, Q_OFF + base:Q_OFF + base + HEAD_DIM].set(
                qb[:EMBED_DIM][src] * scale)
            qkv_b = qkv_b.at[0, K_OFF + base:K_OFF + base + HEAD_DIM].set(
                qb[EMBED_DIM:2 * EMBED_DIM][src])
            qkv_b = qkv_b.at[0, V_OFF + base:V_OFF + base + HEAD_DIM].set(
                qb[2 * EMBED_DIM:][src])
            # proj rows for head hd live at the matching 128-row tile offset
            proj_w = proj_w.at[base:base + HEAD_DIM, :EMBED_DIM].set(
                blk["proj_w"][src, :])
        stacks["ln1_g"].append(vrow(blk["ln1_g"], D_PAD))
        stacks["ln1_b"].append(vrow(blk["ln1_b"], D_PAD))
        stacks["qkv_w"].append(qkv_w.astype(jnp.bfloat16))
        stacks["qkv_b"].append(qkv_b)
        stacks["proj_w"].append(proj_w.astype(jnp.bfloat16))
        stacks["proj_b"].append(vrow(blk["proj_b"], D_PAD))
        stacks["ln2_g"].append(vrow(blk["ln2_g"], D_PAD))
        stacks["ln2_b"].append(vrow(blk["ln2_b"], D_PAD))
        stacks["fc1_w"].append(pad2(blk["fc1_w"], D_PAD, MLP_DIM).astype(jnp.bfloat16))
        stacks["fc1_b"].append(vrow(blk["fc1_b"], MLP_DIM))
        stacks["fc2_w"].append(pad2(blk["fc2_w"], MLP_DIM, D_PAD).astype(jnp.bfloat16))
        stacks["fc2_b"].append(vrow(blk["fc2_b"], D_PAD))

    for k, v in stacks.items():
        out[k] = jnp.stack(v, axis=0)   # leading DEPTH axis, indexed by grid coord d
    return out


# ----------------------------------- main ---------------------------------------
if __name__ == "__main__":
    key = jax.random.PRNGKey(0)
    pkey, xkey = jax.random.split(key)
    params = prepare_params(init_params(pkey))

    # input: PyTorch NCHW (batch=2, channels=3, 32x32)
    x = jax.random.normal(xkey, (2, C_IN, IMG, IMG), dtype=jnp.float32)

    logits = jax.jit(vit_forward)(params, x)
    logits = jax.block_until_ready(logits)

    assert logits.shape == (2, NUM_CLASSES), logits.shape
    assert logits.dtype == jnp.float32
    assert bool(jnp.all(jnp.isfinite(logits)))
    print("KERNEL_OK")
</pallas_src>

<mosaic_0001>
module attributes {stable_mosaic.version = 11 : i64} {
  func.func @_vit_kernel(%arg0: i32, %arg1: i32, %arg2: memref<1x24x256xf32, #tpu.memory_space<vmem>>, %arg3: memref<256x128xbf16, #tpu.memory_space<vmem>>, %arg4: memref<24x128xf32, #tpu.memory_space<vmem>>, %arg5: memref<1x1x128xf32, #tpu.memory_space<vmem>>, %arg6: memref<1x1x128xf32, #tpu.memory_space<vmem>>, %arg7: memref<1x128x1536xbf16, #tpu.memory_space<vmem>>, %arg8: memref<1x1x1536xf32, #tpu.memory_space<vmem>>, %arg9: memref<1x512x128xbf16, #tpu.memory_space<vmem>>, %arg10: memref<1x1x128xf32, #tpu.memory_space<vmem>>, %arg11: memref<1x1x128xf32, #tpu.memory_space<vmem>>, %arg12: memref<1x1x128xf32, #tpu.memory_space<vmem>>, %arg13: memref<1x128x256xbf16, #tpu.memory_space<vmem>>, %arg14: memref<1x1x256xf32, #tpu.memory_space<vmem>>, %arg15: memref<1x256x128xbf16, #tpu.memory_space<vmem>>, %arg16: memref<1x1x128xf32, #tpu.memory_space<vmem>>, %arg17: memref<1x128xf32, #tpu.memory_space<vmem>>, %arg18: memref<1x128xf32, #tpu.memory_space<vmem>>, %arg19: memref<1x128xf32, #tpu.memory_space<vmem>>, %arg20: memref<1x128xf32, #tpu.memory_space<vmem>>, %arg21: memref<128x128xbf16, #tpu.memory_space<vmem>>, %arg22: memref<1x128xf32, #tpu.memory_space<vmem>>, %arg23: memref<128x128xbf16, #tpu.memory_space<vmem>>, %arg24: memref<1x128xf32, #tpu.memory_space<vmem>>, %arg25: memref<128x128xbf16, #tpu.memory_space<vmem>>, %arg26: memref<1x128xf32, #tpu.memory_space<vmem>>, %arg27: memref<1x1x128xf32, #tpu.memory_space<vmem>>, %arg28: memref<24x128xf32, #tpu.memory_space<vmem>>) attributes {dimension_semantics = [#tpu.dimension_semantics<parallel>, #tpu.dimension_semantics<arbitrary>], iteration_bounds = array<i64: 2, 2>, scalar_prefetch = 0 : i64, scratch_operands = 1 : i64, tpu.core_type = #tpu.core_type<tc>, window_params = [{transform_indices = @transform_0, window_bounds = array<i64: 1, 24, 256>}, {pipeline_mode = #tpu.pipeline_mode<synchronous>, transform_indices = @transform_1, window_bounds = array<i64: 256, 128>}, {pipeline_mode = #tpu.pipeline_mode<synchronous>, transform_indices = @transform_2, window_bounds = array<i64: 24, 128>}, {transform_indices = @transform_3, window_bounds = array<i64: 1, 1, 128>}, {transform_indices = @transform_4, window_bounds = array<i64: 1, 1, 128>}, {transform_indices = @transform_5, window_bounds = array<i64: 1, 128, 1536>}, {transform_indices = @transform_6, window_bounds = array<i64: 1, 1, 1536>}, {transform_indices = @transform_7, window_bounds = array<i64: 1, 512, 128>}, {transform_indices = @transform_8, window_bounds = array<i64: 1, 1, 128>}, {transform_indices = @transform_9, window_bounds = array<i64: 1, 1, 128>}, {transform_indices = @transform_10, window_bounds = array<i64: 1, 1, 128>}, {transform_indices = @transform_11, window_bounds = array<i64: 1, 128, 256>}, {transform_indices = @transform_12, window_bounds = array<i64: 1, 1, 256>}, {transform_indices = @transform_13, window_bounds = array<i64: 1, 256, 128>}, {transform_indices = @transform_14, window_bounds = array<i64: 1, 1, 128>}, {pipeline_mode = #tpu.pipeline_mode<synchronous>, transform_indices = @transform_15, window_bounds = array<i64: 1, 128>}, {pipeline_mode = #tpu.pipeline_mode<synchronous>, transform_indices = @transform_16, window_bounds = array<i64: 1, 128>}, {pipeline_mode = #tpu.pipeline_mode<synchronous>, transform_indices = @transform_17, window_bounds = array<i64: 1, 128>}, {pipeline_mode = #tpu.pipeline_mode<synchronous>, transform_indices = @transform_18, window_bounds = array<i64: 1, 128>}, {pipeline_mode = #tpu.pipeline_mode<synchronous>, transform_indices = @transform_19, window_bounds = array<i64: 128, 128>}, {pipeline_mode = #tpu.pipeline_mode<synchronous>, transform_indices = @transform_20, window_bounds = array<i64: 1, 128>}, {pipeline_mode = #tpu.pipeline_mode<synchronous>, transform_indices = @transform_21, window_bounds = array<i64: 128, 128>}, {pipeline_mode = #tpu.pipeline_mode<synchronous>, transform_indices = @transform_22, window_bounds = array<i64: 1, 128>}, {pipeline_mode = #tpu.pipeline_mode<synchronous>, transform_indices = @transform_23, window_bounds = array<i64: 128, 128>}, {pipeline_mode = #tpu.pipeline_mode<synchronous>, transform_indices = @transform_24, window_bounds = array<i64: 1, 128>}, {transform_indices = @transform_25, window_bounds = array<i64: 1, 1, 128>}]} {
    %c0_i32 = arith.constant 0 : i32
    %0 = arith.cmpi eq, %arg1, %c0_i32 : i32
    %1 = arith.extui %0 : i1 to i32
    %c0_i32_0 = arith.constant 0 : i32
    %2 = arith.cmpi ne, %1, %c0_i32_0 : i32
    scf.if %2 {
      %c0_91 = arith.constant 0 : index
      %c0_92 = arith.constant 0 : index
      %c0_93 = arith.constant 0 : index
      %237 = vector.load %arg2[%c0_91, %c0_92, %c0_93] : memref<1x24x256xf32, #tpu.memory_space<vmem>>, vector<1x24x256xf32>
      %238 = vector.shape_cast %237 : vector<1x24x256xf32> to vector<24x256xf32>
      %c0_94 = arith.constant 0 : index
      %c0_95 = arith.constant 0 : index
      %239 = vector.load %arg3[%c0_94, %c0_95] : memref<256x128xbf16, #tpu.memory_space<vmem>>, vector<256x128xbf16>
      %240 = arith.truncf %238 : vector<24x256xf32> to vector<24x256xbf16>
      %cst_96 = arith.constant dense<0.000000e+00> : vector<24x128xf32>
      %241 = tpu.matmul %240, %239, %cst_96 {dimension_numbers = #tpu.dot_dimension_numbers<[1], [0], [0], [1], [0, 0, 1, 1], [], []>} : vector<24x256xbf16>, vector<256x128xbf16>, vector<24x128xf32> -> vector<24x128xf32>
      %c0_97 = arith.constant 0 : index
      %c0_98 = arith.constant 0 : index
      %242 = vector.load %arg4[%c0_97, %c0_98] : memref<24x128xf32, #tpu.memory_space<vmem>>, vector<24x128xf32>
      %243 = arith.addf %241, %242 : vector<24x128xf32>
      %c0_99 = arith.constant 0 : index
      %c0_100 = arith.constant 0 : index
      %244 = vector.load %arg28[%c0_99, %c0_100] : memref<24x128xf32, #tpu.memory_space<vmem>>, vector<24x128xf32>
      tpu.vector_store %arg28[%c0_99, %c0_100], %243 {strides = array<i32>} : memref<24x128xf32, #tpu.memory_space<vmem>>, vector<24x128xf32>,
    } else {
    }
    %c0 = arith.constant 0 : index
    %c0_1 = arith.constant 0 : index
    %3 = vector.load %arg28[%c0, %c0_1] : memref<24x128xf32, #tpu.memory_space<vmem>>, vector<24x128xf32>
    %4 = tpu.iota {dimensions = array<i32: 1>} : vector<1x24xi32>
    %c17_i32 = arith.constant 17 : i32
    %5 = vector.broadcast %c17_i32 : i32 to vector<1x24xi32>
    %6 = arith.cmpi slt, %4, %5 : vector<1x24xi32>
    %7 = tpu.iota {dimensions = array<i32: 0>} : vector<24x1xi32>
    %c17_i32_2 = arith.constant 17 : i32
    %8 = vector.broadcast %c17_i32_2 : i32 to vector<24x1xi32>
    %9 = arith.cmpi slt, %7, %8 : vector<24x1xi32>
    %c0_3 = arith.constant 0 : index
    %c0_4 = arith.constant 0 : index
    %c0_5 = arith.constant 0 : index
    %10 = vector.load %arg5[%c0_3, %c0_4, %c0_5] : memref<1x1x128xf32, #tpu.memory_space<vmem>>, vector<1x1x128xf32>
    %11 = vector.shape_cast %10 : vector<1x1x128xf32> to vector<1x128xf32>
    %c0_6 = arith.constant 0 : index
    %c0_7 = arith.constant 0 : index
    %c0_8 = arith.constant 0 : index
    %12 = vector.load %arg6[%c0_6, %c0_7, %c0_8] : memref<1x1x128xf32, #tpu.memory_space<vmem>>, vector<1x1x128xf32>
    %13 = vector.shape_cast %12 : vector<1x1x128xf32> to vector<1x128xf32>
    %cst = arith.constant dense<0.000000e+00> : vector<24xf32>
    %14 = vector.multi_reduction <add>, %3, %cst [1] : vector<24x128xf32> to vector<24xf32>
    %15 = vector.shape_cast %14 : vector<24xf32> to vector<24x1xf32>
    %cst_9 = arith.constant 1.562500e-02 : f32
    %16 = vector.broadcast %cst_9 : f32 to vector<24x1xf32>
    %17 = arith.mulf %15, %16 : vector<24x1xf32>
    %18 = arith.mulf %3, %3 : vector<24x128xf32>
    %cst_10 = arith.constant dense<0.000000e+00> : vector<24xf32>
    %19 = vector.multi_reduction <add>, %18, %cst_10 [1] : vector<24x128xf32> to vector<24xf32>
    %20 = vector.shape_cast %19 : vector<24xf32> to vector<24x1xf32>
    %cst_11 = arith.constant 1.562500e-02 : f32
    %21 = vector.broadcast %cst_11 : f32 to vector<24x1xf32>
    %22 = arith.mulf %20, %21 : vector<24x1xf32>
    %23 = arith.mulf %17, %17 : vector<24x1xf32>
    %24 = arith.subf %22, %23 : vector<24x1xf32>
    %25 = vector.broadcast %17 : vector<24x1xf32> to vector<24x128xf32>
    %26 = arith.subf %3, %25 : vector<24x128xf32>
    %cst_12 = arith.constant 9.99999997E-7 : f32
    %27 = vector.broadcast %cst_12 : f32 to vector<24x1xf32>
    %28 = arith.addf %24, %27 : vector<24x1xf32>
    %29 = math.rsqrt %28 : vector<24x1xf32>
    %30 = vector.broadcast %29 : vector<24x1xf32> to vector<24x128xf32>
    %31 = arith.mulf %26, %30 : vector<24x128xf32>
    %32 = vector.broadcast %11 : vector<1x128xf32> to vector<24x128xf32>
    %33 = arith.mulf %31, %32 : vector<24x128xf32>
    %34 = vector.broadcast %13 : vector<1x128xf32> to vector<24x128xf32>
    %35 = arith.addf %33, %34 : vector<24x128xf32>
    %c0_13 = arith.constant 0 : index
    %c0_14 = arith.constant 0 : index
    %c0_15 = arith.constant 0 : index
    %36 = vector.load %arg7[%c0_13, %c0_14, %c0_15] : memref<1x128x1536xbf16, #tpu.memory_space<vmem>>, vector<1x128x1536xbf16>
    %37 = vector.shape_cast %36 : vector<1x128x1536xbf16> to vector<128x1536xbf16>
    %38 = arith.truncf %35 : vector<24x128xf32> to vector<24x128xbf16>
    %cst_16 = arith.constant dense<0.000000e+00> : vector<24x1536xf32>
    %39 = tpu.matmul %38, %37, %cst_16 {dimension_numbers = #tpu.dot_dimension_numbers<[1], [0], [0], [1], [0, 0, 1, 1], [], []>} : vector<24x128xbf16>, vector<128x1536xbf16>, vector<24x1536xf32> -> vector<24x1536xf32>
    %c0_17 = arith.constant 0 : index
    %c0_18 = arith.constant 0 : index
    %c0_19 = arith.constant 0 : index
    %40 = vector.load %arg8[%c0_17, %c0_18, %c0_19] : memref<1x1x1536xf32, #tpu.memory_space<vmem>>, vector<1x1x1536xf32>
    %41 = vector.shape_cast %40 : vector<1x1x1536xf32> to vector<1x1536xf32>
    %42 = vector.broadcast %41 : vector<1x1536xf32> to vector<24x1536xf32>
    %43 = arith.addf %39, %42 : vector<24x1536xf32>
    %44 = vector.extract_strided_slice %43 {offsets = [0, 0], sizes = [24, 128], strides = [1, 1]} : vector<24x1536xf32> to vector<24x128xf32>
    %45 = arith.truncf %44 : vector<24x128xf32> to vector<24x128xbf16>
    %46 = vector.extract_strided_slice %43 {offsets = [0, 512], sizes = [24, 128], strides = [1, 1]} : vector<24x1536xf32> to vector<24x128xf32>
    %47 = arith.truncf %46 : vector<24x128xf32> to vector<24x128xbf16>
    %48 = vector.extract_strided_slice %43 {offsets = [0, 1024], sizes = [24, 128], strides = [1, 1]} : vector<24x1536xf32> to vector<24x128xf32>
    %49 = arith.truncf %48 : vector<24x128xf32> to vector<24x128xbf16>
    %cst_20 = arith.constant dense<0.000000e+00> : vector<24x24xf32>
    %50 = tpu.matmul %45, %47, %cst_20 {dimension_numbers = #tpu.dot_dimension_numbers<[1], [1], [0], [0], [0, 0, 1, 0], [], []>} : vector<24x128xbf16>, vector<24x128xbf16>, vector<24x24xf32> -> vector<24x24xf32>
    %cst_21 = arith.constant -1.000000e+30 : f32
    %51 = vector.shape_cast %6 : vector<1x24xi1> to vector<1x24xi1>
    %52 = vector.broadcast %51 : vector<1x24xi1> to vector<24x24xi1>
    %53 = vector.broadcast %cst_21 : f32 to vector<24x24xf32>
    %54 = arith.select %52, %50, %53 : vector<24x24xi1>, vector<24x24xf32>
    %cst_22 = arith.constant dense<0xFF800000> : vector<24xf32>
    %55 = vector.multi_reduction <maximumf>, %54, %cst_22 [1] : vector<24x24xf32> to vector<24xf32>
    %56 = vector.shape_cast %55 : vector<24xf32> to vector<24x1xf32>
    %57 = vector.broadcast %56 : vector<24x1xf32> to vector<24x24xf32>
    %58 = arith.subf %54, %57 : vector<24x24xf32>
    %59 = math.exp %58 : vector<24x24xf32>
    %cst_23 = arith.constant dense<0.000000e+00> : vector<24xf32>
    %60 = vector.multi_reduction <add>, %59, %cst_23 [1] : vector<24x24xf32> to vector<24xf32>
    %61 = vector.shape_cast %60 : vector<24xf32> to vector<24x1xf32>
    %62 = tpu.reciprocal %61 {approx = true} : vector<24x1xf32> -> vector<24x1xf32>
    %63 = vector.broadcast %62 : vector<24x1xf32> to vector<24x24xf32>
    %64 = arith.mulf %59, %63 : vector<24x24xf32>
    %65 = arith.truncf %64 : vector<24x24xf32> to vector<24x24xbf16>
    %cst_24 = arith.constant dense<0.000000e+00> : vector<24x128xf32>
    %66 = tpu.matmul %65, %49, %cst_24 {dimension_numbers = #tpu.dot_dimension_numbers<[1], [0], [0], [1], [0, 0, 1, 1], [], []>} : vector<24x24xbf16>, vector<24x128xbf16>, vector<24x128xf32> -> vector<24x128xf32>
    %67 = vector.extract_strided_slice %43 {offsets = [0, 128], sizes = [24, 128], strides = [1, 1]} : vector<24x1536xf32> to vector<24x128xf32>
    %68 = arith.truncf %67 : vector<24x128xf32> to vector<24x128xbf16>
    %69 = vector.extract_strided_slice %43 {offsets = [0, 640], sizes = [24, 128], strides = [1, 1]} : vector<24x1536xf32> to vector<24x128xf32>
    %70 = arith.truncf %69 : vector<24x128xf32> to vector<24x128xbf16>
    %71 = vector.extract_strided_slice %43 {offsets = [0, 1152], sizes = [24, 128], strides = [1, 1]} : vector<24x1536xf32> to vector<24x128xf32>
    %72 = arith.truncf %71 : vector<24x128xf32> to vector<24x128xbf16>
    %cst_25 = arith.constant dense<0.000000e+00> : vector<24x24xf32>
    %73 = tpu.matmul %68, %70, %cst_25 {dimension_numbers = #tpu.dot_dimension_numbers<[1], [1], [0], [0], [0, 0, 1, 0], [], []>} : vector<24x128xbf16>, vector<24x128xbf16>, vector<24x24xf32> -> vector<24x24xf32>
    %cst_26 = arith.constant -1.000000e+30 : f32
    %74 = vector.shape_cast %6 : vector<1x24xi1> to vector<1x24xi1>
    %75 = vector.broadcast %74 : vector<1x24xi1> to vector<24x24xi1>
    %76 = vector.broadcast %cst_26 : f32 to vector<24x24xf32>
    %77 = arith.select %75, %73, %76 : vector<24x24xi1>, vector<24x24xf32>
    %cst_27 = arith.constant dense<0xFF800000> : vector<24xf32>
    %78 = vector.multi_reduction <maximumf>, %77, %cst_27 [1] : vector<24x24xf32> to vector<24xf32>
    %79 = vector.shape_cast %78 : vector<24xf32> to vector<24x1xf32>
    %80 = vector.broadcast %79 : vector<24x1xf32> to vector<24x24xf32>
    %81 = arith.subf %77, %80 : vector<24x24xf32>
    %82 = math.exp %81 : vector<24x24xf32>
    %cst_28 = arith.constant dense<0.000000e+00> : vector<24xf32>
    %83 = vector.multi_reduction <add>, %82, %cst_28 [1] : vector<24x24xf32> to vector<24xf32>
    %84 = vector.shape_cast %83 : vector<24xf32> to vector<24x1xf32>
    %85 = tpu.reciprocal %84 {approx = true} : vector<24x1xf32> -> vector<24x1xf32>
    %86 = vector.broadcast %85 : vector<24x1xf32> to vector<24x24xf32>
    %87 = arith.mulf %82, %86 : vector<24x24xf32>
    %88 = arith.truncf %87 : vector<24x24xf32> to vector<24x24xbf16>
    %cst_29 = arith.constant dense<0.000000e+00> : vector<24x128xf32>
    %89 = tpu.matmul %88, %72, %cst_29 {dimension_numbers = #tpu.dot_dimension_numbers<[1], [0], [0], [1], [0, 0, 1, 1], [], []>} : vector<24x24xbf16>, vector<24x128xbf16>, vector<24x128xf32> -> vector<24x128xf32>
    %90 = vector.extract_strided_slice %43 {offsets = [0, 256], sizes = [24, 128], strides = [1, 1]} : vector<24x1536xf32> to vector<24x128xf32>
    %91 = arith.truncf %90 : vector<24x128xf32> to vector<24x128xbf16>
    %92 = vector.extract_strided_slice %43 {offsets = [0, 768], sizes = [24, 128], strides = [1, 1]} : vector<24x1536xf32> to vector<24x128xf32>
    %93 = arith.truncf %92 : vector<24x128xf32> to vector<24x128xbf16>
    %94 = vector.extract_strided_slice %43 {offsets = [0, 1280], sizes = [24, 128], strides = [1, 1]} : vector<24x1536xf32> to vector<24x128xf32>
    %95 = arith.truncf %94 : vector<24x128xf32> to vector<24x128xbf16>
    %cst_30 = arith.constant dense<0.000000e+00> : vector<24x24xf32>
    %96 = tpu.matmul %91, %93, %cst_30 {dimension_numbers = #tpu.dot_dimension_numbers<[1], [1], [0], [0], [0, 0, 1, 0], [], []>} : vector<24x128xbf16>, vector<24x128xbf16>, vector<24x24xf32> -> vector<24x24xf32>
    %cst_31 = arith.constant -1.000000e+30 : f32
    %97 = vector.shape_cast %6 : vector<1x24xi1> to vector<1x24xi1>
    %98 = vector.broadcast %97 : vector<1x24xi1> to vector<24x24xi1>
    %99 = vector.broadcast %cst_31 : f32 to vector<24x24xf32>
    %100 = arith.select %98, %96, %99 : vector<24x24xi1>, vector<24x24xf32>
    %cst_32 = arith.constant dense<0xFF800000> : vector<24xf32>
    %101 = vector.multi_reduction <maximumf>, %100, %cst_32 [1] : vector<24x24xf32> to vector<24xf32>
    %102 = vector.shape_cast %101 : vector<24xf32> to vector<24x1xf32>
    %103 = vector.broadcast %102 : vector<24x1xf32> to vector<24x24xf32>
    %104 = arith.subf %100, %103 : vector<24x24xf32>
    %105 = math.exp %104 : vector<24x24xf32>
    %cst_33 = arith.constant dense<0.000000e+00> : vector<24xf32>
    %106 = vector.multi_reduction <add>, %105, %cst_33 [1] : vector<24x24xf32> to vector<24xf32>
    %107 = vector.shape_cast %106 : vector<24xf32> to vector<24x1xf32>
    %108 = tpu.reciprocal %107 {approx = true} : vector<24x1xf32> -> vector<24x1xf32>
    %109 = vector.broadcast %108 : vector<24x1xf32> to vector<24x24xf32>
    %110 = arith.mulf %105, %109 : vector<24x24xf32>
    %111 = arith.truncf %110 : vector<24x24xf32> to vector<24x24xbf16>
    %cst_34 = arith.constant dense<0.000000e+00> : vector<24x128xf32>
    %112 = tpu.matmul %111, %95, %cst_34 {dimension_numbers = #tpu.dot_dimension_numbers<[1], [0], [0], [1], [0, 0, 1, 1], [], []>} : vector<24x24xbf16>, vector<24x128xbf16>, vector<24x128xf32> -> vector<24x128xf32>
    %113 = vector.extract_strided_slice %43 {offsets = [0, 384], sizes = [24, 128], strides = [1, 1]} : vector<24x1536xf32> to vector<24x128xf32>
    %114 = arith.truncf %113 : vector<24x128xf32> to vector<24x128xbf16>
    %115 = vector.extract_strided_slice %43 {offsets = [0, 896], sizes = [24, 128], strides = [1, 1]} : vector<24x1536xf32> to vector<24x128xf32>
    %116 = arith.truncf %115 : vector<24x128xf32> to vector<24x128xbf16>
    %117 = vector.extract_strided_slice %43 {offsets = [0, 1408], sizes = [24, 128], strides = [1, 1]} : vector<24x1536xf32> to vector<24x128xf32>
    %118 = arith.truncf %117 : vector<24x128xf32> to vector<24x128xbf16>
    %cst_35 = arith.constant dense<0.000000e+00> : vector<24x24xf32>
    %119 = tpu.matmul %114, %116, %cst_35 {dimension_numbers = #tpu.dot_dimension_numbers<[1], [1], [0], [0], [0, 0, 1, 0], [], []>} : vector<24x128xbf16>, vector<24x128xbf16>, vector<24x24xf32> -> vector<24x24xf32>
    %cst_36 = arith.constant -1.000000e+30 : f32
    %120 = vector.shape_cast %6 : vector<1x24xi1> to vector<1x24xi1>
    %121 = vector.broadcast %120 : vector<1x24xi1> to vector<24x24xi1>
    %122 = vector.broadcast %cst_36 : f32 to vector<24x24xf32>
    %123 = arith.select %121, %119, %122 : vector<24x24xi1>, vector<24x24xf32>
    %cst_37 = arith.constant dense<0xFF800000> : vector<24xf32>
    %124 = vector.multi_reduction <maximumf>, %123, %cst_37 [1] : vector<24x24xf32> to vector<24xf32>
    %125 = vector.shape_cast %124 : vector<24xf32> to vector<24x1xf32>
    %126 = vector.broadcast %125 : vector<24x1xf32> to vector<24x24xf32>
    %127 = arith.subf %123, %126 : vector<24x24xf32>
    %128 = math.exp %127 : vector<24x24xf32>
    %cst_38 = arith.constant dense<0.000000e+00> : vector<24xf32>
    %129 = vector.multi_reduction <add>, %128, %cst_38 [1] : vector<24x24xf32> to vector<24xf32>
    %130 = vector.shape_cast %129 : vector<24xf32> to vector<24x1xf32>
    %131 = tpu.reciprocal %130 {approx = true} : vector<24x1xf32> -> vector<24x1xf32>
    %132 = vector.broadcast %131 : vector<24x1xf32> to vector<24x24xf32>
    %133 = arith.mulf %128, %132 : vector<24x24xf32>
    %134 = arith.truncf %133 : vector<24x24xf32> to vector<24x24xbf16>
    %cst_39 = arith.constant dense<0.000000e+00> : vector<24x128xf32>
    %135 = tpu.matmul %134, %118, %cst_39 {dimension_numbers = #tpu.dot_dimension_numbers<[1], [0], [0], [1], [0, 0, 1, 1], [], []>} : vector<24x24xbf16>, vector<24x128xbf16>, vector<24x128xf32> -> vector<24x128xf32>
    %136 = tpu.concatenate %66, %89, %112, %135 in 1 : vector<24x128xf32>, vector<24x128xf32>, vector<24x128xf32>, vector<24x128xf32> -> vector<24x512xf32>
    %c0_40 = arith.constant 0 : index
    %c0_41 = arith.constant 0 : index
    %c0_42 = arith.constant 0 : index
    %137 = vector.load %arg9[%c0_40, %c0_41, %c0_42] : memref<1x512x128xbf16, #tpu.memory_space<vmem>>, vector<1x512x128xbf16>
    %138 = vector.shape_cast %137 : vector<1x512x128xbf16> to vector<512x128xbf16>
    %139 = arith.truncf %136 : vector<24x512xf32> to vector<24x512xbf16>
    %cst_43 = arith.constant dense<0.000000e+00> : vector<24x128xf32>
    %140 = tpu.matmul %139, %138, %cst_43 {dimension_numbers = #tpu.dot_dimension_numbers<[1], [0], [0], [1], [0, 0, 1, 1], [], []>} : vector<24x512xbf16>, vector<512x128xbf16>, vector<24x128xf32> -> vector<24x128xf32>
    %141 = arith.addf %3, %140 : vector<24x128xf32>
    %c0_44 = arith.constant 0 : index
    %c0_45 = arith.constant 0 : index
    %c0_46 = arith.constant 0 : index
    %142 = vector.load %arg10[%c0_44, %c0_45, %c0_46] : memref<1x1x128xf32, #tpu.memory_space<vmem>>, vector<1x1x128xf32>
    %143 = vector.shape_cast %142 : vector<1x1x128xf32> to vector<1x128xf32>
    %144 = vector.broadcast %143 : vector<1x128xf32> to vector<24x128xf32>
    %145 = arith.addf %141, %144 : vector<24x128xf32>
    %c0_47 = arith.constant 0 : index
    %c0_48 = arith.constant 0 : index
    %c0_49 = arith.constant 0 : index
    %146 = vector.load %arg11[%c0_47, %c0_48, %c0_49] : memref<1x1x128xf32, #tpu.memory_space<vmem>>, vector<1x1x128xf32>
    %147 = vector.shape_cast %146 : vector<1x1x128xf32> to vector<1x128xf32>
    %c0_50 = arith.constant 0 : index
    %c0_51 = arith.constant 0 : index
    %c0_52 = arith.constant 0 : index
    %148 = vector.load %arg12[%c0_50, %c0_51, %c0_52] : memref<1x1x128xf32, #tpu.memory_space<vmem>>, vector<1x1x128xf32>
    %149 = vector.shape_cast %148 : vector<1x1x128xf32> to vector<1x128xf32>
    %cst_53 = arith.constant dense<0.000000e+00> : vector<24xf32>
    %150 = vector.multi_reduction <add>, %145, %cst_53 [1] : vector<24x128xf32> to vector<24xf32>
    %151 = vector.shape_cast %150 : vector<24xf32> to vector<24x1xf32>
    %cst_54 = arith.constant 1.562500e-02 : f32
    %152 = vector.broadcast %cst_54 : f32 to vector<24x1xf32>
    %153 = arith.mulf %151, %152 : vector<24x1xf32>
    %154 = arith.mulf %145, %145 : vector<24x128xf32>
    %cst_55 = arith.constant dense<0.000000e+00> : vector<24xf32>
    %155 = vector.multi_reduction <add>, %154, %cst_55 [1] : vector<24x128xf32> to vector<24xf32>
    %156 = vector.shape_cast %155 : vector<24xf32> to vector<24x1xf32>
    %cst_56 = arith.constant 1.562500e-02 : f32
    %157 = vector.broadcast %cst_56 : f32 to vector<24x1xf32>
    %158 = arith.mulf %156, %157 : vector<24x1xf32>
    %159 = arith.mulf %153, %153 : vector<24x1xf32>
    %160 = arith.subf %158, %159 : vector<24x1xf32>
    %161 = vector.broadcast %153 : vector<24x1xf32> to vector<24x128xf32>
    %162 = arith.subf %145, %161 : vector<24x128xf32>
    %cst_57 = arith.constant 9.99999997E-7 : f32
    %163 = vector.broadcast %cst_57 : f32 to vector<24x1xf32>
    %164 = arith.addf %160, %163 : vector<24x1xf32>
    %165 = math.rsqrt %164 : vector<24x1xf32>
    %166 = vector.broadcast %165 : vector<24x1xf32> to vector<24x128xf32>
    %167 = arith.mulf %162, %166 : vector<24x128xf32>
    %168 = vector.broadcast %147 : vector<1x128xf32> to vector<24x128xf32>
    %169 = arith.mulf %167, %168 : vector<24x128xf32>
    %170 = vector.broadcast %149 : vector<1x128xf32> to vector<24x128xf32>
    %171 = arith.addf %169, %170 : vector<24x128xf32>
    %c0_58 = arith.constant 0 : index
    %c0_59 = arith.constant 0 : index
    %c0_60 = arith.constant 0 : index
    %172 = vector.load %arg13[%c0_58, %c0_59, %c0_60] : memref<1x128x256xbf16, #tpu.memory_space<vmem>>, vector<1x128x256xbf16>
    %173 = vector.shape_cast %172 : vector<1x128x256xbf16> to vector<128x256xbf16>
    %174 = arith.truncf %171 : vector<24x128xf32> to vector<24x128xbf16>
    %cst_61 = arith.constant dense<0.000000e+00> : vector<24x256xf32>
    %175 = tpu.matmul %174, %173, %cst_61 {dimension_numbers = #tpu.dot_dimension_numbers<[1], [0], [0], [1], [0, 0, 1, 1], [], []>} : vector<24x128xbf16>, vector<128x256xbf16>, vector<24x256xf32> -> vector<24x256xf32>
    %c0_62 = arith.constant 0 : index
    %c0_63 = arith.constant 0 : index
    %c0_64 = arith.constant 0 : index
    %176 = vector.load %arg14[%c0_62, %c0_63, %c0_64] : memref<1x1x256xf32, #tpu.memory_space<vmem>>, vector<1x1x256xf32>
    %177 = vector.shape_cast %176 : vector<1x1x256xf32> to vector<1x256xf32>
    %178 = vector.broadcast %177 : vector<1x256xf32> to vector<24x256xf32>
    %179 = arith.addf %175, %178 : vector<24x256xf32>
    %cst_65 = arith.constant 5.000000e-01 : f32
    %180 = vector.broadcast %cst_65 : f32 to vector<24x256xf32>
    %181 = arith.mulf %180, %179 : vector<24x256xf32>
    %cst_66 = arith.constant 0.707106769 : f32
    %182 = vector.broadcast %cst_66 : f32 to vector<24x256xf32>
    %183 = arith.mulf %179, %182 : vector<24x256xf32>
    %184 = math.absf %183 : vector<24x256xf32>
    %cst_67 = arith.constant 0.327591091 : f32
    %185 = vector.broadcast %cst_67 : f32 to vector<24x256xf32>
    %186 = arith.mulf %185, %184 : vector<24x256xf32>
    %cst_68 = arith.constant 1.000000e+00 : f32
    %187 = vector.broadcast %cst_68 : f32 to vector<24x256xf32>
    %188 = arith.addf %187, %186 : vector<24x256xf32>
    %cst_69 = arith.constant 1.000000e+00 : f32
    %189 = vector.broadcast %cst_69 : f32 to vector<24x256xf32>
    %190 = arith.divf %189, %188 : vector<24x256xf32>
    %cst_70 = arith.constant 1.06140542 : f32
    %191 = vector.broadcast %cst_70 : f32 to vector<24x256xf32>
    %192 = arith.mulf %190, %191 : vector<24x256xf32>
    %cst_71 = arith.constant -1.45315206 : f32
    %193 = vector.broadcast %cst_71 : f32 to vector<24x256xf32>
    %194 = arith.addf %193, %192 : vector<24x256xf32>
    %195 = arith.mulf %190, %194 : vector<24x256xf32>
    %cst_72 = arith.constant 1.42141378 : f32
    %196 = vector.broadcast %cst_72 : f32 to vector<24x256xf32>
    %197 = arith.addf %196, %195 : vector<24x256xf32>
    %198 = arith.mulf %190, %197 : vector<24x256xf32>
    %cst_73 = arith.constant -0.284496725 : f32
    %199 = vector.broadcast %cst_73 : f32 to vector<24x256xf32>
    %200 = arith.addf %199, %198 : vector<24x256xf32>
    %201 = arith.mulf %190, %200 : vector<24x256xf32>
    %cst_74 = arith.constant 0.254829586 : f32
    %202 = vector.broadcast %cst_74 : f32 to vector<24x256xf32>
    %203 = arith.addf %202, %201 : vector<24x256xf32>
    %204 = arith.mulf %190, %203 : vector<24x256xf32>
    %cst_75 = arith.constant 0.000000e+00 : f32
    %205 = vector.broadcast %cst_75 : f32 to vector<24x256xf32>
    %206 = arith.subf %205, %184 : vector<24x256xf32>
    %207 = arith.mulf %206, %184 : vector<24x256xf32>
    %208 = math.exp %207 : vector<24x256xf32>
    %209 = arith.mulf %204, %208 : vector<24x256xf32>
    %cst_76 = arith.constant 1.000000e+00 : f32
    %210 = vector.broadcast %cst_76 : f32 to vector<24x256xf32>
    %211 = arith.subf %210, %209 : vector<24x256xf32>
    %cst_77 = arith.constant 0.000000e+00 : f32
    %212 = vector.broadcast %cst_77 : f32 to vector<24x256xf32>
    %213 = arith.cmpf oge, %183, %212 : vector<24x256xf32>
    %cst_78 = arith.constant 0.000000e+00 : f32
    %214 = vector.broadcast %cst_78 : f32 to vector<24x256xf32>
    %215 = arith.subf %214, %211 : vector<24x256xf32>
    %216 = arith.select %213, %211, %215 : vector<24x256xi1>, vector<24x256xf32>
    %cst_79 = arith.constant 1.000000e+00 : f32
    %217 = vector.broadcast %cst_79 : f32 to vector<24x256xf32>
    %218 = arith.addf %217, %216 : vector<24x256xf32>
    %219 = arith.mulf %181, %218 : vector<24x256xf32>
    %c0_80 = arith.constant 0 : index
    %c0_81 = arith.constant 0 : index
    %c0_82 = arith.constant 0 : index
    %220 = vector.load %arg15[%c0_80, %c0_81, %c0_82] : memref<1x256x128xbf16, #tpu.memory_space<vmem>>, vector<1x256x128xbf16>
    %221 = vector.shape_cast %220 : vector<1x256x128xbf16> to vector<256x128xbf16>
    %222 = arith.truncf %219 : vector<24x256xf32> to vector<24x256xbf16>
    %cst_83 = arith.constant dense<0.000000e+00> : vector<24x128xf32>
    %223 = tpu.matmul %222, %221, %cst_83 {dimension_numbers = #tpu.dot_dimension_numbers<[1], [0], [0], [1], [0, 0, 1, 1], [], []>} : vector<24x256xbf16>, vector<256x128xbf16>, vector<24x128xf32> -> vector<24x128xf32>
    %224 = arith.addf %145, %223 : vector<24x128xf32>
    %c0_84 = arith.constant 0 : index
    %c0_85 = arith.constant 0 : index
    %c0_86 = arith.constant 0 : index
    %225 = vector.load %arg16[%c0_84, %c0_85, %c0_86] : memref<1x1x128xf32, #tpu.memory_space<vmem>>, vector<1x1x128xf32>
    %226 = vector.shape_cast %225 : vector<1x1x128xf32> to vector<1x128xf32>
    %227 = vector.broadcast %226 : vector<1x128xf32> to vector<24x128xf32>
    %228 = arith.addf %224, %227 : vector<24x128xf32>
    %cst_87 = arith.constant 0.000000e+00 : f32
    %229 = vector.shape_cast %9 : vector<24x1xi1> to vector<24x1xi1>
    %230 = vector.broadcast %229 : vector<24x1xi1> to vector<24x128xi1>
    %231 = vector.broadcast %cst_87 : f32 to vector<24x128xf32>
    %232 = arith.select %230, %228, %231 : vector<24x128xi1>, vector<24x128xf32>
    %c0_88 = arith.constant 0 : index
    %c0_89 = arith.constant 0 : index
    %233 = vector.load %arg28[%c0_88, %c0_89] : memref<24x128xf32, #tpu.memory_space<vmem>>, vector<24x128xf32>
    tpu.vector_store %arg28[%c0_88, %c0_89], %232 {strides = array<i32>} : memref<24x128xf32, #tpu.memory_space<vmem>>, vector<24x128xf32>,
    %c1_i32 = arith.constant 1 : i32
    %234 = arith.cmpi eq, %arg1, %c1_i32 : i32
    %235 = arith.extui %234 : i1 to i32
    %c0_i32_90 = arith.constant 0 : i32
    %236 = arith.cmpi ne, %235, %c0_i32_90 : i32
    scf.if %236 {
      %237 = vector.extract_strided_slice %232 {offsets = [0, 0], sizes = [1, 128], strides = [1, 1]} : vector<24x128xf32> to vector<1x128xf32>
      %c0_91 = arith.constant 0 : index
      %c0_92 = arith.constant 0 : index
      %238 = vector.load %arg17[%c0_91, %c0_92] : memref<1x128xf32, #tpu.memory_space<vmem>>, vector<1x128xf32>
      %c0_93 = arith.constant 0 : index
      %c0_94 = arith.constant 0 : index
      %239 = vector.load %arg18[%c0_93, %c0_94] : memref<1x128xf32, #tpu.memory_space<vmem>>, vector<1x128xf32>
      %cst_95 = arith.constant dense<0.000000e+00> : vector<1xf32>
      %240 = vector.multi_reduction <add>, %237, %cst_95 [1] : vector<1x128xf32> to vector<1xf32>
      %241 = vector.shape_cast %240 : vector<1xf32> to vector<1x1xf32>
      %cst_96 = arith.constant 1.562500e-02 : f32
      %242 = vector.broadcast %cst_96 : f32 to vector<1x1xf32>
      %243 = arith.mulf %241, %242 : vector<1x1xf32>
      %244 = arith.mulf %237, %237 : vector<1x128xf32>
      %cst_97 = arith.constant dense<0.000000e+00> : vector<1xf32>
      %245 = vector.multi_reduction <add>, %244, %cst_97 [1] : vector<1x128xf32> to vector<1xf32>
      %246 = vector.shape_cast %245 : vector<1xf32> to vector<1x1xf32>
      %cst_98 = arith.constant 1.562500e-02 : f32
      %247 = vector.broadcast %cst_98 : f32 to vector<1x1xf32>
      %248 = arith.mulf %246, %247 : vector<1x1xf32>
      %249 = arith.mulf %243, %243 : vector<1x1xf32>
      %250 = arith.subf %248, %249 : vector<1x1xf32>
      %251 = vector.broadcast %243 : vector<1x1xf32> to vector<1x128xf32>
      %252 = arith.subf %237, %251 : vector<1x128xf32>
      %cst_99 = arith.constant 9.99999997E-7 : f32
      %253 = vector.broadcast %cst_99 : f32 to vector<1x1xf32>
      %254 = arith.addf %250, %253 : vector<1x1xf32>
      %255 = math.rsqrt %254 : vector<1x1xf32>
      %256 = vector.broadcast %255 : vector<1x1xf32> to vector<1x128xf32>
      %257 = arith.mulf %252, %256 : vector<1x128xf32>
      %258 = arith.mulf %257, %238 : vector<1x128xf32>
      %259 = arith.addf %258, %239 : vector<1x128xf32>
      %c0_100 = arith.constant 0 : index
      %c0_101 = arith.constant 0 : index
      %260 = vector.load %arg19[%c0_100, %c0_101] : memref<1x128xf32, #tpu.memory_space<vmem>>, vector<1x128xf32>
      %c0_102 = arith.constant 0 : index
      %c0_103 = arith.constant 0 : index
      %261 = vector.load %arg20[%c0_102, %c0_103] : memref<1x128xf32, #tpu.memory_space<vmem>>, vector<1x128xf32>
      %cst_104 = arith.constant dense<0.000000e+00> : vector<1xf32>
      %262 = vector.multi_reduction <add>, %259, %cst_104 [1] : vector<1x128xf32> to vector<1xf32>
      %263 = vector.shape_cast %262 : vector<1xf32> to vector<1x1xf32>
      %cst_105 = arith.constant 1.562500e-02 : f32
      %264 = vector.broadcast %cst_105 : f32 to vector<1x1xf32>
      %265 = arith.mulf %263, %264 : vector<1x1xf32>
      %266 = arith.mulf %259, %259 : vector<1x128xf32>
      %cst_106 = arith.constant dense<0.000000e+00> : vector<1xf32>
      %267 = vector.multi_reduction <add>, %266, %cst_106 [1] : vector<1x128xf32> to vector<1xf32>
      %268 = vector.shape_cast %267 : vector<1xf32> to vector<1x1xf32>
      %cst_107 = arith.constant 1.562500e-02 : f32
      %269 = vector.broadcast %cst_107 : f32 to vector<1x1xf32>
      %270 = arith.mulf %268, %269 : vector<1x1xf32>
      %271 = arith.mulf %265, %265 : vector<1x1xf32>
      %272 = arith.subf %270, %271 : vector<1x1xf32>
      %273 = vector.broadcast %265 : vector<1x1xf32> to vector<1x128xf32>
      %274 = arith.subf %259, %273 : vector<1x128xf32>
      %cst_108 = arith.constant 9.99999974E-6 : f32
      %275 = vector.broadcast %cst_108 : f32 to vector<1x1xf32>
      %276 = arith.addf %272, %275 : vector<1x1xf32>
      %277 = math.rsqrt %276 : vector<1x1xf32>
      %278 = vector.broadcast %277 : vector<1x1xf32> to vector<1x128xf32>
      %279 = arith.mulf %274, %278 : vector<1x128xf32>
      %280 = arith.mulf %279, %260 : vector<1x128xf32>
      %281 = arith.addf %280, %261 : vector<1x128xf32>
      %c0_109 = arith.constant 0 : index
      %c0_110 = arith.constant 0 : index
      %282 = vector.load %arg21[%c0_109, %c0_110] : memref<128x128xbf16, #tpu.memory_space<vmem>>, vector<128x128xbf16>
      %283 = arith.truncf %281 : vector<1x128xf32> to vector<1x128xbf16>
      %cst_111 = arith.constant dense<0.000000e+00> : vector<1x128xf32>
      %284 = tpu.matmul %283, %282, %cst_111 {dimension_numbers = #tpu.dot_dimension_numbers<[1], [0], [0], [1], [0, 0, 1, 1], [], []>} : vector<1x128xbf16>, vector<128x128xbf16>, vector<1x128xf32> -> vector<1x128xf32>
      %c0_112 = arith.constant 0 : index
      %c0_113 = arith.constant 0 : index
      %285 = vector.load %arg22[%c0_112, %c0_113] : memref<1x128xf32, #tpu.memory_space<vmem>>, vector<1x128xf32>
      %286 = arith.addf %284, %285 : vector<1x128xf32>
      %cst_114 = arith.constant 5.000000e-01 : f32
      %287 = vector.broadcast %cst_114 : f32 to vector<1x128xf32>
      %288 = arith.mulf %287, %286 : vector<1x128xf32>
      %cst_115 = arith.constant 0.707106769 : f32
      %289 = vector.broadcast %cst_115 : f32 to vector<1x128xf32>
      %290 = arith.mulf %286, %289 : vector<1x128xf32>
      %291 = math.absf %290 : vector<1x128xf32>
      %cst_116 = arith.constant 0.327591091 : f32
      %292 = vector.broadcast %cst_116 : f32 to vector<1x128xf32>
      %293 = arith.mulf %292, %291 : vector<1x128xf32>
      %cst_117 = arith.constant 1.000000e+00 : f32
      %294 = vector.broadcast %cst_117 : f32 to vector<1x128xf32>
      %295 = arith.addf %294, %293 : vector<1x128xf32>
      %cst_118 = arith.constant 1.000000e+00 : f32
      %296 = vector.broadcast %cst_118 : f32 to vector<1x128xf32>
      %297 = arith.divf %296, %295 : vector<1x128xf32>
      %cst_119 = arith.constant 1.06140542 : f32
      %298 = vector.broadcast %cst_119 : f32 to vector<1x128xf32>
      %299 = arith.mulf %297, %298 : vector<1x128xf32>
      %cst_120 = arith.constant -1.45315206 : f32
      %300 = vector.broadcast %cst_120 : f32 to vector<1x128xf32>
      %301 = arith.addf %300, %299 : vector<1x128xf32>
      %302 = arith.mulf %297, %301 : vector<1x128xf32>
      %cst_121 = arith.constant 1.42141378 : f32
      %303 = vector.broadcast %cst_121 : f32 to vector<1x128xf32>
      %304 = arith.addf %303, %302 : vector<1x128xf32>
      %305 = arith.mulf %297, %304 : vector<1x128xf32>
      %cst_122 = arith.constant -0.284496725 : f32
      %306 = vector.broadcast %cst_122 : f32 to vector<1x128xf32>
      %307 = arith.addf %306, %305 : vector<1x128xf32>
      %308 = arith.mulf %297, %307 : vector<1x128xf32>
      %cst_123 = arith.constant 0.254829586 : f32
      %309 = vector.broadcast %cst_123 : f32 to vector<1x128xf32>
      %310 = arith.addf %309, %308 : vector<1x128xf32>
      %311 = arith.mulf %297, %310 : vector<1x128xf32>
      %cst_124 = arith.constant 0.000000e+00 : f32
      %312 = vector.broadcast %cst_124 : f32 to vector<1x128xf32>
      %313 = arith.subf %312, %291 : vector<1x128xf32>
      %314 = arith.mulf %313, %291 : vector<1x128xf32>
      %315 = math.exp %314 : vector<1x128xf32>
      %316 = arith.mulf %311, %315 : vector<1x128xf32>
      %cst_125 = arith.constant 1.000000e+00 : f32
      %317 = vector.broadcast %cst_125 : f32 to vector<1x128xf32>
      %318 = arith.subf %317, %316 : vector<1x128xf32>
      %cst_126 = arith.constant 0.000000e+00 : f32
      %319 = vector.broadcast %cst_126 : f32 to vector<1x128xf32>
      %320 = arith.cmpf oge, %290, %319 : vector<1x128xf32>
      %cst_127 = arith.constant 0.000000e+00 : f32
      %321 = vector.broadcast %cst_127 : f32 to vector<1x128xf32>
      %322 = arith.subf %321, %318 : vector<1x128xf32>
      %323 = arith.select %320, %318, %322 : vector<1x128xi1>, vector<1x128xf32>
      %cst_128 = arith.constant 1.000000e+00 : f32
      %324 = vector.broadcast %cst_128 : f32 to vector<1x128xf32>
      %325 = arith.addf %324, %323 : vector<1x128xf32>
      %326 = arith.mulf %288, %325 : vector<1x128xf32>
      %c0_129 = arith.constant 0 : index
      %c0_130 = arith.constant 0 : index
      %327 = vector.load %arg23[%c0_129, %c0_130] : memref<128x128xbf16, #tpu.memory_space<vmem>>, vector<128x128xbf16>
      %328 = arith.truncf %326 : vector<1x128xf32> to vector<1x128xbf16>
      %cst_131 = arith.constant dense<0.000000e+00> : vector<1x128xf32>
      %329 = tpu.matmul %328, %327, %cst_131 {dimension_numbers = #tpu.dot_dimension_numbers<[1], [0], [0], [1], [0, 0, 1, 1], [], []>} : vector<1x128xbf16>, vector<128x128xbf16>, vector<1x128xf32> -> vector<1x128xf32>
      %c0_132 = arith.constant 0 : index
      %c0_133 = arith.constant 0 : index
      %330 = vector.load %arg24[%c0_132, %c0_133] : memref<1x128xf32, #tpu.memory_space<vmem>>, vector<1x128xf32>
      %331 = arith.addf %329, %330 : vector<1x128xf32>
      %cst_134 = arith.constant 5.000000e-01 : f32
      %332 = vector.broadcast %cst_134 : f32 to vector<1x128xf32>
      %333 = arith.mulf %332, %331 : vector<1x128xf32>
      %cst_135 = arith.constant 0.707106769 : f32
      %334 = vector.broadcast %cst_135 : f32 to vector<1x128xf32>
      %335 = arith.mulf %331, %334 : vector<1x128xf32>
      %336 = math.absf %335 : vector<1x128xf32>
      %cst_136 = arith.constant 0.327591091 : f32
      %337 = vector.broadcast %cst_136 : f32 to vector<1x128xf32>
      %338 = arith.mulf %337, %336 : vector<1x128xf32>
      %cst_137 = arith.constant 1.000000e+00 : f32
      %339 = vector.broadcast %cst_137 : f32 to vector<1x128xf32>
      %340 = arith.addf %339, %338 : vector<1x128xf32>
      %cst_138 = arith.constant 1.000000e+00 : f32
      %341 = vector.broadcast %cst_138 : f32 to vector<1x128xf32>
      %342 = arith.divf %341, %340 : vector<1x128xf32>
      %cst_139 = arith.constant 1.06140542 : f32
      %343 = vector.broadcast %cst_139 : f32 to vector<1x128xf32>
      %344 = arith.mulf %342, %343 : vector<1x128xf32>
      %cst_140 = arith.constant -1.45315206 : f32
      %345 = vector.broadcast %cst_140 : f32 to vector<1x128xf32>
      %346 = arith.addf %345, %344 : vector<1x128xf32>
      %347 = arith.mulf %342, %346 : vector<1x128xf32>
      %cst_141 = arith.constant 1.42141378 : f32
      %348 = vector.broadcast %cst_141 : f32 to vector<1x128xf32>
      %349 = arith.addf %348, %347 : vector<1x128xf32>
      %350 = arith.mulf %342, %349 : vector<1x128xf32>
      %cst_142 = arith.constant -0.284496725 : f32
      %351 = vector.broadcast %cst_142 : f32 to vector<1x128xf32>
      %352 = arith.addf %351, %350 : vector<1x128xf32>
      %353 = arith.mulf %342, %352 : vector<1x128xf32>
      %cst_143 = arith.constant 0.254829586 : f32
      %354 = vector.broadcast %cst_143 : f32 to vector<1x128xf32>
      %355 = arith.addf %354, %353 : vector<1x128xf32>
      %356 = arith.mulf %342, %355 : vector<1x128xf32>
      %cst_144 = arith.constant 0.000000e+00 : f32
      %357 = vector.broadcast %cst_144 : f32 to vector<1x128xf32>
      %358 = arith.subf %357, %336 : vector<1x128xf32>
      %359 = arith.mulf %358, %336 : vector<1x128xf32>
      %360 = math.exp %359 : vector<1x128xf32>
      %361 = arith.mulf %356, %360 : vector<1x128xf32>
      %cst_145 = arith.constant 1.000000e+00 : f32
      %362 = vector.broadcast %cst_145 : f32 to vector<1x128xf32>
      %363 = arith.subf %362, %361 : vector<1x128xf32>
      %cst_146 = arith.constant 0.000000e+00 : f32
      %364 = vector.broadcast %cst_146 : f32 to vector<1x128xf32>
      %365 = arith.cmpf oge, %335, %364 : vector<1x128xf32>
      %cst_147 = arith.constant 0.000000e+00 : f32
      %366 = vector.broadcast %cst_147 : f32 to vector<1x128xf32>
      %367 = arith.subf %366, %363 : vector<1x128xf32>
      %368 = arith.select %365, %363, %367 : vector<1x128xi1>, vector<1x128xf32>
      %cst_148 = arith.constant 1.000000e+00 : f32
      %369 = vector.broadcast %cst_148 : f32 to vector<1x128xf32>
      %370 = arith.addf %369, %368 : vector<1x128xf32>
      %371 = arith.mulf %333, %370 : vector<1x128xf32>
      %c0_149 = arith.constant 0 : index
      %c0_150 = arith.constant 0 : index
      %372 = vector.load %arg25[%c0_149, %c0_150] : memref<128x128xbf16, #tpu.memory_space<vmem>>, vector<128x128xbf16>
      %373 = arith.truncf %371 : vector<1x128xf32> to vector<1x128xbf16>
      %cst_151 = arith.constant dense<0.000000e+00> : vector<1x128xf32>
      %374 = tpu.matmul %373, %372, %cst_151 {dimension_numbers = #tpu.dot_dimension_numbers<[1], [0], [0], [1], [0, 0, 1, 1], [], []>} : vector<1x128xbf16>, vector<128x128xbf16>, vector<1x128xf32> -> vector<1x128xf32>
      %c0_152 = arith.constant 0 : index
      %c0_153 = arith.constant 0 : index
      %375 = vector.load %arg26[%c0_152, %c0_153] : memref<1x128xf32, #tpu.memory_space<vmem>>, vector<1x128xf32>
      %376 = arith.addf %374, %375 : vector<1x128xf32>
      %c0_154 = arith.constant 0 : index
      %c0_155 = arith.constant 0 : index
      %c0_156 = arith.constant 0 : index
      %377 = vector.load %arg27[%c0_154, %c0_155, %c0_156] : memref<1x1x128xf32, #tpu.memory_space<vmem>>, vector<1x1x128xf32>
      %378 = vector.shape_cast %377 : vector<1x1x128xf32> to vector<1x128xf32>
      %379 = vector.shape_cast %376 : vector<1x128xf32> to vector<1x1x128xf32>
      tpu.vector_store %arg27[%c0_154, %c0_155, %c0_156], %379 {strides = array<i32>} : memref<1x1x128xf32, #tpu.memory_space<vmem>>, vector<1x1x128xf32>,
    } else {
    }
    return
  }
  func.func @transform_0(%arg0: i32, %arg1: i32) -> (i32, i32, i32) {
    %c0_i32 = arith.constant 0 : i32
    %c0_i32_0 = arith.constant 0 : i32
    %c0_i32_1 = arith.constant 0 : i32
    return %arg0, %c0_i32, %c0_i32_0 : i32, i32, i32
  }
  func.func @transform_1(%arg0: i32, %arg1: i32) -> (i32, i32) {
    %c0_i32 = arith.constant 0 : i32
    %c0_i32_0 = arith.constant 0 : i32
    %c0_i32_1 = arith.constant 0 : i32
    return %c0_i32, %c0_i32_0 : i32, i32
  }
  func.func @transform_2(%arg0: i32, %arg1: i32) -> (i32, i32) {
    %c0_i32 = arith.constant 0 : i32
    %c0_i32_0 = arith.constant 0 : i32
    %c0_i32_1 = arith.constant 0 : i32
    return %c0_i32, %c0_i32_0 : i32, i32
  }
  func.func @transform_3(%arg0: i32, %arg1: i32) -> (i32, i32, i32) {
    %c0_i32 = arith.constant 0 : i32
    %c0_i32_0 = arith.constant 0 : i32
    %c0_i32_1 = arith.constant 0 : i32
    return %arg1, %c0_i32, %c0_i32_0 : i32, i32, i32
  }
  func.func @transform_4(%arg0: i32, %arg1: i32) -> (i32, i32, i32) {
    %c0_i32 = arith.constant 0 : i32
    %c0_i32_0 = arith.constant 0 : i32
    %c0_i32_1 = arith.constant 0 : i32
    return %arg1, %c0_i32, %c0_i32_0 : i32, i32, i32
  }
  func.func @transform_5(%arg0: i32, %arg1: i32) -> (i32, i32, i32) {
    %c0_i32 = arith.constant 0 : i32
    %c0_i32_0 = arith.constant 0 : i32
    %c0_i32_1 = arith.constant 0 : i32
    return %arg1, %c0_i32, %c0_i32_0 : i32, i32, i32
  }
  func.func @transform_6(%arg0: i32, %arg1: i32) -> (i32, i32, i32) {
    %c0_i32 = arith.constant 0 : i32
    %c0_i32_0 = arith.constant 0 : i32
    %c0_i32_1 = arith.constant 0 : i32
    return %arg1, %c0_i32, %c0_i32_0 : i32, i32, i32
  }
  func.func @transform_7(%arg0: i32, %arg1: i32) -> (i32, i32, i32) {
    %c0_i32 = arith.constant 0 : i32
    %c0_i32_0 = arith.constant 0 : i32
    %c0_i32_1 = arith.constant 0 : i32
    return %arg1, %c0_i32, %c0_i32_0 : i32, i32, i32
  }
  func.func @transform_8(%arg0: i32, %arg1: i32) -> (i32, i32, i32) {
    %c0_i32 = arith.constant 0 : i32
    %c0_i32_0 = arith.constant 0 : i32
    %c0_i32_1 = arith.constant 0 : i32
    return %arg1, %c0_i32, %c0_i32_0 : i32, i32, i32
  }
  func.func @transform_9(%arg0: i32, %arg1: i32) -> (i32, i32, i32) {
    %c0_i32 = arith.constant 0 : i32
    %c0_i32_0 = arith.constant 0 : i32
    %c0_i32_1 = arith.constant 0 : i32
    return %arg1, %c0_i32, %c0_i32_0 : i32, i32, i32
  }
  func.func @transform_10(%arg0: i32, %arg1: i32) -> (i32, i32, i32) {
    %c0_i32 = arith.constant 0 : i32
    %c0_i32_0 = arith.constant 0 : i32
    %c0_i32_1 = arith.constant 0 : i32
    return %arg1, %c0_i32, %c0_i32_0 : i32, i32, i32
  }
  func.func @transform_11(%arg0: i32, %arg1: i32) -> (i32, i32, i32) {
    %c0_i32 = arith.constant 0 : i32
    %c0_i32_0 = arith.constant 0 : i32
    %c0_i32_1 = arith.constant 0 : i32
    return %arg1, %c0_i32, %c0_i32_0 : i32, i32, i32
  }
  func.func @transform_12(%arg0: i32, %arg1: i32) -> (i32, i32, i32) {
    %c0_i32 = arith.constant 0 : i32
    %c0_i32_0 = arith.constant 0 : i32
    %c0_i32_1 = arith.constant 0 : i32
    return %arg1, %c0_i32, %c0_i32_0 : i32, i32, i32
  }
  func.func @transform_13(%arg0: i32, %arg1: i32) -> (i32, i32, i32) {
    %c0_i32 = arith.constant 0 : i32
    %c0_i32_0 = arith.constant 0 : i32
    %c0_i32_1 = arith.constant 0 : i32
    return %arg1, %c0_i32, %c0_i32_0 : i32, i32, i32
  }
  func.func @transform_14(%arg0: i32, %arg1: i32) -> (i32, i32, i32) {
    %c0_i32 = arith.constant 0 : i32
    %c0_i32_0 = arith.constant 0 : i32
    %c0_i32_1 = arith.constant 0 : i32
    return %arg1, %c0_i32, %c0_i32_0 : i32, i32, i32
  }
  func.func @transform_15(%arg0: i32, %arg1: i32) -> (i32, i32) {
    %c0_i32 = arith.constant 0 : i32
    %c0_i32_0 = arith.constant 0 : i32
    %c0_i32_1 = arith.constant 0 : i32
    return %c0_i32, %c0_i32_0 : i32, i32
  }
  func.func @transform_16(%arg0: i32, %arg1: i32) -> (i32, i32) {
    %c0_i32 = arith.constant 0 : i32
    %c0_i32_0 = arith.constant 0 : i32
    %c0_i32_1 = arith.constant 0 : i32
    return %c0_i32, %c0_i32_0 : i32, i32
  }
  func.func @transform_17(%arg0: i32, %arg1: i32) -> (i32, i32) {
    %c0_i32 = arith.constant 0 : i32
    %c0_i32_0 = arith.constant 0 : i32
    %c0_i32_1 = arith.constant 0 : i32
    return %c0_i32, %c0_i32_0 : i32, i32
  }
  func.func @transform_18(%arg0: i32, %arg1: i32) -> (i32, i32) {
    %c0_i32 = arith.constant 0 : i32
    %c0_i32_0 = arith.constant 0 : i32
    %c0_i32_1 = arith.constant 0 : i32
    return %c0_i32, %c0_i32_0 : i32, i32
  }
  func.func @transform_19(%arg0: i32, %arg1: i32) -> (i32, i32) {
    %c0_i32 = arith.constant 0 : i32
    %c0_i32_0 = arith.constant 0 : i32
    %c0_i32_1 = arith.constant 0 : i32
    return %c0_i32, %c0_i32_0 : i32, i32
  }
  func.func @transform_20(%arg0: i32, %arg1: i32) -> (i32, i32) {
    %c0_i32 = arith.constant 0 : i32
    %c0_i32_0 = arith.constant 0 : i32
    %c0_i32_1 = arith.constant 0 : i32
    return %c0_i32, %c0_i32_0 : i32, i32
  }
  func.func @transform_21(%arg0: i32, %arg1: i32) -> (i32, i32) {
    %c0_i32 = arith.constant 0 : i32
    %c0_i32_0 = arith.constant 0 : i32
    %c0_i32_1 = arith.constant 0 : i32
    return %c0_i32, %c0_i32_0 : i32, i32
  }
  func.func @transform_22(%arg0: i32, %arg1: i32) -> (i32, i32) {
    %c0_i32 = arith.constant 0 : i32
    %c0_i32_0 = arith.constant 0 : i32
    %c0_i32_1 = arith.constant 0 : i32
    return %c0_i32, %c0_i32_0 : i32, i32
  }
  func.func @transform_23(%arg0: i32, %arg1: i32) -> (i32, i32) {
    %c0_i32 = arith.constant 0 : i32
    %c0_i32_0 = arith.constant 0 : i32
    %c0_i32_1 = arith.constant 0 : i32
    return %c0_i32, %c0_i32_0 : i32, i32
  }
  func.func @transform_24(%arg0: i32, %arg1: i32) -> (i32, i32) {
    %c0_i32 = arith.constant 0 : i32
    %c0_i32_0 = arith.constant 0 : i32
    %c0_i32_1 = arith.constant 0 : i32
    return %c0_i32, %c0_i32_0 : i32, i32
  }
  func.func @transform_25(%arg0: i32, %arg1: i32) -> (i32, i32, i32) {
    %c0_i32 = arith.constant 0 : i32
    %c0_i32_0 = arith.constant 0 : i32
    %c0_i32_1 = arith.constant 0 : i32
    return %arg0, %c0_i32, %c0_i32_0 : i32, i32, i32
  }
}

</mosaic_0001>

<llo_original>
// kernel: vit_forward.1
$region0: #{vit_forward.1}
  #allocation0 [shape = 'u32[]', space=smem, size = 0x4, offset = 0x4, fixed_abs, tag = 'smem constant byte address 0x4 - core index']
  #allocation1 [shape = 'u32[144,128]{1,0:T(1,128)}', space=vmem, size = 0x12000, scoped, tag = 'internal scratch']
  #allocation2 [shape = 'f32[24,128]{1,0:T(8,128)}', space=vmem, size = 0x3000, scoped, tag = 'scratch operand']
  %s0 = inlined_call_operand.vmem [shape: f32[2,24,256], index: 0, kind: input, shape index: {}]
  %s1 = inlined_call_operand.vmem [shape: bf16[256,128], index: 1, kind: input, shape index: {}]
  %s2 = inlined_call_operand.vmem [shape: f32[24,128], index: 2, kind: input, shape index: {}]
  %s3 = inlined_call_operand.vmem [shape: f32[2,1,128], index: 3, kind: input, shape index: {}]
  %s4 = inlined_call_operand.vmem [shape: f32[2,1,128], index: 4, kind: input, shape index: {}]
  %s5 = inlined_call_operand.vmem [shape: bf16[2,128,1536], index: 5, kind: input, shape index: {}]
  %s6 = inlined_call_operand.vmem [shape: f32[2,1,1536], index: 6, kind: input, shape index: {}]
  %s7 = inlined_call_operand.vmem [shape: bf16[2,512,128], index: 7, kind: input, shape index: {}]
  %s8 = inlined_call_operand.vmem [shape: f32[2,1,128], index: 8, kind: input, shape index: {}]
  %s9 = inlined_call_operand.vmem [shape: f32[2,1,128], index: 9, kind: input, shape index: {}]
  %s10 = inlined_call_operand.vmem [shape: f32[2,1,128], index: 10, kind: input, shape index: {}]
  %s11 = inlined_call_operand.vmem [shape: bf16[2,128,256], index: 11, kind: input, shape index: {}]
  %s12 = inlined_call_operand.vmem [shape: f32[2,1,256], index: 12, kind: input, shape index: {}]
  %s13 = inlined_call_operand.vmem [shape: bf16[2,256,128], index: 13, kind: input, shape index: {}]
  %s14 = inlined_call_operand.vmem [shape: f32[2,1,128], index: 14, kind: input, shape index: {}]
  %s15 = inlined_call_operand.vmem [shape: f32[1,128], index: 15, kind: input, shape index: {}]
  %s16 = inlined_call_operand.vmem [shape: f32[1,128], index: 16, kind: input, shape index: {}]
  %s17 = inlined_call_operand.vmem [shape: f32[1,128], index: 17, kind: input, shape index: {}]
  %s18 = inlined_call_operand.vmem [shape: f32[1,128], index: 18, kind: input, shape index: {}]
  %s19 = inlined_call_operand.vmem [shape: bf16[128,128], index: 19, kind: input, shape index: {}]
  %s20 = inlined_call_operand.vmem [shape: f32[1,128], index: 20, kind: input, shape index: {}]
  %s21 = inlined_call_operand.vmem [shape: bf16[128,128], index: 21, kind: input, shape index: {}]
  %s22 = inlined_call_operand.vmem [shape: f32[1,128], index: 22, kind: input, shape index: {}]
  %s23 = inlined_call_operand.vmem [shape: bf16[128,128], index: 23, kind: input, shape index: {}]
  %s24 = inlined_call_operand.vmem [shape: f32[1,128], index: 24, kind: input, shape index: {}]
  %s25 = inlined_call_operand.hbm [shape: f32[2,1,128], index: 25, kind: output, shape index: {}]
  %s26 = sld [smem:[#allocation0]]
  $region141: #{vit_forward.1} parent=0
    _
  %s28 = ssub.s32 1, %s26
  %s29 = scalar_select 0, %s28, %s26
  $region1: #{vit_forward.1} parent=0
    #allocation3 [shape = 'u8[1024]{0}', space=vmem, size = 0x400, scoped, tag = 'output window, operand 0']
    #allocation4 [shape = 's32[2]{0}', space=sflag, size = 0x8, scoped, tag = 'scoped memory for vit_forward.1']
    %30 = vsyncpa [#allocation4], 0
    %s31 = scalar_lea.sflag [#allocation4], 1
    %32 = vsyncpa %s31, 0
    loop: start=0, step=1, limit=6
    $region2: #{vit_forward.1} parent=1 // loop_pre_header
      _
    $region3: #{vit_forward.1} parent=1 // loop_header
      %s34 = sphi 0, %s38
      %p35 = scmp.ge.s32.totalorder %s34, 6
      %s41 = sphi 0, %s53
      %s42 = sphi 0, %s49
      %s43 = sphi 0, %s41
      %s44 = sphi 0, %s42
      %s45 = sphi 0, %s43
      %s46 = sphi 0, %s44
      %s56 = sphi 0, %s58
      %s59 = sphi 0, %s56
      %s60 = sphi 0, %s59
      %s76 = sphi 0, %s60
      %s80 = sphi 0, %s80
      %s82 = sphi 0, %s80
      %s83 = sphi 0, %s82
      %s97 = sphi 0, %s83
      %s101 = sphi 0, %s101
      %s103 = sphi 0, %s101
      %s104 = sphi 0, %s103
      %s118 = sphi 0, %s104
      %s124 = sphi 0, %s126
      %s127 = sphi 0, %s124
      %s128 = sphi 0, %s127
      %s144 = sphi 0, %s128
      %s150 = sphi 0, %s152
      %s153 = sphi 0, %s150
      %s154 = sphi 0, %s153
      %s170 = sphi 0, %s154
      %s176 = sphi 0, %s178
      %s179 = sphi 0, %s176
      %s180 = sphi 0, %s179
      %s196 = sphi 0, %s180
      %s202 = sphi 0, %s204
      %s205 = sphi 0, %s202
      %s206 = sphi 0, %s205
      %s222 = sphi 0, %s206
      %s228 = sphi 0, %s230
      %s231 = sphi 0, %s228
      %s232 = sphi 0, %s231
      %s248 = sphi 0, %s232
      %s254 = sphi 0, %s256
      %s257 = sphi 0, %s254
      %s258 = sphi 0, %s257
      %s274 = sphi 0, %s258
      %s280 = sphi 0, %s282
      %s283 = sphi 0, %s280
      %s284 = sphi 0, %s283
      %s300 = sphi 0, %s284
      %s306 = sphi 0, %s308
      %s309 = sphi 0, %s306
      %s310 = sphi 0, %s309
      %s326 = sphi 0, %s310
      %s332 = sphi 0, %s334
      %s335 = sphi 0, %s332
      %s336 = sphi 0, %s335
      %s352 = sphi 0, %s336
      %s358 = sphi 0, %s360
      %s361 = sphi 0, %s358
      %s362 = sphi 0, %s361
      %s378 = sphi 0, %s362
      %s384 = sphi 0, %s386
      %s387 = sphi 0, %s384
      %s388 = sphi 0, %s387
      %s404 = sphi 0, %s388
      %s410 = sphi 0, %s412
      %s413 = sphi 0, %s410
      %s414 = sphi 0, %s413
      %s430 = sphi 0, %s414
      %s434 = sphi 0, %s434
      %s436 = sphi 0, %s434
      %s437 = sphi 0, %s436
      %s451 = sphi 0, %s437
      %s455 = sphi 0, %s455
      %s457 = sphi 0, %s455
      %s458 = sphi 0, %s457
      %s472 = sphi 0, %s458
      %s476 = sphi 0, %s476
      %s478 = sphi 0, %s476
      %s479 = sphi 0, %s478
      %s493 = sphi 0, %s479
      %s497 = sphi 0, %s497
      %s499 = sphi 0, %s497
      %s500 = sphi 0, %s499
      %s514 = sphi 0, %s500
      %s518 = sphi 0, %s518
      %s520 = sphi 0, %s518
      %s521 = sphi 0, %s520
      %s535 = sphi 0, %s521
      %s539 = sphi 0, %s539
      %s541 = sphi 0, %s539
      %s542 = sphi 0, %s541
      %s556 = sphi 0, %s542
      %s560 = sphi 0, %s560
      %s562 = sphi 0, %s560
      %s563 = sphi 0, %s562
      %s577 = sphi 0, %s563
      %s581 = sphi 0, %s581
      %s583 = sphi 0, %s581
      %s584 = sphi 0, %s583
      %s598 = sphi 0, %s584
      %s602 = sphi 0, %s602
      %s604 = sphi 0, %s602
      %s605 = sphi 0, %s604
      %s619 = sphi 0, %s605
      %s623 = sphi 0, %s623
      %s625 = sphi 0, %s623
      %s626 = sphi 0, %s625
      %s640 = sphi 0, %s626
      %s646 = sphi 0, %s648
      %s649 = sphi 0, %s646
      %s650 = sphi 0, %s649
      %s666 = sphi 0, %s650
    $region4: #{vit_forward.1} parent=1 // loop_header_branch
      %37 = sbr.rel (%p35) target = $region8
    $region5: #{vit_forward.1} parent=1 // loop_body
      %s39 = ssub.s32 %s34, 1
      %s40 = ssub.s32 %s34, 2
      %s47 = sadd.s32 1, %s42
      %p48 = scmp.ge.s32.totalorder %s47, 2
      %s49 = scalar_select %p48, 0, %s47
      %s50 = sadd.s32 1, %s41
      %s51 = scalar_select %p48, %s50, %s41
      %p52 = scmp.ge.s32.totalorder %s51, 2
      %s53 = scalar_select %p52, 0, %s51
      %s54 = ssub.s32 %s41, %s53
      %p55 = scmp.eq.s32.totalorder %s54, 0
      %s57 = sadd.s32 %s56, 1
      %s58 = scalar_select %p55, %s56, %s57
      %p61 = pneg %p55
      %p62 = scmp.eq.s32.totalorder %s34, 3
      %p63 = por %p61, %p62
      %p64 = scmp.ne.s32.totalorder %s56, %s59
      %p65 = scmp.eq.s32.totalorder %s34, 0
      %p66 = por %p64, %p65
      %p67 = scmp.ne.s32.totalorder %s56, %s59
      %p68 = scmp.eq.s32.totalorder %s39, 3
      %p69 = por %p67, %p68
      %p70 = scmp.ne.s32.totalorder %s59, %s60
      %p71 = scmp.eq.s32.totalorder %s39, 0
      %p72 = por %p70, %p71
      %p73 = scmp.ne.s32.totalorder %s59, %s60
      %p74 = scmp.eq.s32.totalorder %s40, 3
      %p75 = por %p73, %p74
      %p77 = scmp.ne.s32.totalorder %s60, %s76
      %p78 = scmp.eq.s32.totalorder %s40, 0
      %p79 = por %p77, %p78
      %s81 = sadd.s32 %s80, 1
      %p84 = scmp.eq.s32.totalorder %s34, 3
      %p85 = scmp.ne.s32.totalorder %s80, %s82
      %p86 = scmp.eq.s32.totalorder %s34, 0
      %p87 = por %p85, %p86
      %p88 = scmp.ne.s32.totalorder %s80, %s82
      %p89 = scmp.eq.s32.totalorder %s39, 3
      %p90 = por %p88, %p89
      %p91 = scmp.ne.s32.totalorder %s82, %s83
      %p92 = scmp.eq.s32.totalorder %s39, 0
      %p93 = por %p91, %p92
      %p94 = scmp.ne.s32.totalorder %s82, %s83
      %p95 = scmp.eq.s32.totalorder %s40, 3
      %p96 = por %p94, %p95
      %p98 = scmp.ne.s32.totalorder %s83, %s97
      %p99 = scmp.eq.s32.totalorder %s40, 0
      %p100 = por %p98, %p99
      %s102 = sadd.s32 %s101, 1
      %p105 = scmp.eq.s32.totalorder %s34, 3
      %p106 = scmp.ne.s32.totalorder %s101, %s103
      %p107 = scmp.eq.s32.totalorder %s34, 0
      %p108 = por %p106, %p107
      %p109 = scmp.ne.s32.totalorder %s101, %s103
      %p110 = scmp.eq.s32.totalorder %s39, 3
      %p111 = por %p109, %p110
      %p112 = scmp.ne.s32.totalorder %s103, %s104
      %p113 = scmp.eq.s32.totalorder %s39, 0
      %p114 = por %p112, %p113
      %p115 = scmp.ne.s32.totalorder %s103, %s104
      %p116 = scmp.eq.s32.totalorder %s40, 3
      %p117 = por %p115, %p116
      %p119 = scmp.ne.s32.totalorder %s104, %s118
      %p120 = scmp.eq.s32.totalorder %s40, 0
      %p121 = por %p119, %p120
      %s122 = ssub.s32 %s42, %s49
      %p123 = scmp.eq.s32.totalorder %s122, 0
      %s125 = sadd.s32 %s124, 1
      %s126 = scalar_select %p123, %s124, %s125
      %p129 = pneg %p123
      %p130 = scmp.eq.s32.totalorder %s34, 3
      %p131 = por %p129, %p130
      %p132 = scmp.ne.s32.totalorder %s124, %s127
      %p133 = scmp.eq.s32.totalorder %s34, 0
      %p134 = por %p132, %p133
      %p135 = scmp.ne.s32.totalorder %s124, %s127
      %p136 = scmp.eq.s32.totalorder %s39, 3
      %p137 = por %p135, %p136
      %p138 = scmp.ne.s32.totalorder %s127, %s128
      %p139 = scmp.eq.s32.totalorder %s39, 0
      %p140 = por %p138, %p139
      %p141 = scmp.ne.s32.totalorder %s127, %s128
      %p142 = scmp.eq.s32.totalorder %s40, 3
      %p143 = por %p141, %p142
      %p145 = scmp.ne.s32.totalorder %s128, %s144
      %p146 = scmp.eq.s32.totalorder %s40, 0
      %p147 = por %p145, %p146
      %s148 = ssub.s32 %s42, %s49
      %p149 = scmp.eq.s32.totalorder %s148, 0
      %s151 = sadd.s32 %s150, 1
      %s152 = scalar_select %p149, %s150, %s151
      %p155 = pneg %p149
      %p156 = scmp.eq.s32.totalorder %s34, 3
      %p157 = por %p155, %p156
      %p158 = scmp.ne.s32.totalorder %s150, %s153
      %p159 = scmp.eq.s32.totalorder %s34, 0
      %p160 = por %p158, %p159
      %p161 = scmp.ne.s32.totalorder %s150, %s153
      %p162 = scmp.eq.s32.totalorder %s39, 3
      %p163 = por %p161, %p162
      %p164 = scmp.ne.s32.totalorder %s153, %s154
      %p165 = scmp.eq.s32.totalorder %s39, 0
      %p166 = por %p164, %p165
      %p167 = scmp.ne.s32.totalorder %s153, %s154
      %p168 = scmp.eq.s32.totalorder %s40, 3
      %p169 = por %p167, %p168
      %p171 = scmp.ne.s32.totalorder %s154, %s170
      %p172 = scmp.eq.s32.totalorder %s40, 0
      %p173 = por %p171, %p172
      %s174 = ssub.s32 %s42, %s49
      %p175 = scmp.eq.s32.totalorder %s174, 0
      %s177 = sadd.s32 %s176, 1
      %s178 = scalar_select %p175, %s176, %s177
      %p181 = pneg %p175
      %p182 = scmp.eq.s32.totalorder %s34, 3
      %p183 = por %p181, %p182
      %p184 = scmp.ne.s32.totalorder %s176, %s179
      %p185 = scmp.eq.s32.totalorder %s34, 0
      %p186 = por %p184, %p185
      %p187 = scmp.ne.s32.totalorder %s176, %s179
      %p188 = scmp.eq.s32.totalorder %s39, 3
      %p189 = por %p187, %p188
      %p190 = scmp.ne.s32.totalorder %s179, %s180
      %p191 = scmp.eq.s32.totalorder %s39, 0
      %p192 = por %p190, %p191
      %p193 = scmp.ne.s32.totalorder %s179, %s180
      %p194 = scmp.eq.s32.totalorder %s40, 3
      %p195 = por %p193, %p194
      %p197 = scmp.ne.s32.totalorder %s180, %s196
      %p198 = scmp.eq.s32.totalorder %s40, 0
      %p199 = por %p197, %p198
      %s200 = ssub.s32 %s42, %s49
      %p201 = scmp.eq.s32.totalorder %s200, 0
      %s203 = sadd.s32 %s202, 1
      %s204 = scalar_select %p201, %s202, %s203
      %p207 = pneg %p201
      %p208 = scmp.eq.s32.totalorder %s34, 3
      %p209 = por %p207, %p208
      %p210 = scmp.ne.s32.totalorder %s202, %s205
      %p211 = scmp.eq.s32.totalorder %s34, 0
      %p212 = por %p210, %p211
      %p213 = scmp.ne.s32.totalorder %s202, %s205
      %p214 = scmp.eq.s32.totalorder %s39, 3
      %p215 = por %p213, %p214
      %p216 = scmp.ne.s32.totalorder %s205, %s206
      %p217 = scmp.eq.s32.totalorder %s39, 0
      %p218 = por %p216, %p217
      %p219 = scmp.ne.s32.totalorder %s205, %s206
      %p220 = scmp.eq.s32.totalorder %s40, 3
      %p221 = por %p219, %p220
      %p223 = scmp.ne.s32.totalorder %s206, %s222
      %p224 = scmp.eq.s32.totalorder %s40, 0
      %p225 = por %p223, %p224
      %s226 = ssub.s32 %s42, %s49
      %p227 = scmp.eq.s32.totalorder %s226, 0
      %s229 = sadd.s32 %s228, 1
      %s230 = scalar_select %p227, %s228, %s229
      %p233 = pneg %p227
      %p234 = scmp.eq.s32.totalorder %s34, 3
      %p235 = por %p233, %p234
      %p236 = scmp.ne.s32.totalorder %s228, %s231
      %p237 = scmp.eq.s32.totalorder %s34, 0
      %p238 = por %p236, %p237
      %p239 = scmp.ne.s32.totalorder %s228, %s231
      %p240 = scmp.eq.s32.totalorder %s39, 3
      %p241 = por %p239, %p240
      %p242 = scmp.ne.s32.totalorder %s231, %s232
      %p243 = scmp.eq.s32.totalorder %s39, 0
      %p244 = por %p242, %p243
      %p245 = scmp.ne.s32.totalorder %s231, %s232
      %p246 = scmp.eq.s32.totalorder %s40, 3
      %p247 = por %p245, %p246
      %p249 = scmp.ne.s32.totalorder %s232, %s248
      %p250 = scmp.eq.s32.totalorder %s40, 0
      %p251 = por %p249, %p250
      %s252 = ssub.s32 %s42, %s49
      %p253 = scmp.eq.s32.totalorder %s252, 0
      %s255 = sadd.s32 %s254, 1
      %s256 = scalar_select %p253, %s254, %s255
      %p259 = pneg %p253
      %p260 = scmp.eq.s32.totalorder %s34, 3
      %p261 = por %p259, %p260
      %p262 = scmp.ne.s32.totalorder %s254, %s257
      %p263 = scmp.eq.s32.totalorder %s34, 0
      %p264 = por %p262, %p263
      %p265 = scmp.ne.s32.totalorder %s254, %s257
      %p266 = scmp.eq.s32.totalorder %s39, 3
      %p267 = por %p265, %p266
      %p268 = scmp.ne.s32.totalorder %s257, %s258
      %p269 = scmp.eq.s32.totalorder %s39, 0
      %p270 = por %p268, %p269
      %p271 = scmp.ne.s32.totalorder %s257, %s258
      %p272 = scmp.eq.s32.totalorder %s40, 3
      %p273 = por %p271, %p272
      %p275 = scmp.ne.s32.totalorder %s258, %s274
      %p276 = scmp.eq.s32.totalorder %s40, 0
      %p277 = por %p275, %p276
      %s278 = ssub.s32 %s42, %s49
      %p279 = scmp.eq.s32.totalorder %s278, 0
      %s281 = sadd.s32 %s280, 1
      %s282 = scalar_select %p279, %s280, %s281
      %p285 = pneg %p279
      %p286 = scmp.eq.s32.totalorder %s34, 3
      %p287 = por %p285, %p286
      %p288 = scmp.ne.s32.totalorder %s280, %s283
      %p289 = scmp.eq.s32.totalorder %s34, 0
      %p290 = por %p288, %p289
      %p291 = scmp.ne.s32.totalorder %s280, %s283
      %p292 = scmp.eq.s32.totalorder %s39, 3
      %p293 = por %p291, %p292
      %p294 = scmp.ne.s32.totalorder %s283, %s284
      %p295 = scmp.eq.s32.totalorder %s39, 0
      %p296 = por %p294, %p295
      %p297 = scmp.ne.s32.totalorder %s283, %s284
      %p298 = scmp.eq.s32.totalorder %s40, 3
      %p299 = por %p297, %p298
      %p301 = scmp.ne.s32.totalorder %s284, %s300
      %p302 = scmp.eq.s32.totalorder %s40, 0
      %p303 = por %p301, %p302
      %s304 = ssub.s32 %s42, %s49
      %p305 = scmp.eq.s32.totalorder %s304, 0
      %s307 = sadd.s32 %s306, 1
      %s308 = scalar_select %p305, %s306, %s307
      %p311 = pneg %p305
      %p312 = scmp.eq.s32.totalorder %s34, 3
      %p313 = por %p311, %p312
      %p314 = scmp.ne.s32.totalorder %s306, %s309
      %p315 = scmp.eq.s32.totalorder %s34, 0
      %p316 = por %p314, %p315
      %p317 = scmp.ne.s32.totalorder %s306, %s309
      %p318 = scmp.eq.s32.totalorder %s39, 3
      %p319 = por %p317, %p318
      %p320 = scmp.ne.s32.totalorder %s309, %s310
      %p321 = scmp.eq.s32.totalorder %s39, 0
      %p322 = por %p320, %p321
      %p323 = scmp.ne.s32.totalorder %s309, %s310
      %p324 = scmp.eq.s32.totalorder %s40, 3
      %p325 = por %p323, %p324
      %p327 = scmp.ne.s32.totalorder %s310, %s326
      %p328 = scmp.eq.s32.totalorder %s40, 0
      %p329 = por %p327, %p328
      %s330 = ssub.s32 %s42, %s49
      %p331 = scmp.eq.s32.totalorder %s330, 0
      %s333 = sadd.s32 %s332, 1
      %s334 = scalar_select %p331, %s332, %s333
      %p337 = pneg %p331
      %p338 = scmp.eq.s32.totalorder %s34, 3
      %p339 = por %p337, %p338
      %p340 = scmp.ne.s32.totalorder %s332, %s335
      %p341 = scmp.eq.s32.totalorder %s34, 0
      %p342 = por %p340, %p341
      %p343 = scmp.ne.s32.totalorder %s332, %s335
      %p344 = scmp.eq.s32.totalorder %s39, 3
      %p345 = por %p343, %p344
      %p346 = scmp.ne.s32.totalorder %s335, %s336
      %p347 = scmp.eq.s32.totalorder %s39, 0
      %p348 = por %p346, %p347
      %p349 = scmp.ne.s32.totalorder %s335, %s336
      %p350 = scmp.eq.s32.totalorder %s40, 3
      %p351 = por %p349, %p350
      %p353 = scmp.ne.s32.totalorder %s336, %s352
      %p354 = scmp.eq.s32.totalorder %s40, 0
      %p355 = por %p353, %p354
      %s356 = ssub.s32 %s42, %s49
      %p357 = scmp.eq.s32.totalorder %s356, 0
      %s359 = sadd.s32 %s358, 1
      %s360 = scalar_select %p357, %s358, %s359
      %p363 = pneg %p357
      %p364 = scmp.eq.s32.totalorder %s34, 3
      %p365 = por %p363, %p364
      %p366 = scmp.ne.s32.totalorder %s358, %s361
      %p367 = scmp.eq.s32.totalorder %s34, 0
      %p368 = por %p366, %p367
      %p369 = scmp.ne.s32.totalorder %s358, %s361
      %p370 = scmp.eq.s32.totalorder %s39, 3
      %p371 = por %p369, %p370
      %p372 = scmp.ne.s32.totalorder %s361, %s362
      %p373 = scmp.eq.s32.totalorder %s39, 0
      %p374 = por %p372, %p373
      %p375 = scmp.ne.s32.totalorder %s361, %s362
      %p376 = scmp.eq.s32.totalorder %s40, 3
      %p377 = por %p375, %p376
      %p379 = scmp.ne.s32.totalorder %s362, %s378
      %p380 = scmp.eq.s32.totalorder %s40, 0
      %p381 = por %p379, %p380
      %s382 = ssub.s32 %s42, %s49
      %p383 = scmp.eq.s32.totalorder %s382, 0
      %s385 = sadd.s32 %s384, 1
      %s386 = scalar_select %p383, %s384, %s385
      %p389 = pneg %p383
      %p390 = scmp.eq.s32.totalorder %s34, 3
      %p391 = por %p389, %p390
      %p392 = scmp.ne.s32.totalorder %s384, %s387
      %p393 = scmp.eq.s32.totalorder %s34, 0
      %p394 = por %p392, %p393
      %p395 = scmp.ne.s32.totalorder %s384, %s387
      %p396 = scmp.eq.s32.totalorder %s39, 3
      %p397 = por %p395, %p396
      %p398 = scmp.ne.s32.totalorder %s387, %s388
      %p399 = scmp.eq.s32.totalorder %s39, 0
      %p400 = por %p398, %p399
      %p401 = scmp.ne.s32.totalorder %s387, %s388
      %p402 = scmp.eq.s32.totalorder %s40, 3
      %p403 = por %p401, %p402
      %p405 = scmp.ne.s32.totalorder %s388, %s404
      %p406 = scmp.eq.s32.totalorder %s40, 0
      %p407 = por %p405, %p406
      %s408 = ssub.s32 %s42, %s49
      %p409 = scmp.eq.s32.totalorder %s408, 0
      %s411 = sadd.s32 %s410, 1
      %s412 = scalar_select %p409, %s410, %s411
      %p415 = pneg %p409
      %p416 = scmp.eq.s32.totalorder %s34, 3
      %p417 = por %p415, %p416
      %p418 = scmp.ne.s32.totalorder %s410, %s413
      %p419 = scmp.eq.s32.totalorder %s34, 0
      %p420 = por %p418, %p419
      %p421 = scmp.ne.s32.totalorder %s410, %s413
      %p422 = scmp.eq.s32.totalorder %s39, 3
      %p423 = por %p421, %p422
      %p424 = scmp.ne.s32.totalorder %s413, %s414
      %p425 = scmp.eq.s32.totalorder %s39, 0
      %p426 = por %p424, %p425
      %p427 = scmp.ne.s32.totalorder %s413, %s414
      %p428 = scmp.eq.s32.totalorder %s40, 3
      %p429 = por %p427, %p428
      %p431 = scmp.ne.s32.totalorder %s414, %s430
      %p432 = scmp.eq.s32.totalorder %s40, 0
      %p433 = por %p431, %p432
      %s435 = sadd.s32 %s434, 1
      %p438 = scmp.eq.s32.totalorder %s34, 3
      %p439 = scmp.ne.s32.totalorder %s434, %s436
      %p440 = scmp.eq.s32.totalorder %s34, 0
      %p441 = por %p439, %p440
      %p442 = scmp.ne.s32.totalorder %s434, %s436
      %p443 = scmp.eq.s32.totalorder %s39, 3
      %p444 = por %p442, %p443
      %p445 = scmp.ne.s32.totalorder %s436, %s437
      %p446 = scmp.eq.s32.totalorder %s39, 0
      %p447 = por %p445, %p446
      %p448 = scmp.ne.s32.totalorder %s436, %s437
      %p449 = scmp.eq.s32.totalorder %s40, 3
      %p450 = por %p448, %p449
      %p452 = scmp.ne.s32.totalorder %s437, %s451
      %p453 = scmp.eq.s32.totalorder %s40, 0
      %p454 = por %p452, %p453
      %s456 = sadd.s32 %s455, 1
      %p459 = scmp.eq.s32.totalorder %s34, 3
      %p460 = scmp.ne.s32.totalorder %s455, %s457
      %p461 = scmp.eq.s32.totalorder %s34, 0
      %p462 = por %p460, %p461
      %p463 = scmp.ne.s32.totalorder %s455, %s457
      %p464 = scmp.eq.s32.totalorder %s39, 3
      %p465 = por %p463, %p464
      %p466 = scmp.ne.s32.totalorder %s457, %s458
      %p467 = scmp.eq.s32.totalorder %s39, 0
      %p468 = por %p466, %p467
      %p469 = scmp.ne.s32.totalorder %s457, %s458
      %p470 = scmp.eq.s32.totalorder %s40, 3
      %p471 = por %p469, %p470
      %p473 = scmp.ne.s32.totalorder %s458, %s472
      %p474 = scmp.eq.s32.totalorder %s40, 0
      %p475 = por %p473, %p474
      %s477 = sadd.s32 %s476, 1
      %p480 = scmp.eq.s32.totalorder %s34, 3
      %p481 = scmp.ne.s32.totalorder %s476, %s478
      %p482 = scmp.eq.s32.totalorder %s34, 0
      %p483 = por %p481, %p482
      %p484 = scmp.ne.s32.totalorder %s476, %s478
      %p485 = scmp.eq.s32.totalorder %s39, 3
      %p486 = por %p484, %p485
      %p487 = scmp.ne.s32.totalorder %s478, %s479
      %p488 = scmp.eq.s32.totalorder %s39, 0
      %p489 = por %p487, %p488
      %p490 = scmp.ne.s32.totalorder %s478, %s479
      %p491 = scmp.eq.s32.totalorder %s40, 3
      %p492 = por %p490, %p491
      %p494 = scmp.ne.s32.totalorder %s479, %s493
      %p495 = scmp.eq.s32.totalorder %s40, 0
      %p496 = por %p494, %p495
      %s498 = sadd.s32 %s497, 1
      %p501 = scmp.eq.s32.totalorder %s34, 3
      %p502 = scmp.ne.s32.totalorder %s497, %s499
      %p503 = scmp.eq.s32.totalorder %s34, 0
      %p504 = por %p502, %p503
      %p505 = scmp.ne.s32.totalorder %s497, %s499
      %p506 = scmp.eq.s32.totalorder %s39, 3
      %p507 = por %p505, %p506
      %p508 = scmp.ne.s32.totalorder %s499, %s500
      %p509 = scmp.eq.s32.totalorder %s39, 0
      %p510 = por %p508, %p509
      %p511 = scmp.ne.s32.totalorder %s499, %s500
      %p512 = scmp.eq.s32.totalorder %s40, 3
      %p513 = por %p511, %p512
      %p515 = scmp.ne.s32.totalorder %s500, %s514
      %p516 = scmp.eq.s32.totalorder %s40, 0
      %p517 = por %p515, %p516
      %s519 = sadd.s32 %s518, 1
      %p522 = scmp.eq.s32.totalorder %s34, 3
      %p523 = scmp.ne.s32.totalorder %s518, %s520
      %p524 = scmp.eq.s32.totalorder %s34, 0
      %p525 = por %p523, %p524
      %p526 = scmp.ne.s32.totalorder %s518, %s520
      %p527 = scmp.eq.s32.totalorder %s39, 3
      %p528 = por %p526, %p527
      %p529 = scmp.ne.s32.totalorder %s520, %s521
      %p530 = scmp.eq.s32.totalorder %s39, 0
      %p531 = por %p529, %p530
      %p532 = scmp.ne.s32.totalorder %s520, %s521
      %p533 = scmp.eq.s32.totalorder %s40, 3
      %p534 = por %p532, %p533
      %p536 = scmp.ne.s32.totalorder %s521, %s535
      %p537 = scmp.eq.s32.totalorder %s40, 0
      %p538 = por %p536, %p537
      %s540 = sadd.s32 %s539, 1
      %p543 = scmp.eq.s32.totalorder %s34, 3
      %p544 = scmp.ne.s32.totalorder %s539, %s541
      %p545 = scmp.eq.s32.totalorder %s34, 0
      %p546 = por %p544, %p545
      %p547 = scmp.ne.s32.totalorder %s539, %s541
      %p548 = scmp.eq.s32.totalorder %s39, 3
      %p549 = por %p547, %p548
      %p550 = scmp.ne.s32.totalorder %s541, %s542
      %p551 = scmp.eq.s32.totalorder %s39, 0
      %p552 = por %p550, %p551
      %p553 = scmp.ne.s32.totalorder %s541, %s542
      %p554 = scmp.eq.s32.totalorder %s40, 3
      %p555 = por %p553, %p554
      %p557 = scmp.ne.s32.totalorder %s542, %s556
      %p558 = scmp.eq.s32.totalorder %s40, 0
      %p559 = por %p557, %p558
      %s561 = sadd.s32 %s560, 1
      %p564 = scmp.eq.s32.totalorder %s34, 3
      %p565 = scmp.ne.s32.totalorder %s560, %s562
      %p566 = scmp.eq.s32.totalorder %s34, 0
      %p567 = por %p565, %p566
      %p568 = scmp.ne.s32.totalorder %s560, %s562
      %p569 = scmp.eq.s32.totalorder %s39, 3
      %p570 = por %p568, %p569
      %p571 = scmp.ne.s32.totalorder %s562, %s563
      %p572 = scmp.eq.s32.totalorder %s39, 0
      %p573 = por %p571, %p572
      %p574 = scmp.ne.s32.totalorder %s562, %s563
      %p575 = scmp.eq.s32.totalorder %s40, 3
      %p576 = por %p574, %p575
      %p578 = scmp.ne.s32.totalorder %s563, %s577
      %p579 = scmp.eq.s32.totalorder %s40, 0
      %p580 = por %p578, %p579
      %s582 = sadd.s32 %s581, 1
      %p585 = scmp.eq.s32.totalorder %s34, 3
      %p586 = scmp.ne.s32.totalorder %s581, %s583
      %p587 = scmp.eq.s32.totalorder %s34, 0
      %p588 = por %p586, %p587
      %p589 = scmp.ne.s32.totalorder %s581, %s583
      %p590 = scmp.eq.s32.totalorder %s39, 3
      %p591 = por %p589, %p590
      %p592 = scmp.ne.s32.totalorder %s583, %s584
      %p593 = scmp.eq.s32.totalorder %s39, 0
      %p594 = por %p592, %p593
      %p595 = scmp.ne.s32.totalorder %s583, %s584
      %p596 = scmp.eq.s32.totalorder %s40, 3
      %p597 = por %p595, %p596
      %p599 = scmp.ne.s32.totalorder %s584, %s598
      %p600 = scmp.eq.s32.totalorder %s40, 0
      %p601 = por %p599, %p600
      %s603 = sadd.s32 %s602, 1
      %p606 = scmp.eq.s32.totalorder %s34, 3
      %p607 = scmp.ne.s32.totalorder %s602, %s604
      %p608 = scmp.eq.s32.totalorder %s34, 0
      %p609 = por %p607, %p608
      %p610 = scmp.ne.s32.totalorder %s602, %s604
      %p611 = scmp.eq.s32.totalorder %s39, 3
      %p612 = por %p610, %p611
      %p613 = scmp.ne.s32.totalorder %s604, %s605
      %p614 = scmp.eq.s32.totalorder %s39, 0
      %p615 = por %p613, %p614
      %p616 = scmp.ne.s32.totalorder %s604, %s605
      %p617 = scmp.eq.s32.totalorder %s40, 3
      %p618 = por %p616, %p617
      %p620 = scmp.ne.s32.totalorder %s605, %s619
      %p621 = scmp.eq.s32.totalorder %s40, 0
      %p622 = por %p620, %p621
      %s624 = sadd.s32 %s623, 1
      %p627 = scmp.eq.s32.totalorder %s34, 3
      %p628 = scmp.ne.s32.totalorder %s623, %s625
      %p629 = scmp.eq.s32.totalorder %s34, 0
      %p630 = por %p628, %p629
      %p631 = scmp.ne.s32.totalorder %s623, %s625
      %p632 = scmp.eq.s32.totalorder %s39, 3
      %p633 = por %p631, %p632
      %p634 = scmp.ne.s32.totalorder %s625, %s626
      %p635 = scmp.eq.s32.totalorder %s39, 0
      %p636 = por %p634, %p635
      %p637 = scmp.ne.s32.totalorder %s625, %s626
      %p638 = scmp.eq.s32.totalorder %s40, 3
      %p639 = por %p637, %p638
      %p641 = scmp.ne.s32.totalorder %s626, %s640
      %p642 = scmp.eq.s32.totalorder %s40, 0
      %p643 = por %p641, %p642
      %s644 = ssub.s32 %s41, %s53
      %p645 = scmp.eq.s32.totalorder %s644, 0
      %s647 = sadd.s32 %s646, 1
      %s648 = scalar_select %p645, %s646, %s647
      %p651 = pneg %p645
      %p652 = scmp.eq.s32.totalorder %s34, 3
      %p653 = por %p651, %p652
      %p654 = scmp.ne.s32.totalorder %s646, %s649
      %p655 = scmp.eq.s32.totalorder %s34, 0
      %p656 = por %p654, %p655
      %p657 = scmp.ne.s32.totalorder %s646, %s649
      %p658 = scmp.eq.s32.totalorder %s39, 3
      %p659 = por %p657, %p658
      %p660 = scmp.ne.s32.totalorder %s649, %s650
      %p661 = scmp.eq.s32.totalorder %s39, 0
      %p662 = por %p660, %p661
      %p663 = scmp.ne.s32.totalorder %s649, %s650
      %p664 = scmp.eq.s32.totalorder %s40, 3
      %p665 = por %p663, %p664
      %p667 = scmp.ne.s32.totalorder %s650, %s666
      %p668 = scmp.eq.s32.totalorder %s40, 0
      %p669 = por %p667, %p668
      %p670 = scmp.le.s32.totalorder 1, %s34
      %p671 = scmp.lt.s32.totalorder %s34, 5
      %p672 = pnand %p670, %p671
      %p673 = pneg %p672
      // Predicated region
      $region9: #{vit_forward.1} parent=5 // pred_check
        _
      $region10: #{vit_forward.1} parent=5 // pred_check_branch
        %675 = sbr.rel (%p672) target = $region12
      $region11: #{vit_forward.1} parent=5 // pred_region
        %s676 = ssub.s32 %s34, 1
        // Predicated region
        $region13: #{vit_forward.1} parent=11 // pred_check
          %p677 = pneg %p93
        $region14: #{vit_forward.1} parent=11 // pred_check_branch
          %679 = sbr.rel (%p677) target = $region16
        $region15: #{vit_forward.1} parent=11 // pred_region
          _
        $region16: #{vit_forward.1} parent=11 // pred_fallthru
          _
        // Predicated region
        $region17: #{vit_forward.1} parent=11 // pred_check
          %p680 = pneg %p114
        $region18: #{vit_forward.1} parent=11 // pred_check_branch
          %682 = sbr.rel (%p680) target = $region20
        $region19: #{vit_forward.1} parent=11 // pred_region
          _
        $region20: #{vit_forward.1} parent=11 // pred_fallthru
          _
        // Predicated region
        $region21: #{vit_forward.1} parent=11 // pred_check
          %p683 = pneg %p447
        $region22: #{vit_forward.1} parent=11 // pred_check_branch
          %685 = sbr.rel (%p683) target = $region24
        $region23: #{vit_forward.1} parent=11 // pred_region
          _
        $region24: #{vit_forward.1} parent=11 // pred_fallthru
          _
        // Predicated region
        $region25: #{vit_forward.1} parent=11 // pred_check
          %p686 = pneg %p468
        $region26: #{vit_forward.1} parent=11 // pred_check_branch
          %688 = sbr.rel (%p686) target = $region28
        $region27: #{vit_forward.1} parent=11 // pred_region
          _
        $region28: #{vit_forward.1} parent=11 // pred_fallthru
          _
        // Predicated region
        $region29: #{vit_forward.1} parent=11 // pred_check
          %p689 = pneg %p489
        $region30: #{vit_forward.1} parent=11 // pred_check_branch
          %691 = sbr.rel (%p689) target = $region32
        $region31: #{vit_forward.1} parent=11 // pred_region
          _
        $region32: #{vit_forward.1} parent=11 // pred_fallthru
          _
        // Predicated region
        $region33: #{vit_forward.1} parent=11 // pred_check
          %p692 = pneg %p510
        $region34: #{vit_forward.1} parent=11 // pred_check_branch
          %694 = sbr.rel (%p692) target = $region36
        $region35: #{vit_forward.1} parent=11 // pred_region
          _
        $region36: #{vit_forward.1} parent=11 // pred_fallthru
          _
        // Predicated region
        $region37: #{vit_forward.1} parent=11 // pred_check
          %p695 = pneg %p531
        $region38: #{vit_forward.1} parent=11 // pred_check_branch
          %697 = sbr.rel (%p695) target = $region40
        $region39: #{vit_forward.1} parent=11 // pred_region
          _
        $region40: #{vit_forward.1} parent=11 // pred_fallthru
          _
        // Predicated region
        $region41: #{vit_forward.1} parent=11 // pred_check
          %p698 = pneg %p552
        $region42: #{vit_forward.1} parent=11 // pred_check_branch
          %700 = sbr.rel (%p698) target = $region44
        $region43: #{vit_forward.1} parent=11 // pred_region
          _
        $region44: #{vit_forward.1} parent=11 // pred_fallthru
          _
        // Predicated region
        $region45: #{vit_forward.1} parent=11 // pred_check
          %p701 = pneg %p573
        $region46: #{vit_forward.1} parent=11 // pred_check_branch
          %703 = sbr.rel (%p701) target = $region48
        $region47: #{vit_forward.1} parent=11 // pred_region
          _
        $region48: #{vit_forward.1} parent=11 // pred_fallthru
          _
        // Predicated region
        $region49: #{vit_forward.1} parent=11 // pred_check
          %p704 = pneg %p594
        $region50: #{vit_forward.1} parent=11 // pred_check_branch
          %706 = sbr.rel (%p704) target = $region52
        $region51: #{vit_forward.1} parent=11 // pred_region
          _
        $region52: #{vit_forward.1} parent=11 // pred_fallthru
          _
        // Predicated region
        $region53: #{vit_forward.1} parent=11 // pred_check
          %p707 = pneg %p615
        $region54: #{vit_forward.1} parent=11 // pred_check_branch
          %709 = sbr.rel (%p707) target = $region56
        $region55: #{vit_forward.1} parent=11 // pred_region
          _
        $region56: #{vit_forward.1} parent=11 // pred_fallthru
          _
        // Predicated region
        $region57: #{vit_forward.1} parent=11 // pred_check
          %p710 = pneg %p636
        $region58: #{vit_forward.1} parent=11 // pred_check_branch
          %712 = sbr.rel (%p710) target = $region60
        $region59: #{vit_forward.1} parent=11 // pred_region
          _
        $region60: #{vit_forward.1} parent=11 // pred_fallthru
          _
      $region12: #{vit_forward.1} parent=5 // pred_fallthru
        _
      %p713 = scmp.lt.s32.totalorder %s34, 4
      // Predicated region
      $region61: #{vit_forward.1} parent=5 // pred_check
        %p714 = pneg %p713
      $region62: #{vit_forward.1} parent=5 // pred_check_branch
        %716 = sbr.rel (%p714) target = $region64
      $region63: #{vit_forward.1} parent=5 // pred_region
        // Predicated region
        $region65: #{vit_forward.1} parent=63 // pred_check
          %p717 = pneg %p66
        $region66: #{vit_forward.1} parent=63 // pred_check_branch
          %719 = sbr.rel (%p717) target = $region68
        $region67: #{vit_forward.1} parent=63 // pred_region
          %p720 = scmp.lt.s32.totalorder %s41, 1
          %s721 = scalar_select %p720, %s41, 1
          %s722 = smul.addr %s721, 6
          %s723 = smul.addr %s722, 8
          %s724 = scalar_lea.vmem %s0, %s723
        $region68: #{vit_forward.1} parent=63 // pred_fallthru
          _
        // Predicated region
        $region69: #{vit_forward.1} parent=63 // pred_check
          %p725 = pneg %p134
        $region70: #{vit_forward.1} parent=63 // pred_check_branch
          %727 = sbr.rel (%p725) target = $region72
        $region71: #{vit_forward.1} parent=63 // pred_region
          %p728 = scmp.lt.s32.totalorder %s42, 1
          %s729 = scalar_select %p728, %s42, 1
          %s730 = scalar_lea.vmem %s3, %s729
        $region72: #{vit_forward.1} parent=63 // pred_fallthru
          _
        // Predicated region
        $region73: #{vit_forward.1} parent=63 // pred_check
          %p731 = pneg %p160
        $region74: #{vit_forward.1} parent=63 // pred_check_branch
          %733 = sbr.rel (%p731) target = $region76
        $region75: #{vit_forward.1} parent=63 // pred_region
          %p734 = scmp.lt.s32.totalorder %s42, 1
          %s735 = scalar_select %p734, %s42, 1
          %s736 = scalar_lea.vmem %s4, %s735
        $region76: #{vit_forward.1} parent=63 // pred_fallthru
          _
        // Predicated region
        $region77: #{vit_forward.1} parent=63 // pred_check
          %p737 = pneg %p186
        $region78: #{vit_forward.1} parent=63 // pred_check_branch
          %739 = sbr.rel (%p737) target = $region80
        $region79: #{vit_forward.1} parent=63 // pred_region
          %p740 = scmp.lt.s32.totalorder %s42, 1
          %s741 = scalar_select %p740, %s42, 1
          %s742 = smul.addr %s741, 192
          %s743 = smul.addr %s742, 4
          %s744 = scalar_lea.vmem %s5, %s743
        $region80: #{vit_forward.1} parent=63 // pred_fallthru
          _
        // Predicated region
        $region81: #{vit_forward.1} parent=63 // pred_check
          %p745 = pneg %p212
        $region82: #{vit_forward.1} parent=63 // pred_check_branch
          %747 = sbr.rel (%p745) target = $region84
        $region83: #{vit_forward.1} parent=63 // pred_region
          %p748 = scmp.lt.s32.totalorder %s42, 1
          %s749 = scalar_select %p748, %s42, 1
          %s750 = smul.addr %s749, 12
          %s751 = scalar_lea.vmem %s6, %s750
        $region84: #{vit_forward.1} parent=63 // pred_fallthru
          _
        // Predicated region
        $region85: #{vit_forward.1} parent=63 // pred_check
          %p752 = pneg %p238
        $region86: #{vit_forward.1} parent=63 // pred_check_branch
          %754 = sbr.rel (%p752) target = $region88
        $region87: #{vit_forward.1} parent=63 // pred_region
          %p755 = scmp.lt.s32.totalorder %s42, 1
          %s756 = scalar_select %p755, %s42, 1
          %s757 = smul.addr %s756, 64
          %s758 = smul.addr %s757, 4
          %s759 = scalar_lea.vmem %s7, %s758
        $region88: #{vit_forward.1} parent=63 // pred_fallthru
          _
        // Predicated region
        $region89: #{vit_forward.1} parent=63 // pred_check
          %p760 = pneg %p264
        $region90: #{vit_forward.1} parent=63 // pred_check_branch
          %762 = sbr.rel (%p760) target = $region92
        $region91: #{vit_forward.1} parent=63 // pred_region
          %p763 = scmp.lt.s32.totalorder %s42, 1
          %s764 = scalar_select %p763, %s42, 1
          %s765 = scalar_lea.vmem %s8, %s764
        $region92: #{vit_forward.1} parent=63 // pred_fallthru
          _
        // Predicated region
        $region93: #{vit_forward.1} parent=63 // pred_check
          %p766 = pneg %p290
        $region94: #{vit_forward.1} parent=63 // pred_check_branch
          %768 = sbr.rel (%p766) target = $region96
        $region95: #{vit_forward.1} parent=63 // pred_region
          %p769 = scmp.lt.s32.totalorder %s42, 1
          %s770 = scalar_select %p769, %s42, 1
          %s771 = scalar_lea.vmem %s9, %s770
        $region96: #{vit_forward.1} parent=63 // pred_fallthru
          _
        // Predicated region
        $region97: #{vit_forward.1} parent=63 // pred_check
          %p772 = pneg %p316
        $region98: #{vit_forward.1} parent=63 // pred_check_branch
          %774 = sbr.rel (%p772) target = $region100
        $region99: #{vit_forward.1} parent=63 // pred_region
          %p775 = scmp.lt.s32.totalorder %s42, 1
          %s776 = scalar_select %p775, %s42, 1
          %s777 = scalar_lea.vmem %s10, %s776
        $region100: #{vit_forward.1} parent=63 // pred_fallthru
          _
        // Predicated region
        $region101: #{vit_forward.1} parent=63 // pred_check
          %p778 = pneg %p342
        $region102: #{vit_forward.1} parent=63 // pred_check_branch
          %780 = sbr.rel (%p778) target = $region104
        $region103: #{vit_forward.1} parent=63 // pred_region
          %p781 = scmp.lt.s32.totalorder %s42, 1
          %s782 = scalar_select %p781, %s42, 1
          %s783 = smul.addr %s782, 32
          %s784 = smul.addr %s783, 4
          %s785 = scalar_lea.vmem %s11, %s784
        $region104: #{vit_forward.1} parent=63 // pred_fallthru
          _
        // Predicated region
        $region105: #{vit_forward.1} parent=63 // pred_check
          %p786 = pneg %p368
        $region106: #{vit_forward.1} parent=63 // pred_check_branch
          %788 = sbr.rel (%p786) target = $region108
        $region107: #{vit_forward.1} parent=63 // pred_region
          %p789 = scmp.lt.s32.totalorder %s42, 1
          %s790 = scalar_select %p789, %s42, 1
          %s791 = smul.addr %s790, 2
          %s792 = scalar_lea.vmem %s12, %s791
        $region108: #{vit_forward.1} parent=63 // pred_fallthru
          _
        // Predicated region
        $region109: #{vit_forward.1} parent=63 // pred_check
          %p793 = pneg %p394
        $region110: #{vit_forward.1} parent=63 // pred_check_branch
          %795 = sbr.rel (%p793) target = $region112
        $region111: #{vit_forward.1} parent=63 // pred_region
          %p796 = scmp.lt.s32.totalorder %s42, 1
          %s797 = scalar_select %p796, %s42, 1
          %s798 = smul.addr %s797, 32
          %s799 = smul.addr %s798, 4
          %s800 = scalar_lea.vmem %s13, %s799
        $region112: #{vit_forward.1} parent=63 // pred_fallthru
          _
        // Predicated region
        $region113: #{vit_forward.1} parent=63 // pred_check
          %p801 = pneg %p420
        $region114: #{vit_forward.1} parent=63 // pred_check_branch
          %803 = sbr.rel (%p801) target = $region116
        $region115: #{vit_forward.1} parent=63 // pred_region
          %p804 = scmp.lt.s32.totalorder %s42, 1
          %s805 = scalar_select %p804, %s42, 1
          %s806 = scalar_lea.vmem %s14, %s805
        $region116: #{vit_forward.1} parent=63 // pred_fallthru
          _
      $region64: #{vit_forward.1} parent=5 // pred_fallthru
        _
      %p807 = scmp.le.s32.totalorder 1, %s34
      %p808 = scmp.lt.s32.totalorder %s34, 5
      %p809 = pnand %p807, %p808
      %p810 = pneg %p809
      // Predicated region
      $region117: #{vit_forward.1} parent=5 // pred_check
        _
      $region118: #{vit_forward.1} parent=5 // pred_check_branch
        %812 = sbr.rel (%p809) target = $region120
      $region119: #{vit_forward.1} parent=5 // pred_region
        %s813 = ssub.s32 %s34, 1
        %p814 = scmp.lt.s32.totalorder %s43, 1
        %s815 = scalar_select %p814, %s43, 1
        %s816 = smul.addr %s815, 6
        %s817 = smul.addr %s816, 8
        %s818 = scalar_lea.vmem %s0, %s817
        %p819 = pneg %p72
        %p820 = pneg %p69
        %p821 = pneg %p93
        %p822 = pneg %p90
        %p823 = pneg %p114
        %p824 = pneg %p111
        %p825 = scmp.lt.s32.totalorder %s44, 1
        %s826 = scalar_select %p825, %s44, 1
        %s827 = scalar_lea.vmem %s3, %s826
        %p828 = pneg %p140
        %p829 = pneg %p137
        %p830 = scmp.lt.s32.totalorder %s44, 1
        %s831 = scalar_select %p830, %s44, 1
        %s832 = scalar_lea.vmem %s4, %s831
        %p833 = pneg %p166
        %p834 = pneg %p163
        %p835 = scmp.lt.s32.totalorder %s44, 1
        %s836 = scalar_select %p835, %s44, 1
        %s837 = smul.addr %s836, 192
        %s838 = smul.addr %s837, 4
        %s839 = scalar_lea.vmem %s5, %s838
        %p840 = pneg %p192
        %p841 = pneg %p189
        %p842 = scmp.lt.s32.totalorder %s44, 1
        %s843 = scalar_select %p842, %s44, 1
        %s844 = smul.addr %s843, 12
        %s845 = scalar_lea.vmem %s6, %s844
        %p846 = pneg %p218
        %p847 = pneg %p215
        %p848 = scmp.lt.s32.totalorder %s44, 1
        %s849 = scalar_select %p848, %s44, 1
        %s850 = smul.addr %s849, 64
        %s851 = smul.addr %s850, 4
        %s852 = scalar_lea.vmem %s7, %s851
        %p853 = pneg %p244
        %p854 = pneg %p241
        %p855 = scmp.lt.s32.totalorder %s44, 1
        %s856 = scalar_select %p855, %s44, 1
        %s857 = scalar_lea.vmem %s8, %s856
        %p858 = pneg %p270
        %p859 = pneg %p267
        %p860 = scmp.lt.s32.totalorder %s44, 1
        %s861 = scalar_select %p860, %s44, 1
        %s862 = scalar_lea.vmem %s9, %s861
        %p863 = pneg %p296
        %p864 = pneg %p293
        %p865 = scmp.lt.s32.totalorder %s44, 1
        %s866 = scalar_select %p865, %s44, 1
        %s867 = scalar_lea.vmem %s10, %s866
        %p868 = pneg %p322
        %p869 = pneg %p319
        %p870 = scmp.lt.s32.totalorder %s44, 1
        %s871 = scalar_select %p870, %s44, 1
        %s872 = smul.addr %s871, 32
        %s873 = smul.addr %s872, 4
        %s874 = scalar_lea.vmem %s11, %s873
        %p875 = pneg %p348
        %p876 = pneg %p345
        %p877 = scmp.lt.s32.totalorder %s44, 1
        %s878 = scalar_select %p877, %s44, 1
        %s879 = smul.addr %s878, 2
        %s880 = scalar_lea.vmem %s12, %s879
        %p881 = pneg %p374
        %p882 = pneg %p371
        %p883 = scmp.lt.s32.totalorder %s44, 1
        %s884 = scalar_select %p883, %s44, 1
        %s885 = smul.addr %s884, 32
        %s886 = smul.addr %s885, 4
        %s887 = scalar_lea.vmem %s13, %s886
        %p888 = pneg %p400
        %p889 = pneg %p397
        %p890 = scmp.lt.s32.totalorder %s44, 1
        %s891 = scalar_select %p890, %s44, 1
        %s892 = scalar_lea.vmem %s14, %s891
        %p893 = pneg %p426
        %p894 = pneg %p423
        %p895 = pneg %p447
        %p896 = pneg %p444
        %p897 = pneg %p468
        %p898 = pneg %p465
        %p899 = pneg %p489
        %p900 = pneg %p486
        %p901 = pneg %p510
        %p902 = pneg %p507
        %p903 = pneg %p531
        %p904 = pneg %p528
        %p905 = pneg %p552
        %p906 = pneg %p549
        %p907 = pneg %p573
        %p908 = pneg %p570
        %p909 = pneg %p594
        %p910 = pneg %p591
        %p911 = pneg %p615
        %p912 = pneg %p612
        %p913 = pneg %p636
        %p914 = pneg %p633
        %p915 = pneg %p662
        %p916 = pneg %p659
        %s917 = sand.u32 %s649, 1
        %s918 = scalar_lea.sflag [#allocation4], %s917
        %s919 = sand.u32 %s649, 1
        %s920 = scalar_lea.vmem [#allocation3], %s919
        %p921 = scmp.lt.s32.totalorder %s43, 1
        %s922 = scalar_select %p921, %s43, 1
        %s923 = smul.addr %s922, 6
        %s924 = smul.addr %s923, 8
        %s925 = scalar_lea.vmem %s0, %s924
        %p926 = scmp.lt.s32.totalorder %s44, 1
        %s927 = scalar_select %p926, %s44, 1
        %s928 = scalar_lea.vmem %s3, %s927
        %p929 = scmp.lt.s32.totalorder %s44, 1
        %s930 = scalar_select %p929, %s44, 1
        %s931 = scalar_lea.vmem %s4, %s930
        %p932 = scmp.lt.s32.totalorder %s44, 1
        %s933 = scalar_select %p932, %s44, 1
        %s934 = smul.addr %s933, 192
        %s935 = smul.addr %s934, 4
        %s936 = scalar_lea.vmem %s5, %s935
        %p937 = scmp.lt.s32.totalorder %s44, 1
        %s938 = scalar_select %p937, %s44, 1
        %s939 = smul.addr %s938, 12
        %s940 = scalar_lea.vmem %s6, %s939
        %p941 = scmp.lt.s32.totalorder %s44, 1
        %s942 = scalar_select %p941, %s44, 1
        %s943 = smul.addr %s942, 64
        %s944 = smul.addr %s943, 4
        %s945 = scalar_lea.vmem %s7, %s944
        %p946 = scmp.lt.s32.totalorder %s44, 1
        %s947 = scalar_select %p946, %s44, 1
        %s948 = scalar_lea.vmem %s8, %s947
        %p949 = scmp.lt.s32.totalorder %s44, 1
        %s950 = scalar_select %p949, %s44, 1
        %s951 = scalar_lea.vmem %s9, %s950
        %p952 = scmp.lt.s32.totalorder %s44, 1
        %s953 = scalar_select %p952, %s44, 1
        %s954 = scalar_lea.vmem %s10, %s953
        %p955 = scmp.lt.s32.totalorder %s44, 1
        %s956 = scalar_select %p955, %s44, 1
        %s957 = smul.addr %s956, 32
        %s958 = smul.addr %s957, 4
        %s959 = scalar_lea.vmem %s11, %s958
        %p960 = scmp.lt.s32.totalorder %s44, 1
        %s961 = scalar_select %p960, %s44, 1
        %s962 = smul.addr %s961, 2
        %s963 = scalar_lea.vmem %s12, %s962
        %p964 = scmp.lt.s32.totalorder %s44, 1
        %s965 = scalar_select %p964, %s44, 1
        %s966 = smul.addr %s965, 32
        %s967 = smul.addr %s966, 4
        %s968 = scalar_lea.vmem %s13, %s967
        %p969 = scmp.lt.s32.totalorder %s44, 1
        %s970 = scalar_select %p969, %s44, 1
        %s971 = scalar_lea.vmem %s14, %s970
        %p973 = scmp.eq.s32.totalorder %s44, 0
        // Predicated region
        $region121: #{vit_forward.1} parent=119 // pred_check
          %p974 = pneg %p973
        $region122: #{vit_forward.1} parent=119 // pred_check_branch
          %976 = sbr.rel (%p974) target = $region124
        $region123: #{vit_forward.1} parent=119 // pred_region
          %v977 = vld [vmem:[%s925] sm:$0xff]
          %v978 = vld [vmem:[%s925 + $0x8] sm:$0xff]
          %v979 = vld [vmem:[%s925 + $0x10] sm:$0xff]
          %v980 = vld [vmem:[%s925 + $0x18] sm:$0xff]
          %v981 = vld [vmem:[%s925 + $0x20] sm:$0xff]
          %v982 = vld [vmem:[%s925 + $0x28] sm:$0xff]
          %v983 = vld [vmem:[%s1] sm:$0xf]
          %v984 = vld [vmem:[%s1 + $0x4] sm:$0xf]
          %v985 = vld [vmem:[%s1 + $0x8] sm:$0xf]
          %v986 = vld [vmem:[%s1 + $0xc] sm:$0xf]
          %v987 = vld [vmem:[%s1 + $0x10] sm:$0xf]
          %v988 = vld [vmem:[%s1 + $0x14] sm:$0xf]
          %v989 = vld [vmem:[%s1 + $0x18] sm:$0xf]
          %v990 = vld [vmem:[%s1 + $0x1c] sm:$0xf]
          %v991 = vld [vmem:[%s1 + $0x20] sm:$0xf]
          %v992 = vld [vmem:[%s1 + $0x24] sm:$0xf]
          %v993 = vld [vmem:[%s1 + $0x28] sm:$0xf]
          %v994 = vld [vmem:[%s1 + $0x2c] sm:$0xf]
          %v995 = vld [vmem:[%s1 + $0x30] sm:$0xf]
          %v996 = vld [vmem:[%s1 + $0x34] sm:$0xf]
          %v997 = vld [vmem:[%s1 + $0x38] sm:$0xf]
          %v998 = vld [vmem:[%s1 + $0x3c] sm:$0xf]
          %v999 = vld [vmem:[%s1 + $0x40] sm:$0xf]
          %v1000 = vld [vmem:[%s1 + $0x44] sm:$0xf]
          %v1001 = vld [vmem:[%s1 + $0x48] sm:$0xf]
          %v1002 = vld [vmem:[%s1 + $0x4c] sm:$0xf]
          %v1003 = vld [vmem:[%s1 + $0x50] sm:$0xf]
          %v1004 = vld [vmem:[%s1 + $0x54] sm:$0xf]
          %v1005 = vld [vmem:[%s1 + $0x58] sm:$0xf]
          %v1006 = vld [vmem:[%s1 + $0x5c] sm:$0xf]
          %v1007 = vld [vmem:[%s1 + $0x60] sm:$0xf]
          %v1008 = vld [vmem:[%s1 + $0x64] sm:$0xf]
          %v1009 = vld [vmem:[%s1 + $0x68] sm:$0xf]
          %v1010 = vld [vmem:[%s1 + $0x6c] sm:$0xf]
          %v1011 = vld [vmem:[%s1 + $0x70] sm:$0xf]
          %v1012 = vld [vmem:[%s1 + $0x74] sm:$0xf]
          %v1013 = vld [vmem:[%s1 + $0x78] sm:$0xf]
          %v1014 = vld [vmem:[%s1 + $0x7c] sm:$0xf]
          %v1015 = vpack.c.bf16 %v979, %v977
          %v1016 = vpack.c.bf16 %v980, %v978
          %v1017 = vpack.c.bf16 %v981, %v981
          %v1018 = vpack.c.bf16 %v982, %v982
          %v1019 = vld [vmem:[%s2] sm:$0xff]
          %v1020 = vld [vmem:[%s2 + $0x8] sm:$0xff]
          %v1021 = vld [vmem:[%s2 + $0x10] sm:$0xff]
          %v1054 = vunpack.c.l.b16 %v983
          %v1055 = vunpack.c.l.b16 %v984
          %v1056 = vunpack.c.l.b16 %v985
          %v1057 = vunpack.c.l.b16 %v986
          %v1058 = vunpack.c.l.b16 %v987
          %v1059 = vunpack.c.l.b16 %v988
          %v1060 = vunpack.c.l.b16 %v989
          %v1061 = vunpack.c.l.b16 %v990
          %v1062 = vunpack.c.l.b16 %v991
          %v1063 = vunpack.c.l.b16 %v992
          %v1064 = vunpack.c.l.b16 %v993
          %v1065 = vunpack.c.l.b16 %v994
          %v1066 = vunpack.c.l.b16 %v995
          %v1067 = vunpack.c.l.b16 %v996
          %v1068 = vunpack.c.l.b16 %v997
          %v1069 = vunpack.c.l.b16 %v998
          %v1070 = vunpack.c.l.b16 %v999
          %v1071 = vunpack.c.l.b16 %v1000
          %v1072 = vunpack.c.l.b16 %v1001
          %v1073 = vunpack.c.l.b16 %v1002
          %v1074 = vunpack.c.l.b16 %v1003
          %v1075 = vunpack.c.l.b16 %v1004
          %v1076 = vunpack.c.l.b16 %v1005
          %v1077 = vunpack.c.l.b16 %v1006
          %v1078 = vunpack.c.l.b16 %v1007
          %v1079 = vunpack.c.l.b16 %v1008
          %v1080 = vunpack.c.l.b16 %v1009
          %v1081 = vunpack.c.l.b16 %v1010
          %v1082 = vunpack.c.l.b16 %v1011
          %v1083 = vunpack.c.l.b16 %v1012
          %v1084 = vunpack.c.l.b16 %v1013
          %v1085 = vunpack.c.l.b16 %v1014
          %v1086 = vpack.c.b16 %v1055, %v1054
          %v1087 = vpack.c.b16 %v1057, %v1056
          %v1088 = vpack.c.b16 %v1059, %v1058
          %v1089 = vpack.c.b16 %v1061, %v1060
          %v1090 = vpack.c.b16 %v1063, %v1062
          %v1091 = vpack.c.b16 %v1065, %v1064
          %v1092 = vpack.c.b16 %v1067, %v1066
          %v1093 = vpack.c.b16 %v1069, %v1068
          %v1094 = vpack.c.b16 %v1071, %v1070
          %v1095 = vpack.c.b16 %v1073, %v1072
          %v1096 = vpack.c.b16 %v1075, %v1074
          %v1097 = vpack.c.b16 %v1077, %v1076
          %v1098 = vpack.c.b16 %v1079, %v1078
          %v1099 = vpack.c.b16 %v1081, %v1080
          %v1100 = vpack.c.b16 %v1083, %v1082
          %v1101 = vpack.c.b16 %v1085, %v1084
          %1118 = vmatprep.subr.bf16.mxu0 0
          %1119 = vmatpush1.bf16.msra.mxu0 %v1086
          %1120 = vmatprep.subr.bf16.mxu0 0
          %1121 = vmatpush1.bf16.msra.mxu0 %v1087
          %1122 = vmatprep.subr.bf16.mxu0 0
          %1123 = vmatpush1.bf16.msra.mxu0 %v1088
          %1124 = vmatprep.subr.bf16.mxu0 0
          %1125 = vmatpush1.bf16.msra.mxu0 %v1089
          %1126 = vmatprep.subr.bf16.mxu0 0
          %1127 = vmatpush1.bf16.msra.mxu0 %v1090
          %1128 = vmatprep.subr.bf16.mxu0 0
          %1129 = vmatpush1.bf16.msra.mxu0 %v1091
          %1130 = vmatprep.subr.bf16.mxu0 0
          %1131 = vmatpush1.bf16.msra.mxu0 %v1092
          %1132 = vmatprep.subr.bf16.mxu0 0
          %1133 = vmatpush1.bf16.msra.mxu0 %v1093
          %1134 = vmatprep.subr.bf16.mxu0 0
          %1135 = vmatpush1.bf16.msra.mxu0 %v1094
          %1136 = vmatprep.subr.bf16.mxu0 0
          %1137 = vmatpush1.bf16.msra.mxu0 %v1095
          %1138 = vmatprep.subr.bf16.mxu0 0
          %1139 = vmatpush1.bf16.msra.mxu0 %v1096
          %1140 = vmatprep.subr.bf16.mxu0 0
          %1141 = vmatpush1.bf16.msra.mxu0 %v1097
          %1142 = vmatprep.subr.bf16.mxu0 0
          %1143 = vmatpush1.bf16.msra.mxu0 %v1098
          %1144 = vmatprep.subr.bf16.mxu0 0
          %1145 = vmatpush1.bf16.msra.mxu0 %v1099
          %1146 = vmatprep.subr.bf16.mxu0 0
          %1147 = vmatpush1.bf16.msra.mxu0 %v1100
          %1148 = vmatprep.subr.bf16.mxu0 0
          %1149 = vmatpush1.bf16.msra.mxu0 %v1101
          %1150 = vmatprep.mubr.bf16.mxu0 %v1016
          %1151 = vmatmul.mubr.bf16.gmra.mrb[0].mxu0 %v1015
          %v1152 = vpop.f32.mrb[0].mxu0
          %v1153 = vadd.f32 %v1019, %v1152
          %v1154 = vpop.f32.mrb[0].mxu0
          %v1155 = vpop.f32.mrb[0].mxu0
          %v1156 = vadd.f32 %v1020, %v1155
          %v1157 = vpop.f32.mrb[0].mxu0
          %1158 = vmatprep.mubr.bf16.mxu0 %v1018
          %1159 = vmatmul.mubr.bf16.gmra.mrb[0].mxu0 %v1017
          %v1160 = vpop.f32.mrb[0].mxu0
          %v1161 = vadd.f32 %v1021, %v1160
          %v1162 = vpop.f32.mrb[0].mxu0
          %v1163 = vpop.f32.mrb[0].mxu0
          %v1164 = vpop.f32.mrb[0].mxu0
          %1165 = vdwg.mxu0
          %1166 = vst [vmem:[#allocation2] sm:$0xff] %v1153
          %1167 = vst [vmem:[#allocation2 + $0x8] sm:$0xff] %v1156
          %1168 = vst [vmem:[#allocation2 + $0x10] sm:$0xff] %v1161
        $region124: #{vit_forward.1} parent=119 // pred_fallthru
          _
        %v1169 = vld [vmem:[#allocation2] sm:$0xff]
        %v1170 = vld [vmem:[#allocation2 + $0x8] sm:$0xff]
        %v1171 = vld [vmem:[#allocation2 + $0x10] sm:$0xff]
        %v1172 = vlaneseq
        %v1173 = vand.u32 %v1172, 127
        %vm1174 = vcmp.lt.s32.totalorder %v1173, 17
        %v1175 = vlaneseq
        %v1176 = vshrl.u32 %v1175, 7
        %v1177 = vadd.s32 %v1176, 8
        %v1178 = vadd.s32 %v1176, 16
        %vm1179 = vcmp.lt.s32.totalorder %v1176, 17
        %vm1180 = vcmp.lt.s32.totalorder %v1177, 17
        %vm1181 = vcmp.lt.s32.totalorder %v1178, 17
        %v1182 = vld [vmem:[%s928] sm:$0x1]
        %v1183 = vld [vmem:[%s931] sm:$0x1]
        %1184 = vadd.xlane.f32.xlu0 %v1169
        %v1185 = vpop.xlane.xlu0 %1184
        %1186 = vadd.xlane.f32.xlu0 %v1170
        %v1187 = vpop.xlane.xlu0 %1186
        %1188 = vadd.xlane.f32.xlu0 %v1171
        %v1189 = vpop.xlane.xlu0 %1188
        %v1190 = vmul.f32 %v1185, 0.015625
        %v1191 = vmul.f32 %v1187, 0.015625
        %v1192 = vmul.f32 %v1189, 0.015625
        %v1193 = vmul.f32 %v1169, %v1169
        %v1194 = vmul.f32 %v1170, %v1170
        %v1195 = vmul.f32 %v1171, %v1171
        %1196 = vadd.xlane.f32.xlu0 %v1193
        %v1197 = vpop.xlane.xlu0 %1196
        %1198 = vadd.xlane.f32.xlu0 %v1194
        %v1199 = vpop.xlane.xlu0 %1198
        %1200 = vadd.xlane.f32.xlu0 %v1195
        %v1201 = vpop.xlane.xlu0 %1200
        %v1202 = vmul.f32 %v1197, 0.015625
        %v1203 = vmul.f32 %v1199, 0.015625
        %v1204 = vmul.f32 %v1201, 0.015625
        %v1205 = vmul.f32 %v1190, %v1190
        %v1206 = vmul.f32 %v1191, %v1191
        %v1207 = vmul.f32 %v1192, %v1192
        %v1208 = vsub.f32 %v1202, %v1205
        %v1209 = vsub.f32 %v1203, %v1206
        %v1210 = vsub.f32 %v1204, %v1207
        %v1211 = vsub.f32 %v1169, %v1190
        %v1212 = vsub.f32 %v1170, %v1191
        %v1213 = vsub.f32 %v1171, %v1192
        %v1214 = vadd.f32 %v1208, 1e-06
        %v1215 = vadd.f32 %v1209, 1e-06
        %v1216 = vadd.f32 %v1210, 1e-06
        %v1217 = vrsqrt.pop %v1214
        %v1218 = vrsqrt.pop %v1215
        %v1219 = vrsqrt.pop %v1216
        %v1220 = vmul.f32 %v1211, %v1217
        %v1221 = vmul.f32 %v1212, %v1218
        %v1222 = vmul.f32 %v1213, %v1219
        %v1224 = vlaneseq
        %v1225 = vshrl.u32 %v1224, 7
        %v1226 = vsub.s32 0, %v1225
        %v1227 = vrot.slane %v1182, %v1226
        %v1229 = vmul.f32 %v1220, %v1227
        %v1230 = vmul.f32 %v1221, %v1227
        %v1231 = vmul.f32 %v1222, %v1227
        %v1233 = vlaneseq
        %v1234 = vshrl.u32 %v1233, 7
        %v1235 = vsub.s32 0, %v1234
        %v1236 = vrot.slane %v1183, %v1235
        %v1238 = vadd.f32 %v1229, %v1236
        %v1239 = vadd.f32 %v1230, %v1236
        %v1240 = vadd.f32 %v1231, %v1236
        %v1241 = vld [vmem:[%s936] sm:$0xff]
        %v1242 = vld [vmem:[%s936 + $0x8] sm:$0xff]
        %v1243 = vld [vmem:[%s936 + $0x10] sm:$0xff]
        %v1244 = vld [vmem:[%s936 + $0x18] sm:$0xff]
        %v1245 = vld [vmem:[%s936 + $0x20] sm:$0xff]
        %v1246 = vld [vmem:[%s936 + $0x28] sm:$0xff]
        %v1247 = vld [vmem:[%s936 + $0x30] sm:$0xff]
        %v1248 = vld [vmem:[%s936 + $0x38] sm:$0xff]
        %v1249 = vld [vmem:[%s936 + $0x40] sm:$0xff]
        %v1250 = vld [vmem:[%s936 + $0x48] sm:$0xff]
        %v1251 = vld [vmem:[%s936 + $0x50] sm:$0xff]
        %v1252 = vld [vmem:[%s936 + $0x58] sm:$0xff]
        %v1253 = vld [vmem:[%s936 + $0x60] sm:$0xff]
        %v1254 = vld [vmem:[%s936 + $0x68] sm:$0xff]
        %v1255 = vld [vmem:[%s936 + $0x70] sm:$0xff]
        %v1256 = vld [vmem:[%s936 + $0x78] sm:$0xff]
        %v1257 = vld [vmem:[%s936 + $0x80] sm:$0xff]
        %v1258 = vld [vmem:[%s936 + $0x88] sm:$0xff]
        %v1259 = vld [vmem:[%s936 + $0x90] sm:$0xff]
        %v1260 = vld [vmem:[%s936 + $0x98] sm:$0xff]
        %v1261 = vld [vmem:[%s936 + $0xa0] sm:$0xff]
        %v1262 = vld [vmem:[%s936 + $0xa8] sm:$0xff]
        %v1263 = vld [vmem:[%s936 + $0xb0] sm:$0xff]
        %v1264 = vld [vmem:[%s936 + $0xb8] sm:$0xff]
        %v1265 = vld [vmem:[%s936 + $0xc0] sm:$0xff]
        %v1266 = vld [vmem:[%s936 + $0xc8] sm:$0xff]
        %v1267 = vld [vmem:[%s936 + $0xd0] sm:$0xff]
        %v1268 = vld [vmem:[%s936 + $0xd8] sm:$0xff]
        %v1269 = vld [vmem:[%s936 + $0xe0] sm:$0xff]
        %v1270 = vld [vmem:[%s936 + $0xe8] sm:$0xff]
        %v1271 = vld [vmem:[%s936 + $0xf0] sm:$0xff]
        %v1272 = vld [vmem:[%s936 + $0xf8] sm:$0xff]
        %v1273 = vld [vmem:[%s936 + $0x100] sm:$0xff]
        %v1274 = vld [vmem:[%s936 + $0x108] sm:$0xff]
        %v1275 = vld [vmem:[%s936 + $0x110] sm:$0xff]
        %v1276 = vld [vmem:[%s936 + $0x118] sm:$0xff]
        %v1277 = vld [vmem:[%s936 + $0x120] sm:$0xff]
        %v1278 = vld [vmem:[%s936 + $0x128] sm:$0xff]
        %v1279 = vld [vmem:[%s936 + $0x130] sm:$0xff]
        %v1280 = vld [vmem:[%s936 + $0x138] sm:$0xff]
        %v1281 = vld [vmem:[%s936 + $0x140] sm:$0xff]
        %v1282 = vld [vmem:[%s936 + $0x148] sm:$0xff]
        %v1283 = vld [vmem:[%s936 + $0x150] sm:$0xff]
        %v1284 = vld [vmem:[%s936 + $0x158] sm:$0xff]
        %v1285 = vld [vmem:[%s936 + $0x160] sm:$0xff]
        %v1286 = vld [vmem:[%s936 + $0x168] sm:$0xff]
        %v1287 = vld [vmem:[%s936 + $0x170] sm:$0xff]
        %v1288 = vld [vmem:[%s936 + $0x178] sm:$0xff]
        %v1289 = vld [vmem:[%s936 + $0x180] sm:$0xff]
        %v1290 = vld [vmem:[%s936 + $0x188] sm:$0xff]
        %v1291 = vld [vmem:[%s936 + $0x190] sm:$0xff]
        %v1292 = vld [vmem:[%s936 + $0x198] sm:$0xff]
        %v1293 = vld [vmem:[%s936 + $0x1a0] sm:$0xff]
        %v1294 = vld [vmem:[%s936 + $0x1a8] sm:$0xff]
        %v1295 = vld [vmem:[%s936 + $0x1b0] sm:$0xff]
        %v1296 = vld [vmem:[%s936 + $0x1b8] sm:$0xff]
        %v1297 = vld [vmem:[%s936 + $0x1c0] sm:$0xff]
        %v1298 = vld [vmem:[%s936 + $0x1c8] sm:$0xff]
        %v1299 = vld [vmem:[%s936 + $0x1d0] sm:$0xff]
        %v1300 = vld [vmem:[%s936 + $0x1d8] sm:$0xff]
        %v1301 = vld [vmem:[%s936 + $0x1e0] sm:$0xff]
        %v1302 = vld [vmem:[%s936 + $0x1e8] sm:$0xff]
        %v1303 = vld [vmem:[%s936 + $0x1f0] sm:$0xff]
        %v1304 = vld [vmem:[%s936 + $0x1f8] sm:$0xff]
        %v1305 = vld [vmem:[%s936 + $0x200] sm:$0xff]
        %v1306 = vld [vmem:[%s936 + $0x208] sm:$0xff]
        %v1307 = vld [vmem:[%s936 + $0x210] sm:$0xff]
        %v1308 = vld [vmem:[%s936 + $0x218] sm:$0xff]
        %v1309 = vld [vmem:[%s936 + $0x220] sm:$0xff]
        %v1310 = vld [vmem:[%s936 + $0x228] sm:$0xff]
        %v1311 = vld [vmem:[%s936 + $0x230] sm:$0xff]
        %v1312 = vld [vmem:[%s936 + $0x238] sm:$0xff]
        %v1313 = vld [vmem:[%s936 + $0x240] sm:$0xff]
        %v1314 = vld [vmem:[%s936 + $0x248] sm:$0xff]
        %v1315 = vld [vmem:[%s936 + $0x250] sm:$0xff]
        %v1316 = vld [vmem:[%s936 + $0x258] sm:$0xff]
        %v1317 = vld [vmem:[%s936 + $0x260] sm:$0xff]
        %v1318 = vld [vmem:[%s936 + $0x268] sm:$0xff]
        %v1319 = vld [vmem:[%s936 + $0x270] sm:$0xff]
        %v1320 = vld [vmem:[%s936 + $0x278] sm:$0xff]
        %v1321 = vld [vmem:[%s936 + $0x280] sm:$0xff]
        %v1322 = vld [vmem:[%s936 + $0x288] sm:$0xff]
        %v1323 = vld [vmem:[%s936 + $0x290] sm:$0xff]
        %v1324 = vld [vmem:[%s936 + $0x298] sm:$0xff]
        %v1325 = vld [vmem:[%s936 + $0x2a0] sm:$0xff]
        %v1326 = vld [vmem:[%s936 + $0x2a8] sm:$0xff]
        %v1327 = vld [vmem:[%s936 + $0x2b0] sm:$0xff]
        %v1328 = vld [vmem:[%s936 + $0x2b8] sm:$0xff]
        %v1329 = vld [vmem:[%s936 + $0x2c0] sm:$0xff]
        %v1330 = vld [vmem:[%s936 + $0x2c8] sm:$0xff]
        %v1331 = vld [vmem:[%s936 + $0x2d0] sm:$0xff]
        %v1332 = vld [vmem:[%s936 + $0x2d8] sm:$0xff]
        %v1333 = vld [vmem:[%s936 + $0x2e0] sm:$0xff]
        %v1334 = vld [vmem:[%s936 + $0x2e8] sm:$0xff]
        %v1335 = vld [vmem:[%s936 + $0x2f0] sm:$0xff]
        %v1336 = vld [vmem:[%s936 + $0x2f8] sm:$0xff]
        %v1337 = vpack.c.bf16 %v1239, %v1238
        %v1338 = vpack.c.bf16 %v1240, %v1240
        %v1339 = vld [vmem:[%s940] sm:$0xff]
        %v1340 = vld [vmem:[%s940 + $0x8] sm:$0xf]
        %v1343 = vlaneseq
        %v1344 = vshrl.u32 %v1343, 7
        %v1345 = vsub.s32 0, %v1344
        %v1346 = vrot.slane %v1339, %v1345
        %v1347 = vlaneseq
        %v1348 = vshrl.u32 %v1347, 7
        %v1349 = vsub.s32 1, %v1348
        %v1350 = vrot.slane %v1339, %v1349
        %v1351 = vlaneseq
        %v1352 = vshrl.u32 %v1351, 7
        %v1353 = vsub.s32 2, %v1352
        %v1354 = vrot.slane %v1339, %v1353
        %v1355 = vlaneseq
        %v1356 = vshrl.u32 %v1355, 7
        %v1357 = vsub.s32 3, %v1356
        %v1358 = vrot.slane %v1339, %v1357
        %v1359 = vlaneseq
        %v1360 = vshrl.u32 %v1359, 7
        %v1361 = vsub.s32 4, %v1360
        %v1362 = vrot.slane %v1339, %v1361
        %v1363 = vlaneseq
        %v1364 = vshrl.u32 %v1363, 7
        %v1365 = vsub.s32 5, %v1364
        %v1366 = vrot.slane %v1339, %v1365
        %v1367 = vlaneseq
        %v1368 = vshrl.u32 %v1367, 7
        %v1369 = vsub.s32 6, %v1368
        %v1370 = vrot.slane %v1339, %v1369
        %v1371 = vlaneseq
        %v1372 = vshrl.u32 %v1371, 7
        %v1373 = vsub.s32 7, %v1372
        %v1374 = vrot.slane %v1339, %v1373
        %v1375 = vlaneseq
        %v1376 = vshrl.u32 %v1375, 7
        %v1377 = vsub.s32 0, %v1376
        %v1378 = vrot.slane %v1340, %v1377
        %v1379 = vlaneseq
        %v1380 = vshrl.u32 %v1379, 7
        %v1381 = vsub.s32 1, %v1380
        %v1382 = vrot.slane %v1340, %v1381
        %v1383 = vlaneseq
        %v1384 = vshrl.u32 %v1383, 7
        %v1385 = vsub.s32 2, %v1384
        %v1386 = vrot.slane %v1340, %v1385
        %v1387 = vlaneseq
        %v1388 = vshrl.u32 %v1387, 7
        %v1389 = vsub.s32 3, %v1388
        %v1390 = vrot.slane %v1340, %v1389
        %v1499 = vunpack.c.l.b16 %v1241
        %v1500 = vunpack.c.h.b16 %v1241
        %v1501 = vunpack.c.l.b16 %v1242
        %v1502 = vunpack.c.h.b16 %v1242
        %v1503 = vunpack.c.l.b16 %v1243
        %v1504 = vunpack.c.h.b16 %v1243
        %v1505 = vunpack.c.l.b16 %v1244
        %v1506 = vunpack.c.h.b16 %v1244
        %v1507 = vunpack.c.l.b16 %v1245
        %v1508 = vunpack.c.h.b16 %v1245
        %v1509 = vunpack.c.l.b16 %v1246
        %v1510 = vunpack.c.h.b16 %v1246
        %v1511 = vunpack.c.l.b16 %v1247
        %v1512 = vunpack.c.h.b16 %v1247
        %v1513 = vunpack.c.l.b16 %v1248
        %v1514 = vunpack.c.h.b16 %v1248
        %v1515 = vunpack.c.l.b16 %v1249
        %v1516 = vunpack.c.h.b16 %v1249
        %v1517 = vunpack.c.l.b16 %v1250
        %v1518 = vunpack.c.h.b16 %v1250
        %v1519 = vunpack.c.l.b16 %v1251
        %v1520 = vunpack.c.h.b16 %v1251
        %v1521 = vunpack.c.l.b16 %v1252
        %v1522 = vunpack.c.h.b16 %v1252
        %v1523 = vunpack.c.l.b16 %v1253
        %v1524 = vunpack.c.h.b16 %v1253
        %v1525 = vunpack.c.l.b16 %v1254
        %v1526 = vunpack.c.h.b16 %v1254
        %v1527 = vunpack.c.l.b16 %v1255
        %v1528 = vunpack.c.h.b16 %v1255
        %v1529 = vunpack.c.l.b16 %v1256
        %v1530 = vunpack.c.h.b16 %v1256
        %v1531 = vunpack.c.l.b16 %v1257
        %v1532 = vunpack.c.h.b16 %v1257
        %v1533 = vunpack.c.l.b16 %v1258
        %v1534 = vunpack.c.h.b16 %v1258
        %v1535 = vunpack.c.l.b16 %v1259
        %v1536 = vunpack.c.h.b16 %v1259
        %v1537 = vunpack.c.l.b16 %v1260
        %v1538 = vunpack.c.h.b16 %v1260
        %v1539 = vunpack.c.l.b16 %v1261
        %v1540 = vunpack.c.h.b16 %v1261
        %v1541 = vunpack.c.l.b16 %v1262
        %v1542 = vunpack.c.h.b16 %v1262
        %v1543 = vunpack.c.l.b16 %v1263
        %v1544 = vunpack.c.h.b16 %v1263
        %v1545 = vunpack.c.l.b16 %v1264
        %v1546 = vunpack.c.h.b16 %v1264
        %v1547 = vunpack.c.l.b16 %v1265
        %v1548 = vunpack.c.h.b16 %v1265
        %v1549 = vunpack.c.l.b16 %v1266
        %v1550 = vunpack.c.h.b16 %v1266
        %v1551 = vunpack.c.l.b16 %v1267
        %v1552 = vunpack.c.h.b16 %v1267
        %v1553 = vunpack.c.l.b16 %v1268
        %v1554 = vunpack.c.h.b16 %v1268
        %v1555 = vunpack.c.l.b16 %v1269
        %v1556 = vunpack.c.h.b16 %v1269
        %v1557 = vunpack.c.l.b16 %v1270
        %v1558 = vunpack.c.h.b16 %v1270
        %v1559 = vunpack.c.l.b16 %v1271
        %v1560 = vunpack.c.h.b16 %v1271
        %v1561 = vunpack.c.l.b16 %v1272
        %v1562 = vunpack.c.h.b16 %v1272
        %v1563 = vunpack.c.l.b16 %v1273
        %v1564 = vunpack.c.h.b16 %v1273
        %v1565 = vunpack.c.l.b16 %v1274
        %v1566 = vunpack.c.h.b16 %v1274
        %v1567 = vunpack.c.l.b16 %v1275
        %v1568 = vunpack.c.h.b16 %v1275
        %v1569 = vunpack.c.l.b16 %v1276
        %v1570 = vunpack.c.h.b16 %v1276
        %v1571 = vunpack.c.l.b16 %v1277
        %v1572 = vunpack.c.h.b16 %v1277
        %v1573 = vunpack.c.l.b16 %v1278
        %v1574 = vunpack.c.h.b16 %v1278
        %v1575 = vunpack.c.l.b16 %v1279
        %v1576 = vunpack.c.h.b16 %v1279
        %v1577 = vunpack.c.l.b16 %v1280
        %v1578 = vunpack.c.h.b16 %v1280
        %v1579 = vunpack.c.l.b16 %v1281
        %v1580 = vunpack.c.h.b16 %v1281
        %v1581 = vunpack.c.l.b16 %v1282
        %v1582 = vunpack.c.h.b16 %v1282
        %v1583 = vunpack.c.l.b16 %v1283
        %v1584 = vunpack.c.h.b16 %v1283
        %v1585 = vunpack.c.l.b16 %v1284
        %v1586 = vunpack.c.h.b16 %v1284
        %v1587 = vunpack.c.l.b16 %v1285
        %v1588 = vunpack.c.h.b16 %v1285
        %v1589 = vunpack.c.l.b16 %v1286
        %v1590 = vunpack.c.h.b16 %v1286
        %v1591 = vunpack.c.l.b16 %v1287
        %v1592 = vunpack.c.h.b16 %v1287
        %v1593 = vunpack.c.l.b16 %v1288
        %v1594 = vunpack.c.h.b16 %v1288
        %v1595 = vunpack.c.l.b16 %v1289
        %v1596 = vunpack.c.h.b16 %v1289
        %v1597 = vunpack.c.l.b16 %v1290
        %v1598 = vunpack.c.h.b16 %v1290
        %v1599 = vunpack.c.l.b16 %v1291
        %v1600 = vunpack.c.h.b16 %v1291
        %v1601 = vunpack.c.l.b16 %v1292
        %v1602 = vunpack.c.h.b16 %v1292
        %v1603 = vunpack.c.l.b16 %v1293
        %v1604 = vunpack.c.h.b16 %v1293
        %v1605 = vunpack.c.l.b16 %v1294
        %v1606 = vunpack.c.h.b16 %v1294
        %v1607 = vunpack.c.l.b16 %v1295
        %v1608 = vunpack.c.h.b16 %v1295
        %v1609 = vunpack.c.l.b16 %v1296
        %v1610 = vunpack.c.h.b16 %v1296
        %v1611 = vunpack.c.l.b16 %v1297
        %v1612 = vunpack.c.h.b16 %v1297
        %v1613 = vunpack.c.l.b16 %v1298
        %v1614 = vunpack.c.h.b16 %v1298
        %v1615 = vunpack.c.l.b16 %v1299
        %v1616 = vunpack.c.h.b16 %v1299
        %v1617 = vunpack.c.l.b16 %v1300
        %v1618 = vunpack.c.h.b16 %v1300
        %v1619 = vunpack.c.l.b16 %v1301
        %v1620 = vunpack.c.h.b16 %v1301
        %v1621 = vunpack.c.l.b16 %v1302
        %v1622 = vunpack.c.h.b16 %v1302
        %v1623 = vunpack.c.l.b16 %v1303
        %v1624 = vunpack.c.h.b16 %v1303
        %v1625 = vunpack.c.l.b16 %v1304
        %v1626 = vunpack.c.h.b16 %v1304
        %v1627 = vunpack.c.l.b16 %v1305
        %v1628 = vunpack.c.h.b16 %v1305
        %v1629 = vunpack.c.l.b16 %v1306
        %v1630 = vunpack.c.h.b16 %v1306
        %v1631 = vunpack.c.l.b16 %v1307
        %v1632 = vunpack.c.h.b16 %v1307
        %v1633 = vunpack.c.l.b16 %v1308
        %v1634 = vunpack.c.h.b16 %v1308
        %v1635 = vunpack.c.l.b16 %v1309
        %v1636 = vunpack.c.h.b16 %v1309
        %v1637 = vunpack.c.l.b16 %v1310
        %v1638 = vunpack.c.h.b16 %v1310
        %v1639 = vunpack.c.l.b16 %v1311
        %v1640 = vunpack.c.h.b16 %v1311
        %v1641 = vunpack.c.l.b16 %v1312
        %v1642 = vunpack.c.h.b16 %v1312
        %v1643 = vunpack.c.l.b16 %v1313
        %v1644 = vunpack.c.h.b16 %v1313
        %v1645 = vunpack.c.l.b16 %v1314
        %v1646 = vunpack.c.h.b16 %v1314
        %v1647 = vunpack.c.l.b16 %v1315
        %v1648 = vunpack.c.h.b16 %v1315
        %v1649 = vunpack.c.l.b16 %v1316
        %v1650 = vunpack.c.h.b16 %v1316
        %v1651 = vunpack.c.l.b16 %v1317
        %v1652 = vunpack.c.h.b16 %v1317
        %v1653 = vunpack.c.l.b16 %v1318
        %v1654 = vunpack.c.h.b16 %v1318
        %v1655 = vunpack.c.l.b16 %v1319
        %v1656 = vunpack.c.h.b16 %v1319
        %v1657 = vunpack.c.l.b16 %v1320
        %v1658 = vunpack.c.h.b16 %v1320
        %v1659 = vunpack.c.l.b16 %v1321
        %v1660 = vunpack.c.h.b16 %v1321
        %v1661 = vunpack.c.l.b16 %v1322
        %v1662 = vunpack.c.h.b16 %v1322
        %v1663 = vunpack.c.l.b16 %v1323
        %v1664 = vunpack.c.h.b16 %v1323
        %v1665 = vunpack.c.l.b16 %v1324
        %v1666 = vunpack.c.h.b16 %v1324
        %v1667 = vunpack.c.l.b16 %v1325
        %v1668 = vunpack.c.h.b16 %v1325
        %v1669 = vunpack.c.l.b16 %v1326
        %v1670 = vunpack.c.h.b16 %v1326
        %v1671 = vunpack.c.l.b16 %v1327
        %v1672 = vunpack.c.h.b16 %v1327
        %v1673 = vunpack.c.l.b16 %v1328
        %v1674 = vunpack.c.h.b16 %v1328
        %v1675 = vunpack.c.l.b16 %v1329
        %v1676 = vunpack.c.h.b16 %v1329
        %v1677 = vunpack.c.l.b16 %v1330
        %v1678 = vunpack.c.h.b16 %v1330
        %v1679 = vunpack.c.l.b16 %v1331
        %v1680 = vunpack.c.h.b16 %v1331
        %v1681 = vunpack.c.l.b16 %v1332
        %v1682 = vunpack.c.h.b16 %v1332
        %v1683 = vunpack.c.l.b16 %v1333
        %v1684 = vunpack.c.h.b16 %v1333
        %v1685 = vunpack.c.l.b16 %v1334
        %v1686 = vunpack.c.h.b16 %v1334
        %v1687 = vunpack.c.l.b16 %v1335
        %v1688 = vunpack.c.h.b16 %v1335
        %v1689 = vunpack.c.l.b16 %v1336
        %v1690 = vunpack.c.h.b16 %v1336
        %v1691 = vpack.c.b16 %v1511, %v1499
        %v1692 = vpack.c.b16 %v1512, %v1500
        %v1693 = vpack.c.b16 %v1513, %v1501
        %v1694 = vpack.c.b16 %v1514, %v1502
        %v1695 = vpack.c.b16 %v1515, %v1503
        %v1696 = vpack.c.b16 %v1516, %v1504
        %v1697 = vpack.c.b16 %v1517, %v1505
        %v1698 = vpack.c.b16 %v1518, %v1506
        %v1699 = vpack.c.b16 %v1519, %v1507
        %v1700 = vpack.c.b16 %v1520, %v1508
        %v1701 = vpack.c.b16 %v1521, %v1509
        %v1702 = vpack.c.b16 %v1522, %v1510
        %v1703 = vpack.c.b16 %v1535, %v1523
        %v1704 = vpack.c.b16 %v1536, %v1524
        %v1705 = vpack.c.b16 %v1537, %v1525
        %v1706 = vpack.c.b16 %v1538, %v1526
        %v1707 = vpack.c.b16 %v1539, %v1527
        %v1708 = vpack.c.b16 %v1540, %v1528
        %v1709 = vpack.c.b16 %v1541, %v1529
        %v1710 = vpack.c.b16 %v1542, %v1530
        %v1711 = vpack.c.b16 %v1543, %v1531
        %v1712 = vpack.c.b16 %v1544, %v1532
        %v1713 = vpack.c.b16 %v1545, %v1533
        %v1714 = vpack.c.b16 %v1546, %v1534
        %v1715 = vpack.c.b16 %v1559, %v1547
        %v1716 = vpack.c.b16 %v1560, %v1548
        %v1717 = vpack.c.b16 %v1561, %v1549
        %v1718 = vpack.c.b16 %v1562, %v1550
        %v1719 = vpack.c.b16 %v1563, %v1551
        %v1720 = vpack.c.b16 %v1564, %v1552
        %v1721 = vpack.c.b16 %v1565, %v1553
        %v1722 = vpack.c.b16 %v1566, %v1554
        %v1723 = vpack.c.b16 %v1567, %v1555
        %v1724 = vpack.c.b16 %v1568, %v1556
        %v1725 = vpack.c.b16 %v1569, %v1557
        %v1726 = vpack.c.b16 %v1570, %v1558
        %v1727 = vpack.c.b16 %v1583, %v1571
        %v1728 = vpack.c.b16 %v1584, %v1572
        %v1729 = vpack.c.b16 %v1585, %v1573
        %v1730 = vpack.c.b16 %v1586, %v1574
        %v1731 = vpack.c.b16 %v1587, %v1575
        %v1732 = vpack.c.b16 %v1588, %v1576
        %v1733 = vpack.c.b16 %v1589, %v1577
        %v1734 = vpack.c.b16 %v1590, %v1578
        %v1735 = vpack.c.b16 %v1591, %v1579
        %v1736 = vpack.c.b16 %v1592, %v1580
        %v1737 = vpack.c.b16 %v1593, %v1581
        %v1738 = vpack.c.b16 %v1594, %v1582
        %v1739 = vpack.c.b16 %v1607, %v1595
        %v1740 = vpack.c.b16 %v1608, %v1596
        %v1741 = vpack.c.b16 %v1609, %v1597
        %v1742 = vpack.c.b16 %v1610, %v1598
        %v1743 = vpack.c.b16 %v1611, %v1599
        %v1744 = vpack.c.b16 %v1612, %v1600
        %v1745 = vpack.c.b16 %v1613, %v1601
        %v1746 = vpack.c.b16 %v1614, %v1602
        %v1747 = vpack.c.b16 %v1615, %v1603
        %v1748 = vpack.c.b16 %v1616, %v1604
        %v1749 = vpack.c.b16 %v1617, %v1605
        %v1750 = vpack.c.b16 %v1618, %v1606
        %v1751 = vpack.c.b16 %v1631, %v1619
        %v1752 = vpack.c.b16 %v1632, %v1620
        %v1753 = vpack.c.b16 %v1633, %v1621
        %v1754 = vpack.c.b16 %v1634, %v1622
        %v1755 = vpack.c.b16 %v1635, %v1623
        %v1756 = vpack.c.b16 %v1636, %v1624
        %v1757 = vpack.c.b16 %v1637, %v1625
        %v1758 = vpack.c.b16 %v1638, %v1626
        %v1759 = vpack.c.b16 %v1639, %v1627
        %v1760 = vpack.c.b16 %v1640, %v1628
        %v1761 = vpack.c.b16 %v1641, %v1629
        %v1762 = vpack.c.b16 %v1642, %v1630
        %v1763 = vpack.c.b16 %v1655, %v1643
        %v1764 = vpack.c.b16 %v1656, %v1644
        %v1765 = vpack.c.b16 %v1657, %v1645
        %v1766 = vpack.c.b16 %v1658, %v1646
        %v1767 = vpack.c.b16 %v1659, %v1647
        %v1768 = vpack.c.b16 %v1660, %v1648
        %v1769 = vpack.c.b16 %v1661, %v1649
        %v1770 = vpack.c.b16 %v1662, %v1650
        %v1771 = vpack.c.b16 %v1663, %v1651
        %v1772 = vpack.c.b16 %v1664, %v1652
        %v1773 = vpack.c.b16 %v1665, %v1653
        %v1774 = vpack.c.b16 %v1666, %v1654
        %v1775 = vpack.c.b16 %v1679, %v1667
        %v1776 = vpack.c.b16 %v1680, %v1668
        %v1777 = vpack.c.b16 %v1681, %v1669
        %v1778 = vpack.c.b16 %v1682, %v1670
        %v1779 = vpack.c.b16 %v1683, %v1671
        %v1780 = vpack.c.b16 %v1684, %v1672
        %v1781 = vpack.c.b16 %v1685, %v1673
        %v1782 = vpack.c.b16 %v1686, %v1674
        %v1783 = vpack.c.b16 %v1687, %v1675
        %v1784 = vpack.c.b16 %v1688, %v1676
        %v1785 = vpack.c.b16 %v1689, %v1677
        %v1786 = vpack.c.b16 %v1690, %v1678
        %1883 = vmatprep.subr.bf16.mxu0 %v1692
        %1884 = vmatpush1.bf16.msra.mxu0 %v1691
        %1885 = vmatprep.subr.bf16.mxu0 %v1704
        %1886 = vmatpush1.bf16.msra.mxu0 %v1703
        %1887 = vmatprep.subr.bf16.mxu0 %v1716
        %1888 = vmatpush1.bf16.msra.mxu0 %v1715
        %1889 = vmatprep.subr.bf16.mxu0 %v1728
        %1890 = vmatpush1.bf16.msra.mxu0 %v1727
        %1891 = vmatprep.subr.bf16.mxu0 %v1740
        %1892 = vmatpush1.bf16.msra.mxu0 %v1739
        %1893 = vmatprep.subr.bf16.mxu0 %v1752
        %1894 = vmatpush1.bf16.msra.mxu0 %v1751
        %1895 = vmatprep.subr.bf16.mxu0 %v1764
        %1896 = vmatpush1.bf16.msra.mxu0 %v1763
        %1897 = vmatprep.subr.bf16.mxu0 %v1776
        %1898 = vmatpush1.bf16.msra.mxu0 %v1775
        %1899 = vmatprep.subr.bf16.mxu0 0
        %1900 = vmatpush1.bf16.msra.mxu0 0
        %1901 = vmatprep.subr.bf16.mxu0 0
        %1902 = vmatpush1.bf16.msra.mxu0 0
        %1903 = vmatprep.subr.bf16.mxu0 0
        %1904 = vmatpush1.bf16.msra.mxu0 0
        %1905 = vmatprep.subr.bf16.mxu0 0
        %1906 = vmatpush1.bf16.msra.mxu0 0
        %1907 = vmatprep.subr.bf16.mxu0 0
        %1908 = vmatpush1.bf16.msra.mxu0 0
        %1909 = vmatprep.subr.bf16.mxu0 0
        %1910 = vmatpush1.bf16.msra.mxu0 0
        %1911 = vmatprep.subr.bf16.mxu0 0
        %1912 = vmatpush1.bf16.msra.mxu0 0
        %1913 = vmatprep.subr.bf16.mxu0 0
        %1914 = vmatpush1.bf16.msra.mxu0 0
        %1915 = vmatprep.mubr.bf16.mxu0 0
        %1916 = vmatmul.mubr.bf16.gmra.mrb[0].mxu0 %v1337
        %v1917 = vpop.f32.mrb[0].mxu0
        %v1918 = vadd.f32 %v1346, %v1917
        %v1919 = vpop.f32.mrb[0].mxu0
        %v1920 = vadd.f32 %v1350, %v1919
        %v1921 = vpop.f32.mrb[0].mxu0
        %v1922 = vadd.f32 %v1346, %v1921
        %v1923 = vpop.f32.mrb[0].mxu0
        %v1924 = vadd.f32 %v1350, %v1923
        %1925 = vmatprep.mubr.bf16.mxu0 0
        %1926 = vmatmul.mubr.bf16.gmra.mrb[0].mxu0 %v1338
        %v1927 = vpop.f32.mrb[0].mxu0
        %v1928 = vadd.f32 %v1346, %v1927
        %v1929 = vpop.f32.mrb[0].mxu0
        %v1930 = vadd.f32 %v1350, %v1929
        %v1931 = vpop.f32.mrb[0].mxu0
        %v1932 = vpop.f32.mrb[0].mxu0
        %1933 = vdwg.mxu0
        %1934 = vmatprep.subr.bf16.mxu0 %v1694
        %1935 = vmatpush1.bf16.msra.mxu0 %v1693
        %1936 = vmatprep.subr.bf16.mxu0 %v1706
        %1937 = vmatpush1.bf16.msra.mxu0 %v1705
        %1938 = vmatprep.subr.bf16.mxu0 %v1718
        %1939 = vmatpush1.bf16.msra.mxu0 %v1717
        %1940 = vmatprep.subr.bf16.mxu0 %v1730
        %1941 = vmatpush1.bf16.msra.mxu0 %v1729
        %1942 = vmatprep.subr.bf16.mxu0 %v1742
        %1943 = vmatpush1.bf16.msra.mxu0 %v1741
        %1944 = vmatprep.subr.bf16.mxu0 %v1754
        %1945 = vmatpush1.bf16.msra.mxu0 %v1753
        %1946 = vmatprep.subr.bf16.mxu0 %v1766
        %1947 = vmatpush1.bf16.msra.mxu0 %v1765
        %1948 = vmatprep.subr.bf16.mxu0 %v1778
        %1949 = vmatpush1.bf16.msra.mxu0 %v1777
        %1950 = vmatprep.subr.bf16.mxu0 0
        %1951 = vmatpush1.bf16.msra.mxu0 0
        %1952 = vmatprep.subr.bf16.mxu0 0
        %1953 = vmatpush1.bf16.msra.mxu0 0
        %1954 = vmatprep.subr.bf16.mxu0 0
        %1955 = vmatpush1.bf16.msra.mxu0 0
        %1956 = vmatprep.subr.bf16.mxu0 0
        %1957 = vmatpush1.bf16.msra.mxu0 0
        %1958 = vmatprep.subr.bf16.mxu0 0
        %1959 = vmatpush1.bf16.msra.mxu0 0
        %1960 = vmatprep.subr.bf16.mxu0 0
        %1961 = vmatpush1.bf16.msra.mxu0 0
        %1962 = vmatprep.subr.bf16.mxu0 0
        %1963 = vmatpush1.bf16.msra.mxu0 0
        %1964 = vmatprep.subr.bf16.mxu0 0
        %1965 = vmatpush1.bf16.msra.mxu0 0
        %1966 = vmatprep.mubr.bf16.mxu0 0
        %1967 = vmatmul.mubr.bf16.gmra.mrb[0].mxu0 %v1337
        %v1968 = vpop.f32.mrb[0].mxu0
        %v1969 = vadd.f32 %v1354, %v1968
        %v1970 = vpop.f32.mrb[0].mxu0
        %v1971 = vadd.f32 %v1358, %v1970
        %v1972 = vpop.f32.mrb[0].mxu0
        %v1973 = vadd.f32 %v1354, %v1972
        %v1974 = vpop.f32.mrb[0].mxu0
        %v1975 = vadd.f32 %v1358, %v1974
        %1976 = vmatprep.mubr.bf16.mxu0 0
        %1977 = vmatmul.mubr.bf16.gmra.mrb[0].mxu0 %v1338
        %v1978 = vpop.f32.mrb[0].mxu0
        %v1979 = vadd.f32 %v1354, %v1978
        %v1980 = vpop.f32.mrb[0].mxu0
        %v1981 = vadd.f32 %v1358, %v1980
        %v1982 = vpop.f32.mrb[0].mxu0
        %v1983 = vpop.f32.mrb[0].mxu0
        %1984 = vdwg.mxu0
        %1985 = vmatprep.subr.bf16.mxu0 %v1696
        %1986 = vmatpush1.bf16.msra.mxu0 %v1695
        %1987 = vmatprep.subr.bf16.mxu0 %v1708
        %1988 = vmatpush1.bf16.msra.mxu0 %v1707
        %1989 = vmatprep.subr.bf16.mxu0 %v1720
        %1990 = vmatpush1.bf16.msra.mxu0 %v1719
        %1991 = vmatprep.subr.bf16.mxu0 %v1732
        %1992 = vmatpush1.bf16.msra.mxu0 %v1731
        %1993 = vmatprep.subr.bf16.mxu0 %v1744
        %1994 = vmatpush1.bf16.msra.mxu0 %v1743
        %1995 = vmatprep.subr.bf16.mxu0 %v1756
        %1996 = vmatpush1.bf16.msra.mxu0 %v1755
        %1997 = vmatprep.subr.bf16.mxu0 %v1768
        %1998 = vmatpush1.bf16.msra.mxu0 %v1767
        %1999 = vmatprep.subr.bf16.mxu0 %v1780
        %2000 = vmatpush1.bf16.msra.mxu0 %v1779
        %2001 = vmatprep.subr.bf16.mxu0 0
        %2002 = vmatpush1.bf16.msra.mxu0 0
        %2003 = vmatprep.subr.bf16.mxu0 0
        %2004 = vmatpush1.bf16.msra.mxu0 0
        %2005 = vmatprep.subr.bf16.mxu0 0
        %2006 = vmatpush1.bf16.msra.mxu0 0
        %2007 = vmatprep.subr.bf16.mxu0 0
        %2008 = vmatpush1.bf16.msra.mxu0 0
        %2009 = vmatprep.subr.bf16.mxu0 0
        %2010 = vmatpush1.bf16.msra.mxu0 0
        %2011 = vmatprep.subr.bf16.mxu0 0
        %2012 = vmatpush1.bf16.msra.mxu0 0
        %2013 = vmatprep.subr.bf16.mxu0 0
        %2014 = vmatpush1.bf16.msra.mxu0 0
        %2015 = vmatprep.subr.bf16.mxu0 0
        %2016 = vmatpush1.bf16.msra.mxu0 0
        %2017 = vmatprep.mubr.bf16.mxu0 0
        %2018 = vmatmul.mubr.bf16.gmra.mrb[0].mxu0 %v1337
        %v2019 = vpop.f32.mrb[0].mxu0
        %v2020 = vadd.f32 %v1362, %v2019
        %v2021 = vpop.f32.mrb[0].mxu0
        %v2022 = vadd.f32 %v1366, %v2021
        %v2023 = vpop.f32.mrb[0].mxu0
        %v2024 = vadd.f32 %v1362, %v2023
        %v2025 = vpop.f32.mrb[0].mxu0
        %v2026 = vadd.f32 %v1366, %v2025
        %2027 = vmatprep.mubr.bf16.mxu0 0
        %2028 = vmatmul.mubr.bf16.gmra.mrb[0].mxu0 %v1338
        %v2029 = vpop.f32.mrb[0].mxu0
        %v2030 = vadd.f32 %v1362, %v2029
        %v2031 = vpop.f32.mrb[0].mxu0
        %v2032 = vadd.f32 %v1366, %v2031
        %v2033 = vpop.f32.mrb[0].mxu0
        %v2034 = vpop.f32.mrb[0].mxu0
        %2035 = vdwg.mxu0
        %2036 = vmatprep.subr.bf16.mxu0 %v1698
        %2037 = vmatpush1.bf16.msra.mxu0 %v1697
        %2038 = vmatprep.subr.bf16.mxu0 %v1710
        %2039 = vmatpush1.bf16.msra.mxu0 %v1709
        %2040 = vmatprep.subr.bf16.mxu0 %v1722
        %2041 = vmatpush1.bf16.msra.mxu0 %v1721
        %2042 = vmatprep.subr.bf16.mxu0 %v1734
        %2043 = vmatpush1.bf16.msra.mxu0 %v1733
        %2044 = vmatprep.subr.bf16.mxu0 %v1746
        %2045 = vmatpush1.bf16.msra.mxu0 %v1745
        %2046 = vmatprep.subr.bf16.mxu0 %v1758
        %2047 = vmatpush1.bf16.msra.mxu0 %v1757
        %2048 = vmatprep.subr.bf16.mxu0 %v1770
        %2049 = vmatpush1.bf16.msra.mxu0 %v1769
        %2050 = vmatprep.subr.bf16.mxu0 %v1782
        %2051 = vmatpush1.bf16.msra.mxu0 %v1781
        %2052 = vmatprep.subr.bf16.mxu0 0
        %2053 = vmatpush1.bf16.msra.mxu0 0
        %2054 = vmatprep.subr.bf16.mxu0 0
        %2055 = vmatpush1.bf16.msra.mxu0 0
        %2056 = vmatprep.subr.bf16.mxu0 0
        %2057 = vmatpush1.bf16.msra.mxu0 0
        %2058 = vmatprep.subr.bf16.mxu0 0
        %2059 = vmatpush1.bf16.msra.mxu0 0
        %2060 = vmatprep.subr.bf16.mxu0 0
        %2061 = vmatpush1.bf16.msra.mxu0 0
        %2062 = vmatprep.subr.bf16.mxu0 0
        %2063 = vmatpush1.bf16.msra.mxu0 0
        %2064 = vmatprep.subr.bf16.mxu0 0
        %2065 = vmatpush1.bf16.msra.mxu0 0
        %2066 = vmatprep.subr.bf16.mxu0 0
        %2067 = vmatpush1.bf16.msra.mxu0 0
        %2068 = vmatprep.mubr.bf16.mxu0 0
        %2069 = vmatmul.mubr.bf16.gmra.mrb[0].mxu0 %v1337
        %v2070 = vpop.f32.mrb[0].mxu0
        %v2071 = vadd.f32 %v1370, %v2070
        %v2072 = vpop.f32.mrb[0].mxu0
        %v2073 = vadd.f32 %v1374, %v2072
        %v2074 = vpop.f32.mrb[0].mxu0
        %v2075 = vadd.f32 %v1370, %v2074
        %v2076 = vpop.f32.mrb[0].mxu0
        %v2077 = vadd.f32 %v1374, %v2076
        %2078 = vmatprep.mubr.bf16.mxu0 0
        %2079 = vmatmul.mubr.bf16.gmra.mrb[0].mxu0 %v1338
        %v2080 = vpop.f32.mrb[0].mxu0
        %v2081 = vadd.f32 %v1370, %v2080
        %v2082 = vpop.f32.mrb[0].mxu0
        %v2083 = vadd.f32 %v1374, %v2082
        %v2084 = vpop.f32.mrb[0].mxu0
        %v2085 = vpop.f32.mrb[0].mxu0
        %2086 = vdwg.mxu0
        %2087 = vmatprep.subr.bf16.mxu0 %v1700
        %2088 = vmatpush1.bf16.msra.mxu0 %v1699
        %2089 = vmatprep.subr.bf16.mxu0 %v1712
        %2090 = vmatpush1.bf16.msra.mxu0 %v1711
        %2091 = vmatprep.subr.bf16.mxu0 %v1724
        %2092 = vmatpush1.bf16.msra.mxu0 %v1723
        %2093 = vmatprep.subr.bf16.mxu0 %v1736
        %2094 = vmatpush1.bf16.msra.mxu0 %v1735
        %2095 = vmatprep.subr.bf16.mxu0 %v1748
        %2096 = vmatpush1.bf16.msra.mxu0 %v1747
        %2097 = vmatprep.subr.bf16.mxu0 %v1760
        %2098 = vmatpush1.bf16.msra.mxu0 %v1759
        %2099 = vmatprep.subr.bf16.mxu0 %v1772
        %2100 = vmatpush1.bf16.msra.mxu0 %v1771
        %2101 = vmatprep.subr.bf16.mxu0 %v1784
        %2102 = vmatpush1.bf16.msra.mxu0 %v1783
        %2103 = vmatprep.subr.bf16.mxu0 0
        %2104 = vmatpush1.bf16.msra.mxu0 0
        %2105 = vmatprep.subr.bf16.mxu0 0
        %2106 = vmatpush1.bf16.msra.mxu0 0
        %2107 = vmatprep.subr.bf16.mxu0 0
        %2108 = vmatpush1.bf16.msra.mxu0 0
        %2109 = vmatprep.subr.bf16.mxu0 0
        %2110 = vmatpush1.bf16.msra.mxu0 0
        %2111 = vmatprep.subr.bf16.mxu0 0
        %2112 = vmatpush1.bf16.msra.mxu0 0
        %2113 = vmatprep.subr.bf16.mxu0 0
        %2114 = vmatpush1.bf16.msra.mxu0 0
        %2115 = vmatprep.subr.bf16.mxu0 0
        %2116 = vmatpush1.bf16.msra.mxu0 0
        %2117 = vmatprep.subr.bf16.mxu0 0
        %2118 = vmatpush1.bf16.msra.mxu0 0
        %2119 = vmatprep.mubr.bf16.mxu0 0
        %2120 = vmatmul.mubr.bf16.gmra.mrb[0].mxu0 %v1337
        %v2121 = vpop.f32.mrb[0].mxu0
        %v2122 = vadd.f32 %v1378, %v2121
        %v2123 = vpop.f32.mrb[0].mxu0
        %v2124 = vadd.f32 %v1382, %v2123
        %v2125 = vpop.f32.mrb[0].mxu0
        %v2126 = vadd.f32 %v1378, %v2125
        %v2127 = vpop.f32.mrb[0].mxu0
        %v2128 = vadd.f32 %v1382, %v2127
        %2129 = vmatprep.mubr.bf16.mxu0 0
        %2130 = vmatmul.mubr.bf16.gmra.mrb[0].mxu0 %v1338
        %v2131 = vpop.f32.mrb[0].mxu0
        %v2132 = vadd.f32 %v1378, %v2131
        %v2133 = vpop.f32.mrb[0].mxu0
        %v2134 = vadd.f32 %v1382, %v2133
        %v2135 = vpop.f32.mrb[0].mxu0
        %v2136 = vpop.f32.mrb[0].mxu0
        %2137 = vdwg.mxu0
        %2138 = vmatprep.subr.bf16.mxu0 %v1702
        %2139 = vmatpush1.bf16.msra.mxu0 %v1701
        %2140 = vmatprep.subr.bf16.mxu0 %v1714
        %2141 = vmatpush1.bf16.msra.mxu0 %v1713
        %2142 = vmatprep.subr.bf16.mxu0 %v1726
        %2143 = vmatpush1.bf16.msra.mxu0 %v1725
        %2144 = vmatprep.subr.bf16.mxu0 %v1738
        %2145 = vmatpush1.bf16.msra.mxu0 %v1737
        %2146 = vmatprep.subr.bf16.mxu0 %v1750
        %2147 = vmatpush1.bf16.msra.mxu0 %v1749
        %2148 = vmatprep.subr.bf16.mxu0 %v1762
        %2149 = vmatpush1.bf16.msra.mxu0 %v1761
        %2150 = vmatprep.subr.bf16.mxu0 %v1774
        %2151 = vmatpush1.bf16.msra.mxu0 %v1773
        %2152 = vmatprep.subr.bf16.mxu0 %v1786
        %2153 = vmatpush1.bf16.msra.mxu0 %v1785
        %2154 = vmatprep.subr.bf16.mxu0 0
        %2155 = vmatpush1.bf16.msra.mxu0 0
        %2156 = vmatprep.subr.bf16.mxu0 0
        %2157 = vmatpush1.bf16.msra.mxu0 0
        %2158 = vmatprep.subr.bf16.mxu0 0
        %2159 = vmatpush1.bf16.msra.mxu0 0
        %2160 = vmatprep.subr.bf16.mxu0 0
        %2161 = vmatpush1.bf16.msra.mxu0 0
        %2162 = vmatprep.subr.bf16.mxu0 0
        %2163 = vmatpush1.bf16.msra.mxu0 0
        %2164 = vmatprep.subr.bf16.mxu0 0
        %2165 = vmatpush1.bf16.msra.mxu0 0
        %2166 = vmatprep.subr.bf16.mxu0 0
        %2167 = vmatpush1.bf16.msra.mxu0 0
        %2168 = vmatprep.subr.bf16.mxu0 0
        %2169 = vmatpush1.bf16.msra.mxu0 0
        %2170 = vmatprep.mubr.bf16.mxu0 0
        %2171 = vmatmul.mubr.bf16.gmra.mrb[0].mxu0 %v1337
        %v2172 = vpop.f32.mrb[0].mxu0
        %v2173 = vadd.f32 %v1386, %v2172
        %v2174 = vpop.f32.mrb[0].mxu0
        %v2175 = vadd.f32 %v1390, %v2174
        %v2176 = vpop.f32.mrb[0].mxu0
        %v2177 = vadd.f32 %v1386, %v2176
        %v2178 = vpop.f32.mrb[0].mxu0
        %v2179 = vadd.f32 %v1390, %v2178
        %2180 = vmatprep.mubr.bf16.mxu0 0
        %2181 = vmatmul.mubr.bf16.gmra.mrb[0].mxu0 %v1338
        %v2182 = vpop.f32.mrb[0].mxu0
        %v2183 = vadd.f32 %v1386, %v2182
        %v2184 = vpop.f32.mrb[0].mxu0
        %v2185 = vadd.f32 %v1390, %v2184
        %v2186 = vpop.f32.mrb[0].mxu0
        %v2187 = vpop.f32.mrb[0].mxu0
        %2188 = vdwg.mxu0
        %v2189 = vpack.c.bf16 %v1922, %v1918
        %v2190 = vpack.c.bf16 %v1928, %v1928
        %v2191 = vpack.c.bf16 %v2024, %v2020
        %v2192 = vpack.c.bf16 %v2030, %v2030
        %v2193 = vpack.c.bf16 %v2126, %v2122
        %v2194 = vpack.c.bf16 %v2132, %v2132
        %2195 = vmatprep.subr.bf16.mxu0 0
        %2196 = vmatpush1.bf16.xpose.msra.mxu0 %v2191
        %2197 = vmatprep.subr.bf16.mxu0 0
        %2198 = vmatpush1.bf16.xpose.msra.mxu0 %v2192
        %2199 = vmatprep.subr.bf16.mxu0 0
        %2200 = vmatpush1.bf16.xpose.msra.mxu0 0
        %2201 = vmatprep.subr.bf16.mxu0 0
        %2202 = vmatpush1.bf16.xpose.msra.mxu0 0
        %2203 = vmatprep.subr.bf16.mxu0 0
        %2204 = vmatpush1.bf16.xpose.msra.mxu0 0
        %2205 = vmatprep.subr.bf16.mxu0 0
        %2206 = vmatpush1.bf16.xpose.msra.mxu0 0
        %2207 = vmatprep.subr.bf16.mxu0 0
        %2208 = vmatpush1.bf16.xpose.msra.mxu0 0
        %2209 = vmatprep.subr.bf16.mxu0 0
        %2210 = vmatpush1.bf16.xpose.msra.mxu0 0
        %2211 = vmatprep.subr.bf16.mxu0 0
        %2212 = vmatpush1.bf16.xpose.msra.mxu0 0
        %2213 = vmatprep.subr.bf16.mxu0 0
        %2214 = vmatpush1.bf16.xpose.msra.mxu0 0
        %2215 = vmatprep.subr.bf16.mxu0 0
        %2216 = vmatpush1.bf16.xpose.msra.mxu0 0
        %2217 = vmatprep.subr.bf16.mxu0 0
        %2218 = vmatpush1.bf16.xpose.msra.mxu0 0
        %2219 = vmatprep.subr.bf16.mxu0 0
        %2220 = vmatpush1.bf16.xpose.msra.mxu0 0
        %2221 = vmatprep.subr.bf16.mxu0 0
        %2222 = vmatpush1.bf16.xpose.msra.mxu0 0
        %2223 = vmatprep.subr.bf16.mxu0 0
        %2224 = vmatpush1.bf16.xpose.msra.mxu0 0
        %2225 = vmatprep.subr.bf16.mxu0 0
        %2226 = vmatpush1.bf16.xpose.msra.mxu0 0
        %2227 = vmatprep.mubr.bf16.mxu0 0
        %2228 = vmatmul.mubr.bf16.gmra.mrb[0].mxu0 %v2189
        %v2229 = vpop.f32.mrb[0].mxu0
        %v2230 = vadd.f32 0.0, %v2229
        %v2231 = vpop.f32.mrb[0].mxu0
        %v2232 = vpop.f32.mrb[0].mxu0
        %v2233 = vadd.f32 0.0, %v2232
        %v2234 = vpop.f32.mrb[0].mxu0
        %2235 = vmatprep.mubr.bf16.mxu0 0
        %2236 = vmatmul.mubr.bf16.gmra.mrb[0].mxu0 %v2190
        %v2237 = vpop.f32.mrb[0].mxu0
        %v2238 = vadd.f32 0.0, %v2237
        %v2239 = vpop.f32.mrb[0].mxu0
        %v2240 = vpop.f32.mrb[0].mxu0
        %v2241 = vpop.f32.mrb[0].mxu0
        %2242 = vdwg.mxu0
        %v2243 = vsel %vm1174, 1, 0
        %vm2244 = vcmp.eq.s32.totalorder %v2243, 1
        %v2245 = vsel %vm2244, %v2230, -1e+30
        %v2246 = vsel %vm2244, %v2233, -1e+30
        %v2247 = vsel %vm2244, %v2238, -1e+30
        %vm2248 = vcmask 195584
        %v2249 = vsel %vm2248, %v2245, -inf
        %2250 = vmax.xlane.f32.xlu0 %v2249
        %v2251 = vpop.xlane.xlu0 %2250
        %v2252 = vsel %vm2248, %v2246, -inf
        %2253 = vmax.xlane.f32.xlu0 %v2252
        %v2254 = vpop.xlane.xlu0 %2253
        %v2255 = vsel %vm2248, %v2247, -inf
        %2256 = vmax.xlane.f32.xlu0 %v2255
        %v2257 = vpop.xlane.xlu0 %2256
        %v2258 = vsub.f32 %v2245, %v2251
        %v2259 = vsub.f32 %v2246, %v2254
        %v2260 = vsub.f32 %v2247, %v2257
        %v2261 = vmul.f32 %v2258, 1.442695
        %v2262 = vpow.pop %v2261
        %v2263 = vmul.f32 %v2259, 1.442695
        %v2264 = vpow.pop %v2263
        %v2265 = vmul.f32 %v2260, 1.442695
        %v2266 = vpow.pop %v2265
        %v2267 = vsel %vm2248, %v2262, 0.0
        %2268 = vadd.xlane.f32.xlu0 %v2267
        %v2269 = vpop.xlane.xlu0 %2268
        %v2270 = vsel %vm2248, %v2264, 0.0
        %2271 = vadd.xlane.f32.xlu0 %v2270
        %v2272 = vpop.xlane.xlu0 %2271
        %v2273 = vsel %vm2248, %v2266, 0.0
        %2274 = vadd.xlane.f32.xlu0 %v2273
        %v2275 = vpop.xlane.xlu0 %2274
        %v2276 = vrcp.pop %v2269
        %v2277 = vrcp.pop %v2272
        %v2278 = vrcp.pop %v2275
        %v2279 = vmul.f32 %v2262, %v2276
        %v2280 = vmul.f32 %v2264, %v2277
        %v2281 = vmul.f32 %v2266, %v2278
        %v2282 = vpack.c.bf16 %v2280, %v2279
        %v2283 = vpack.c.bf16 %v2281, %v2281
        %v2285 = vsel %vm2248, %v2282, 0
        %v2288 = vsel %vm2248, %v2283, 0
        %vm2290 = vcmask 1043456
        %v2292 = vsel %vm2290, %v2194, 0
        %2294 = vmatprep.subr.bf16.mxu0 0
        %2295 = vmatpush1.bf16.msra.mxu0 %v2193
        %2296 = vmatprep.subr.bf16.mxu0 0
        %2297 = vmatpush1.bf16.msra.mxu0 %v2292
        %2298 = vmatprep.subr.bf16.mxu0 0
        %2299 = vmatpush1.bf16.msra.mxu0 0
        %2300 = vmatprep.subr.bf16.mxu0 0
        %2301 = vmatpush1.bf16.msra.mxu0 0
        %2302 = vmatprep.subr.bf16.mxu0 0
        %2303 = vmatpush1.bf16.msra.mxu0 0
        %2304 = vmatprep.subr.bf16.mxu0 0
        %2305 = vmatpush1.bf16.msra.mxu0 0
        %2306 = vmatprep.subr.bf16.mxu0 0
        %2307 = vmatpush1.bf16.msra.mxu0 0
        %2308 = vmatprep.subr.bf16.mxu0 0
        %2309 = vmatpush1.bf16.msra.mxu0 0
        %2310 = vmatprep.subr.bf16.mxu0 0
        %2311 = vmatpush1.bf16.msra.mxu0 0
        %2312 = vmatprep.subr.bf16.mxu0 0
        %2313 = vmatpush1.bf16.msra.mxu0 0
        %2314 = vmatprep.subr.bf16.mxu0 0
        %2315 = vmatpush1.bf16.msra.mxu0 0
        %2316 = vmatprep.subr.bf16.mxu0 0
        %2317 = vmatpush1.bf16.msra.mxu0 0
        %2318 = vmatprep.subr.bf16.mxu0 0
        %2319 = vmatpush1.bf16.msra.mxu0 0
        %2320 = vmatprep.subr.bf16.mxu0 0
        %2321 = vmatpush1.bf16.msra.mxu0 0
        %2322 = vmatprep.subr.bf16.mxu0 0
        %2323 = vmatpush1.bf16.msra.mxu0 0
        %2324 = vmatprep.subr.bf16.mxu0 0
        %2325 = vmatpush1.bf16.msra.mxu0 0
        %2326 = vmatprep.mubr.bf16.mxu0 0
        %2327 = vmatmul.mubr.bf16.gmra.mrb[0].mxu0 %v2285
        %v2328 = vpop.f32.mrb[0].mxu0
        %v2329 = vadd.f32 0.0, %v2328
        %v2330 = vpop.f32.mrb[0].mxu0
        %v2331 = vpop.f32.mrb[0].mxu0
        %v2332 = vadd.f32 0.0, %v2331
        %v2333 = vpop.f32.mrb[0].mxu0
        %2334 = vmatprep.mubr.bf16.mxu0 0
        %2335 = vmatmul.mubr.bf16.gmra.mrb[0].mxu0 %v2288
        %v2336 = vpop.f32.mrb[0].mxu0
        %v2337 = vadd.f32 0.0, %v2336
        %v2338 = vpop.f32.mrb[0].mxu0
        %v2339 = vpop.f32.mrb[0].mxu0
        %v2340 = vpop.f32.mrb[0].mxu0
        %2341 = vdwg.mxu0
        %v2342 = vpack.c.bf16 %v1924, %v1920
        %v2343 = vpack.c.bf16 %v1930, %v1930
        %v2344 = vpack.c.bf16 %v2026, %v2022
        %v2345 = vpack.c.bf16 %v2032, %v2032
        %v2346 = vpack.c.bf16 %v2128, %v2124
        %v2347 = vpack.c.bf16 %v2134, %v2134
        %2348 = vmatprep.subr.bf16.mxu0 0
        %2349 = vmatpush1.bf16.xpose.msra.mxu0 %v2344
        %2350 = vmatprep.subr.bf16.mxu0 0
        %2351 = vmatpush1.bf16.xpose.msra.mxu0 %v2345
        %2352 = vmatprep.subr.bf16.mxu0 0
        %2353 = vmatpush1.bf16.xpose.msra.mxu0 0
        %2354 = vmatprep.subr.bf16.mxu0 0
        %2355 = vmatpush1.bf16.xpose.msra.mxu0 0
        %2356 = vmatprep.subr.bf16.mxu0 0
        %2357 = vmatpush1.bf16.xpose.msra.mxu0 0
        %2358 = vmatprep.subr.bf16.mxu0 0
        %2359 = vmatpush1.bf16.xpose.msra.mxu0 0
        %2360 = vmatprep.subr.bf16.mxu0 0
        %2361 = vmatpush1.bf16.xpose.msra.mxu0 0
        %2362 = vmatprep.subr.bf16.mxu0 0
        %2363 = vmatpush1.bf16.xpose.msra.mxu0 0
        %2364 = vmatprep.subr.bf16.mxu0 0
        %2365 = vmatpush1.bf16.xpose.msra.mxu0 0
        %2366 = vmatprep.subr.bf16.mxu0 0
        %2367 = vmatpush1.bf16.xpose.msra.mxu0 0
        %2368 = vmatprep.subr.bf16.mxu0 0
        %2369 = vmatpush1.bf16.xpose.msra.mxu0 0
        %2370 = vmatprep.subr.bf16.mxu0 0
        %2371 = vmatpush1.bf16.xpose.msra.mxu0 0
        %2372 = vmatprep.subr.bf16.mxu0 0
        %2373 = vmatpush1.bf16.xpose.msra.mxu0 0
        %2374 = vmatprep.subr.bf16.mxu0 0
        %2375 = vmatpush1.bf16.xpose.msra.mxu0 0
        %2376 = vmatprep.subr.bf16.mxu0 0
        %2377 = vmatpush1.bf16.xpose.msra.mxu0 0
        %2378 = vmatprep.subr.bf16.mxu0 0
        %2379 = vmatpush1.bf16.xpose.msra.mxu0 0
        %2380 = vmatprep.mubr.bf16.mxu0 0
        %2381 = vmatmul.mubr.bf16.gmra.mrb[0].mxu0 %v2342
        %v2382 = vpop.f32.mrb[0].mxu0
        %v2383 = vadd.f32 0.0, %v2382
        %v2384 = vpop.f32.mrb[0].mxu0
        %v2385 = vpop.f32.mrb[0].mxu0
        %v2386 = vadd.f32 0.0, %v2385
        %v2387 = vpop.f32.mrb[0].mxu0
        %2388 = vmatprep.mubr.bf16.mxu0 0
        %2389 = vmatmul.mubr.bf16.gmra.mrb[0].mxu0 %v2343
        %v2390 = vpop.f32.mrb[0].mxu0
        %v2391 = vadd.f32 0.0, %v2390
        %v2392 = vpop.f32.mrb[0].mxu0
        %v2393 = vpop.f32.mrb[0].mxu0
        %v2394 = vpop.f32.mrb[0].mxu0
        %2395 = vdwg.mxu0
        %v2396 = vsel %vm2244, %v2383, -1e+30
        %v2397 = vsel %vm2244, %v2386, -1e+30
        %v2398 = vsel %vm2244, %v2391, -1e+30
        %v2399 = vsel %vm2248, %v2396, -inf
        %2400 = vmax.xlane.f32.xlu0 %v2399
        %v2401 = vpop.xlane.xlu0 %2400
        %v2402 = vsel %vm2248, %v2397, -inf
        %2403 = vmax.xlane.f32.xlu0 %v2402
        %v2404 = vpop.xlane.xlu0 %2403
        %v2405 = vsel %vm2248, %v2398, -inf
        %2406 = vmax.xlane.f32.xlu0 %v2405
        %v2407 = vpop.xlane.xlu0 %2406
        %v2408 = vsub.f32 %v2396, %v2401
        %v2409 = vsub.f32 %v2397, %v2404
        %v2410 = vsub.f32 %v2398, %v2407
        %v2411 = vmul.f32 %v2408, 1.442695
        %v2412 = vpow.pop %v2411
        %v2413 = vmul.f32 %v2409, 1.442695
        %v2414 = vpow.pop %v2413
        %v2415 = vmul.f32 %v2410, 1.442695
        %v2416 = vpow.pop %v2415
        %v2417 = vsel %vm2248, %v2412, 0.0
        %2418 = vadd.xlane.f32.xlu0 %v2417
        %v2419 = vpop.xlane.xlu0 %2418
        %v2420 = vsel %vm2248, %v2414, 0.0
        %2421 = vadd.xlane.f32.xlu0 %v2420
        %v2422 = vpop.xlane.xlu0 %2421
        %v2423 = vsel %vm2248, %v2416, 0.0
        %2424 = vadd.xlane.f32.xlu0 %v2423
        %v2425 = vpop.xlane.xlu0 %2424
        %v2426 = vrcp.pop %v2419
        %v2427 = vrcp.pop %v2422
        %v2428 = vrcp.pop %v2425
        %v2429 = vmul.f32 %v2412, %v2426
        %v2430 = vmul.f32 %v2414, %v2427
        %v2431 = vmul.f32 %v2416, %v2428
        %v2432 = vpack.c.bf16 %v2430, %v2429
        %v2433 = vpack.c.bf16 %v2431, %v2431
        %v2435 = vsel %vm2248, %v2432, 0
        %v2438 = vsel %vm2248, %v2433, 0
        %v2441 = vsel %vm2290, %v2347, 0
        %2443 = vmatprep.subr.bf16.mxu0 0
        %2444 = vmatpush1.bf16.msra.mxu0 %v2346
        %2445 = vmatprep.subr.bf16.mxu0 0
        %2446 = vmatpush1.bf16.msra.mxu0 %v2441
        %2447 = vmatprep.subr.bf16.mxu0 0
        %2448 = vmatpush1.bf16.msra.mxu0 0
        %2449 = vmatprep.subr.bf16.mxu0 0
        %2450 = vmatpush1.bf16.msra.mxu0 0
        %2451 = vmatprep.subr.bf16.mxu0 0
        %2452 = vmatpush1.bf16.msra.mxu0 0
        %2453 = vmatprep.subr.bf16.mxu0 0
        %2454 = vmatpush1.bf16.msra.mxu0 0
        %2455 = vmatprep.subr.bf16.mxu0 0
        %2456 = vmatpush1.bf16.msra.mxu0 0
        %2457 = vmatprep.subr.bf16.mxu0 0
        %2458 = vmatpush1.bf16.msra.mxu0 0
        %2459 = vmatprep.subr.bf16.mxu0 0
        %2460 = vmatpush1.bf16.msra.mxu0 0
        %2461 = vmatprep.subr.bf16.mxu0 0
        %2462 = vmatpush1.bf16.msra.mxu0 0
        %2463 = vmatprep.subr.bf16.mxu0 0
        %2464 = vmatpush1.bf16.msra.mxu0 0
        %2465 = vmatprep.subr.bf16.mxu0 0
        %2466 = vmatpush1.bf16.msra.mxu0 0
        %2467 = vmatprep.subr.bf16.mxu0 0
        %2468 = vmatpush1.bf16.msra.mxu0 0
        %2469 = vmatprep.subr.bf16.mxu0 0
        %2470 = vmatpush1.bf16.msra.mxu0 0
        %2471 = vmatprep.subr.bf16.mxu0 0
        %2472 = vmatpush1.bf16.msra.mxu0 0
        %2473 = vmatprep.subr.bf16.mxu0 0
        %2474 = vmatpush1.bf16.msra.mxu0 0
        %2475 = vmatprep.mubr.bf16.mxu0 0
        %2476 = vmatmul.mubr.bf16.gmra.mrb[0].mxu0 %v2435
        %v2477 = vpop.f32.mrb[0].mxu0
        %v2478 = vadd.f32 0.0, %v2477
        %v2479 = vpop.f32.mrb[0].mxu0
        %v2480 = vpop.f32.mrb[0].mxu0
        %v2481 = vadd.f32 0.0, %v2480
        %v2482 = vpop.f32.mrb[0].mxu0
        %2483 = vmatprep.mubr.bf16.mxu0 0
        %2484 = vmatmul.mubr.bf16.gmra.mrb[0].mxu0 %v2438
        %v2485 = vpop.f32.mrb[0].mxu0
        %v2486 = vadd.f32 0.0, %v2485
        %v2487 = vpop.f32.mrb[0].mxu0
        %v2488 = vpop.f32.mrb[0].mxu0
        %v2489 = vpop.f32.mrb[0].mxu0
        %2490 = vdwg.mxu0
        %v2491 = vpack.c.bf16 %v1973, %v1969
        %v2492 = vpack.c.bf16 %v1979, %v1979
        %v2493 = vpack.c.bf16 %v2075, %v2071
        %v2494 = vpack.c.bf16 %v2081, %v2081
        %v2495 = vpack.c.bf16 %v2177, %v2173
        %v2496 = vpack.c.bf16 %v2183, %v2183
        %2497 = vmatprep.subr.bf16.mxu0 0
        %2498 = vmatpush1.bf16.xpose.msra.mxu0 %v2493
        %2499 = vmatprep.subr.bf16.mxu0 0
        %2500 = vmatpush1.bf16.xpose.msra.mxu0 %v2494
        %2501 = vmatprep.subr.bf16.mxu0 0
        %2502 = vmatpush1.bf16.xpose.msra.mxu0 0
        %2503 = vmatprep.subr.bf16.mxu0 0
        %2504 = vmatpush1.bf16.xpose.msra.mxu0 0
        %2505 = vmatprep.subr.bf16.mxu0 0
        %2506 = vmatpush1.bf16.xpose.msra.mxu0 0
        %2507 = vmatprep.subr.bf16.mxu0 0
        %2508 = vmatpush1.bf16.xpose.msra.mxu0 0
        %2509 = vmatprep.subr.bf16.mxu0 0
        %2510 = vmatpush1.bf16.xpose.msra.mxu0 0
        %2511 = vmatprep.subr.bf16.mxu0 0
        %2512 = vmatpush1.bf16.xpose.msra.mxu0 0
        %2513 = vmatprep.subr.bf16.mxu0 0
        %2514 = vmatpush1.bf16.xpose.msra.mxu0 0
        %2515 = vmatprep.subr.bf16.mxu0 0
        %2516 = vmatpush1.bf16.xpose.msra.mxu0 0
        %2517 = vmatprep.subr.bf16.mxu0 0
        %2518 = vmatpush1.bf16.xpose.msra.mxu0 0
        %2519 = vmatprep.subr.bf16.mxu0 0
        %2520 = vmatpush1.bf16.xpose.msra.mxu0 0
        %2521 = vmatprep.subr.bf16.mxu0 0
        %2522 = vmatpush1.bf16.xpose.msra.mxu0 0
        %2523 = vmatprep.subr.bf16.mxu0 0
        %2524 = vmatpush1.bf16.xpose.msra.mxu0 0
        %2525 = vmatprep.subr.bf16.mxu0 0
        %2526 = vmatpush1.bf16.xpose.msra.mxu0 0
        %2527 = vmatprep.subr.bf16.mxu0 0
        %2528 = vmatpush1.bf16.xpose.msra.mxu0 0
        %2529 = vmatprep.mubr.bf16.mxu0 0
        %2530 = vmatmul.mubr.bf16.gmra.mrb[0].mxu0 %v2491
        %v2531 = vpop.f32.mrb[0].mxu0
        %v2532 = vadd.f32 0.0, %v2531
        %v2533 = vpop.f32.mrb[0].mxu0
        %v2534 = vpop.f32.mrb[0].mxu0
        %v2535 = vadd.f32 0.0, %v2534
        %v2536 = vpop.f32.mrb[0].mxu0
        %2537 = vmatprep.mubr.bf16.mxu0 0
        %2538 = vmatmul.mubr.bf16.gmra.mrb[0].mxu0 %v2492
        %v2539 = vpop.f32.mrb[0].mxu0
        %v2540 = vadd.f32 0.0, %v2539
        %v2541 = vpop.f32.mrb[0].mxu0
        %v2542 = vpop.f32.mrb[0].mxu0
        %v2543 = vpop.f32.mrb[0].mxu0
        %2544 = vdwg.mxu0
        %v2545 = vsel %vm2244, %v2532, -1e+30
        %v2546 = vsel %vm2244, %v2535, -1e+30
        %v2547 = vsel %vm2244, %v2540, -1e+30
        %v2548 = vsel %vm2248, %v2545, -inf
        %2549 = vmax.xlane.f32.xlu0 %v2548
        %v2550 = vpop.xlane.xlu0 %2549
        %v2551 = vsel %vm2248, %v2546, -inf
        %2552 = vmax.xlane.f32.xlu0 %v2551
        %v2553 = vpop.xlane.xlu0 %2552
        %v2554 = vsel %vm2248, %v2547, -inf
        %2555 = vmax.xlane.f32.xlu0 %v2554
        %v2556 = vpop.xlane.xlu0 %2555
        %v2557 = vsub.f32 %v2545, %v2550
        %v2558 = vsub.f32 %v2546, %v2553
        %v2559 = vsub.f32 %v2547, %v2556
        %v2560 = vmul.f32 %v2557, 1.442695
        %v2561 = vpow.pop %v2560
        %v2562 = vmul.f32 %v2558, 1.442695
        %v2563 = vpow.pop %v2562
        %v2564 = vmul.f32 %v2559, 1.442695
        %v2565 = vpow.pop %v2564
        %v2566 = vsel %vm2248, %v2561, 0.0
        %2567 = vadd.xlane.f32.xlu0 %v2566
        %v2568 = vpop.xlane.xlu0 %2567
        %v2569 = vsel %vm2248, %v2563, 0.0
        %2570 = vadd.xlane.f32.xlu0 %v2569
        %v2571 = vpop.xlane.xlu0 %2570
        %v2572 = vsel %vm2248, %v2565, 0.0
        %2573 = vadd.xlane.f32.xlu0 %v2572
        %v2574 = vpop.xlane.xlu0 %2573
        %v2575 = vrcp.pop %v2568
        %v2576 = vrcp.pop %v2571
        %v2577 = vrcp.pop %v2574
        %v2578 = vmul.f32 %v2561, %v2575
        %v2579 = vmul.f32 %v2563, %v2576
        %v2580 = vmul.f32 %v2565, %v2577
        %v2581 = vpack.c.bf16 %v2579, %v2578
        %v2582 = vpack.c.bf16 %v2580, %v2580
        %v2584 = vsel %vm2248, %v2581, 0
        %v2587 = vsel %vm2248, %v2582, 0
        %v2590 = vsel %vm2290, %v2496, 0
        %2592 = vmatprep.subr.bf16.mxu0 0
        %2593 = vmatpush1.bf16.msra.mxu0 %v2495
        %2594 = vmatprep.subr.bf16.mxu0 0
        %2595 = vmatpush1.bf16.msra.mxu0 %v2590
        %2596 = vmatprep.subr.bf16.mxu0 0
        %2597 = vmatpush1.bf16.msra.mxu0 0
        %2598 = vmatprep.subr.bf16.mxu0 0
        %2599 = vmatpush1.bf16.msra.mxu0 0
        %2600 = vmatprep.subr.bf16.mxu0 0
        %2601 = vmatpush1.bf16.msra.mxu0 0
        %2602 = vmatprep.subr.bf16.mxu0 0
        %2603 = vmatpush1.bf16.msra.mxu0 0
        %2604 = vmatprep.subr.bf16.mxu0 0
        %2605 = vmatpush1.bf16.msra.mxu0 0
        %2606 = vmatprep.subr.bf16.mxu0 0
        %2607 = vmatpush1.bf16.msra.mxu0 0
        %2608 = vmatprep.subr.bf16.mxu0 0
        %2609 = vmatpush1.bf16.msra.mxu0 0
        %2610 = vmatprep.subr.bf16.mxu0 0
        %2611 = vmatpush1.bf16.msra.mxu0 0
        %2612 = vmatprep.subr.bf16.mxu0 0
        %2613 = vmatpush1.bf16.msra.mxu0 0
        %2614 = vmatprep.subr.bf16.mxu0 0
        %2615 = vmatpush1.bf16.msra.mxu0 0
        %2616 = vmatprep.subr.bf16.mxu0 0
        %2617 = vmatpush1.bf16.msra.mxu0 0
        %2618 = vmatprep.subr.bf16.mxu0 0
        %2619 = vmatpush1.bf16.msra.mxu0 0
        %2620 = vmatprep.subr.bf16.mxu0 0
        %2621 = vmatpush1.bf16.msra.mxu0 0
        %2622 = vmatprep.subr.bf16.mxu0 0
        %2623 = vmatpush1.bf16.msra.mxu0 0
        %2624 = vmatprep.mubr.bf16.mxu0 0
        %2625 = vmatmul.mubr.bf16.gmra.mrb[0].mxu0 %v2584
        %v2626 = vpop.f32.mrb[0].mxu0
        %v2627 = vadd.f32 0.0, %v2626
        %v2628 = vpop.f32.mrb[0].mxu0
        %v2629 = vpop.f32.mrb[0].mxu0
        %v2630 = vadd.f32 0.0, %v2629
        %v2631 = vpop.f32.mrb[0].mxu0
        %2632 = vmatprep.mubr.bf16.mxu0 0
        %2633 = vmatmul.mubr.bf16.gmra.mrb[0].mxu0 %v2587
        %v2634 = vpop.f32.mrb[0].mxu0
        %v2635 = vadd.f32 0.0, %v2634
        %v2636 = vpop.f32.mrb[0].mxu0
        %v2637 = vpop.f32.mrb[0].mxu0
        %v2638 = vpop.f32.mrb[0].mxu0
        %2639 = vdwg.mxu0
        %v2640 = vpack.c.bf16 %v1975, %v1971
        %v2641 = vpack.c.bf16 %v1981, %v1981
        %v2642 = vpack.c.bf16 %v2077, %v2073
        %v2643 = vpack.c.bf16 %v2083, %v2083
        %v2644 = vpack.c.bf16 %v2179, %v2175
        %v2645 = vpack.c.bf16 %v2185, %v2185
        %2646 = vmatprep.subr.bf16.mxu0 0
        %2647 = vmatpush1.bf16.xpose.msra.mxu0 %v2642
        %2648 = vmatprep.subr.bf16.mxu0 0
        %2649 = vmatpush1.bf16.xpose.msra.mxu0 %v2643
        %2650 = vmatprep.subr.bf16.mxu0 0
        %2651 = vmatpush1.bf16.xpose.msra.mxu0 0
        %2652 = vmatprep.subr.bf16.mxu0 0
        %2653 = vmatpush1.bf16.xpose.msra.mxu0 0
        %2654 = vmatprep.subr.bf16.mxu0 0
        %2655 = vmatpush1.bf16.xpose.msra.mxu0 0
        %2656 = vmatprep.subr.bf16.mxu0 0
        %2657 = vmatpush1.bf16.xpose.msra.mxu0 0
        %2658 = vmatprep.subr.bf16.mxu0 0
        %2659 = vmatpush1.bf16.xpose.msra.mxu0 0
        %2660 = vmatprep.subr.bf16.mxu0 0
        %2661 = vmatpush1.bf16.xpose.msra.mxu0 0
        %2662 = vmatprep.subr.bf16.mxu0 0
        %2663 = vmatpush1.bf16.xpose.msra.mxu0 0
        %2664 = vmatprep.subr.bf16.mxu0 0
        %2665 = vmatpush1.bf16.xpose.msra.mxu0 0
        %2666 = vmatprep.subr.bf16.mxu0 0
        %2667 = vmatpush1.bf16.xpose.msra.mxu0 0
        %2668 = vmatprep.subr.bf16.mxu0 0
        %2669 = vmatpush1.bf16.xpose.msra.mxu0 0
        %2670 = vmatprep.subr.bf16.mxu0 0
        %2671 = vmatpush1.bf16.xpose.msra.mxu0 0
        %2672 = vmatprep.subr.bf16.mxu0 0
        %2673 = vmatpush1.bf16.xpose.msra.mxu0 0
        %2674 = vmatprep.subr.bf16.mxu0 0
        %2675 = vmatpush1.bf16.xpose.msra.mxu0 0
        %2676 = vmatprep.subr.bf16.mxu0 0
        %2677 = vmatpush1.bf16.xpose.msra.mxu0 0
        %2678 = vmatprep.mubr.bf16.mxu0 0
        %2679 = vmatmul.mubr.bf16.gmra.mrb[0].mxu0 %v2640
        %v2680 = vpop.f32.mrb[0].mxu0
        %v2681 = vadd.f32 0.0, %v2680
        %v2682 = vpop.f32.mrb[0].mxu0
        %v2683 = vpop.f32.mrb[0].mxu0
        %v2684 = vadd.f32 0.0, %v2683
        %v2685 = vpop.f32.mrb[0].mxu0
        %2686 = vmatprep.mubr.bf16.mxu0 0
        %2687 = vmatmul.mubr.bf16.gmra.mrb[0].mxu0 %v2641
        %v2688 = vpop.f32.mrb[0].mxu0
        %v2689 = vadd.f32 0.0, %v2688
        %v2690 = vpop.f32.mrb[0].mxu0
        %v2691 = vpop.f32.mrb[0].mxu0
        %v2692 = vpop.f32.mrb[0].mxu0
        %2693 = vdwg.mxu0
        %v2694 = vsel %vm2244, %v2681, -1e+30
        %v2695 = vsel %vm2244, %v2684, -1e+30
        %v2696 = vsel %vm2244, %v2689, -1e+30
        %v2697 = vsel %vm2248, %v2694, -inf
        %2698 = vmax.xlane.f32.xlu0 %v2697
        %v2699 = vpop.xlane.xlu0 %2698
        %v2700 = vsel %vm2248, %v2695, -inf
        %2701 = vmax.xlane.f32.xlu0 %v2700
        %v2702 = vpop.xlane.xlu0 %2701
        %v2703 = vsel %vm2248, %v2696, -inf
        %2704 = vmax.xlane.f32.xlu0 %v2703
        %v2705 = vpop.xlane.xlu0 %2704
        %v2706 = vsub.f32 %v2694, %v2699
        %v2707 = vsub.f32 %v2695, %v2702
        %v2708 = vsub.f32 %v2696, %v2705
        %v2709 = vmul.f32 %v2706, 1.442695
        %v2710 = vpow.pop %v2709
        %v2711 = vmul.f32 %v2707, 1.442695
        %v2712 = vpow.pop %v2711
        %v2713 = vmul.f32 %v2708, 1.442695
        %v2714 = vpow.pop %v2713
        %v2715 = vsel %vm2248, %v2710, 0.0
        %2716 = vadd.xlane.f32.xlu0 %v2715
        %v2717 = vpop.xlane.xlu0 %2716
        %v2718 = vsel %vm2248, %v2712, 0.0
        %2719 = vadd.xlane.f32.xlu0 %v2718
        %v2720 = vpop.xlane.xlu0 %2719
        %v2721 = vsel %vm2248, %v2714, 0.0
        %2722 = vadd.xlane.f32.xlu0 %v2721
        %v2723 = vpop.xlane.xlu0 %2722
        %v2724 = vrcp.pop %v2717
        %v2725 = vrcp.pop %v2720
        %v2726 = vrcp.pop %v2723
        %v2727 = vmul.f32 %v2710, %v2724
        %v2728 = vmul.f32 %v2712, %v2725
        %v2729 = vmul.f32 %v2714, %v2726
        %v2730 = vpack.c.bf16 %v2728, %v2727
        %v2731 = vpack.c.bf16 %v2729, %v2729
        %v2733 = vsel %vm2248, %v2730, 0
        %v2736 = vsel %vm2248, %v2731, 0
        %v2739 = vsel %vm2290, %v2645, 0
        %2741 = vmatprep.subr.bf16.mxu0 0
        %2742 = vmatpush1.bf16.msra.mxu0 %v2644
        %2743 = vmatprep.subr.bf16.mxu0 0
        %2744 = vmatpush1.bf16.msra.mxu0 %v2739
        %2745 = vmatprep.subr.bf16.mxu0 0
        %2746 = vmatpush1.bf16.msra.mxu0 0
        %2747 = vmatprep.subr.bf16.mxu0 0
        %2748 = vmatpush1.bf16.msra.mxu0 0
        %2749 = vmatprep.subr.bf16.mxu0 0
        %2750 = vmatpush1.bf16.msra.mxu0 0
        %2751 = vmatprep.subr.bf16.mxu0 0
        %2752 = vmatpush1.bf16.msra.mxu0 0
        %2753 = vmatprep.subr.bf16.mxu0 0
        %2754 = vmatpush1.bf16.msra.mxu0 0
        %2755 = vmatprep.subr.bf16.mxu0 0
        %2756 = vmatpush1.bf16.msra.mxu0 0
        %2757 = vmatprep.subr.bf16.mxu0 0
        %2758 = vmatpush1.bf16.msra.mxu0 0
        %2759 = vmatprep.subr.bf16.mxu0 0
        %2760 = vmatpush1.bf16.msra.mxu0 0
        %2761 = vmatprep.subr.bf16.mxu0 0
        %2762 = vmatpush1.bf16.msra.mxu0 0
        %2763 = vmatprep.subr.bf16.mxu0 0
        %2764 = vmatpush1.bf16.msra.mxu0 0
        %2765 = vmatprep.subr.bf16.mxu0 0
        %2766 = vmatpush1.bf16.msra.mxu0 0
        %2767 = vmatprep.subr.bf16.mxu0 0
        %2768 = vmatpush1.bf16.msra.mxu0 0
        %2769 = vmatprep.subr.bf16.mxu0 0
        %2770 = vmatpush1.bf16.msra.mxu0 0
        %2771 = vmatprep.subr.bf16.mxu0 0
        %2772 = vmatpush1.bf16.msra.mxu0 0
        %2773 = vmatprep.mubr.bf16.mxu0 0
        %2774 = vmatmul.mubr.bf16.gmra.mrb[0].mxu0 %v2733
        %v2775 = vpop.f32.mrb[0].mxu0
        %v2776 = vadd.f32 0.0, %v2775
        %v2777 = vpop.f32.mrb[0].mxu0
        %v2778 = vpop.f32.mrb[0].mxu0
        %v2779 = vadd.f32 0.0, %v2778
        %v2780 = vpop.f32.mrb[0].mxu0
        %2781 = vmatprep.mubr.bf16.mxu0 0
        %2782 = vmatmul.mubr.bf16.gmra.mrb[0].mxu0 %v2736
        %v2783 = vpop.f32.mrb[0].mxu0
        %v2784 = vadd.f32 0.0, %v2783
        %v2785 = vpop.f32.mrb[0].mxu0
        %v2786 = vpop.f32.mrb[0].mxu0
        %v2787 = vpop.f32.mrb[0].mxu0
        %2788 = vdwg.mxu0
        %v2789 = vld [vmem:[%s945] sm:$0xf]
        %v2790 = vld [vmem:[%s945 + $0x4] sm:$0xf]
        %v2791 = vld [vmem:[%s945 + $0x8] sm:$0xf]
        %v2792 = vld [vmem:[%s945 + $0xc] sm:$0xf]
        %v2793 = vld [vmem:[%s945 + $0x10] sm:$0xf]
        %v2794 = vld [vmem:[%s945 + $0x14] sm:$0xf]
        %v2795 = vld [vmem:[%s945 + $0x18] sm:$0xf]
        %v2796 = vld [vmem:[%s945 + $0x1c] sm:$0xf]
        %v2797 = vld [vmem:[%s945 + $0x20] sm:$0xf]
        %v2798 = vld [vmem:[%s945 + $0x24] sm:$0xf]
        %v2799 = vld [vmem:[%s945 + $0x28] sm:$0xf]
        %v2800 = vld [vmem:[%s945 + $0x2c] sm:$0xf]
        %v2801 = vld [vmem:[%s945 + $0x30] sm:$0xf]
        %v2802 = vld [vmem:[%s945 + $0x34] sm:$0xf]
        %v2803 = vld [vmem:[%s945 + $0x38] sm:$0xf]
        %v2804 = vld [vmem:[%s945 + $0x3c] sm:$0xf]
        %v2805 = vld [vmem:[%s945 + $0x40] sm:$0xf]
        %v2806 = vld [vmem:[%s945 + $0x44] sm:$0xf]
        %v2807 = vld [vmem:[%s945 + $0x48] sm:$0xf]
        %v2808 = vld [vmem:[%s945 + $0x4c] sm:$0xf]
        %v2809 = vld [vmem:[%s945 + $0x50] sm:$0xf]
        %v2810 = vld [vmem:[%s945 + $0x54] sm:$0xf]
        %v2811 = vld [vmem:[%s945 + $0x58] sm:$0xf]
        %v2812 = vld [vmem:[%s945 + $0x5c] sm:$0xf]
        %v2813 = vld [vmem:[%s945 + $0x60] sm:$0xf]
        %v2814 = vld [vmem:[%s945 + $0x64] sm:$0xf]
        %v2815 = vld [vmem:[%s945 + $0x68] sm:$0xf]
        %v2816 = vld [vmem:[%s945 + $0x6c] sm:$0xf]
        %v2817 = vld [vmem:[%s945 + $0x70] sm:$0xf]
        %v2818 = vld [vmem:[%s945 + $0x74] sm:$0xf]
        %v2819 = vld [vmem:[%s945 + $0x78] sm:$0xf]
        %v2820 = vld [vmem:[%s945 + $0x7c] sm:$0xf]
        %v2821 = vld [vmem:[%s945 + $0x80] sm:$0xf]
        %v2822 = vld [vmem:[%s945 + $0x84] sm:$0xf]
        %v2823 = vld [vmem:[%s945 + $0x88] sm:$0xf]
        %v2824 = vld [vmem:[%s945 + $0x8c] sm:$0xf]
        %v2825 = vld [vmem:[%s945 + $0x90] sm:$0xf]
        %v2826 = vld [vmem:[%s945 + $0x94] sm:$0xf]
        %v2827 = vld [vmem:[%s945 + $0x98] sm:$0xf]
        %v2828 = vld [vmem:[%s945 + $0x9c] sm:$0xf]
        %v2829 = vld [vmem:[%s945 + $0xa0] sm:$0xf]
        %v2830 = vld [vmem:[%s945 + $0xa4] sm:$0xf]
        %v2831 = vld [vmem:[%s945 + $0xa8] sm:$0xf]
        %v2832 = vld [vmem:[%s945 + $0xac] sm:$0xf]
        %v2833 = vld [vmem:[%s945 + $0xb0] sm:$0xf]
        %v2834 = vld [vmem:[%s945 + $0xb4] sm:$0xf]
        %v2835 = vld [vmem:[%s945 + $0xb8] sm:$0xf]
        %v2836 = vld [vmem:[%s945 + $0xbc] sm:$0xf]
        %v2837 = vld [vmem:[%s945 + $0xc0] sm:$0xf]
        %v2838 = vld [vmem:[%s945 + $0xc4] sm:$0xf]
        %v2839 = vld [vmem:[%s945 + $0xc8] sm:$0xf]
        %v2840 = vld [vmem:[%s945 + $0xcc] sm:$0xf]
        %v2841 = vld [vmem:[%s945 + $0xd0] sm:$0xf]
        %v2842 = vld [vmem:[%s945 + $0xd4] sm:$0xf]
        %v2843 = vld [vmem:[%s945 + $0xd8] sm:$0xf]
        %v2844 = vld [vmem:[%s945 + $0xdc] sm:$0xf]
        %v2845 = vld [vmem:[%s945 + $0xe0] sm:$0xf]
        %v2846 = vld [vmem:[%s945 + $0xe4] sm:$0xf]
        %v2847 = vld [vmem:[%s945 + $0xe8] sm:$0xf]
        %v2848 = vld [vmem:[%s945 + $0xec] sm:$0xf]
        %v2849 = vld [vmem:[%s945 + $0xf0] sm:$0xf]
        %v2850 = vld [vmem:[%s945 + $0xf4] sm:$0xf]
        %v2851 = vld [vmem:[%s945 + $0xf8] sm:$0xf]
        %v2852 = vld [vmem:[%s945 + $0xfc] sm:$0xf]
        %v2853 = vpack.c.bf16 %v2332, %v2329
        %v2854 = vpack.c.bf16 %v2481, %v2478
        %v2855 = vpack.c.bf16 %v2630, %v2627
        %v2856 = vpack.c.bf16 %v2779, %v2776
        %v2857 = vpack.c.bf16 %v2337, %v2337
        %v2858 = vpack.c.bf16 %v2486, %v2486
        %v2859 = vpack.c.bf16 %v2635, %v2635
        %v2860 = vpack.c.bf16 %v2784, %v2784
        %v2925 = vunpack.c.l.b16 %v2789
        %v2926 = vunpack.c.l.b16 %v2790
        %v2927 = vunpack.c.l.b16 %v2791
        %v2928 = vunpack.c.l.b16 %v2792
        %v2929 = vunpack.c.l.b16 %v2793
        %v2930 = vunpack.c.l.b16 %v2794
        %v2931 = vunpack.c.l.b16 %v2795
        %v2932 = vunpack.c.l.b16 %v2796
        %v2933 = vunpack.c.l.b16 %v2797
        %v2934 = vunpack.c.l.b16 %v2798
        %v2935 = vunpack.c.l.b16 %v2799
        %v2936 = vunpack.c.l.b16 %v2800
        %v2937 = vunpack.c.l.b16 %v2801
        %v2938 = vunpack.c.l.b16 %v2802
        %v2939 = vunpack.c.l.b16 %v2803
        %v2940 = vunpack.c.l.b16 %v2804
        %v2941 = vunpack.c.l.b16 %v2805
        %v2942 = vunpack.c.l.b16 %v2806
        %v2943 = vunpack.c.l.b16 %v2807
        %v2944 = vunpack.c.l.b16 %v2808
        %v2945 = vunpack.c.l.b16 %v2809
        %v2946 = vunpack.c.l.b16 %v2810
        %v2947 = vunpack.c.l.b16 %v2811
        %v2948 = vunpack.c.l.b16 %v2812
        %v2949 = vunpack.c.l.b16 %v2813
        %v2950 = vunpack.c.l.b16 %v2814
        %v2951 = vunpack.c.l.b16 %v2815
        %v2952 = vunpack.c.l.b16 %v2816
        %v2953 = vunpack.c.l.b16 %v2817
        %v2954 = vunpack.c.l.b16 %v2818
        %v2955 = vunpack.c.l.b16 %v2819
        %v2956 = vunpack.c.l.b16 %v2820
        %v2957 = vunpack.c.l.b16 %v2821
        %v2958 = vunpack.c.l.b16 %v2822
        %v2959 = vunpack.c.l.b16 %v2823
        %v2960 = vunpack.c.l.b16 %v2824
        %v2961 = vunpack.c.l.b16 %v2825
        %v2962 = vunpack.c.l.b16 %v2826
        %v2963 = vunpack.c.l.b16 %v2827
        %v2964 = vunpack.c.l.b16 %v2828
        %v2965 = vunpack.c.l.b16 %v2829
        %v2966 = vunpack.c.l.b16 %v2830
        %v2967 = vunpack.c.l.b16 %v2831
        %v2968 = vunpack.c.l.b16 %v2832
        %v2969 = vunpack.c.l.b16 %v2833
        %v2970 = vunpack.c.l.b16 %v2834
        %v2971 = vunpack.c.l.b16 %v2835
        %v2972 = vunpack.c.l.b16 %v2836
        %v2973 = vunpack.c.l.b16 %v2837
        %v2974 = vunpack.c.l.b16 %v2838
        %v2975 = vunpack.c.l.b16 %v2839
        %v2976 = vunpack.c.l.b16 %v2840
        %v2977 = vunpack.c.l.b16 %v2841
        %v2978 = vunpack.c.l.b16 %v2842
        %v2979 = vunpack.c.l.b16 %v2843
        %v2980 = vunpack.c.l.b16 %v2844
        %v2981 = vunpack.c.l.b16 %v2845
        %v2982 = vunpack.c.l.b16 %v2846
        %v2983 = vunpack.c.l.b16 %v2847
        %v2984 = vunpack.c.l.b16 %v2848
        %v2985 = vunpack.c.l.b16 %v2849
        %v2986 = vunpack.c.l.b16 %v2850
        %v2987 = vunpack.c.l.b16 %v2851
        %v2988 = vunpack.c.l.b16 %v2852
        %v2989 = vpack.c.b16 %v2926, %v2925
        %v2990 = vpack.c.b16 %v2928, %v2927
        %v2991 = vpack.c.b16 %v2930, %v2929
        %v2992 = vpack.c.b16 %v2932, %v2931
        %v2993 = vpack.c.b16 %v2934, %v2933
        %v2994 = vpack.c.b16 %v2936, %v2935
        %v2995 = vpack.c.b16 %v2938, %v2937
        %v2996 = vpack.c.b16 %v2940, %v2939
        %v2997 = vpack.c.b16 %v2942, %v2941
        %v2998 = vpack.c.b16 %v2944, %v2943
        %v2999 = vpack.c.b16 %v2946, %v2945
        %v3000 = vpack.c.b16 %v2948, %v2947
        %v3001 = vpack.c.b16 %v2950, %v2949
        %v3002 = vpack.c.b16 %v2952, %v2951
        %v3003 = vpack.c.b16 %v2954, %v2953
        %v3004 = vpack.c.b16 %v2956, %v2955
        %v3005 = vpack.c.b16 %v2958, %v2957
        %v3006 = vpack.c.b16 %v2960, %v2959
        %v3007 = vpack.c.b16 %v2962, %v2961
        %v3008 = vpack.c.b16 %v2964, %v2963
        %v3009 = vpack.c.b16 %v2966, %v2965
        %v3010 = vpack.c.b16 %v2968, %v2967
        %v3011 = vpack.c.b16 %v2970, %v2969
        %v3012 = vpack.c.b16 %v2972, %v2971
        %v3013 = vpack.c.b16 %v2974, %v2973
        %v3014 = vpack.c.b16 %v2976, %v2975
        %v3015 = vpack.c.b16 %v2978, %v2977
        %v3016 = vpack.c.b16 %v2980, %v2979
        %v3017 = vpack.c.b16 %v2982, %v2981
        %v3018 = vpack.c.b16 %v2984, %v2983
        %v3019 = vpack.c.b16 %v2986, %v2985
        %v3020 = vpack.c.b16 %v2988, %v2987
        %3053 = vmatprep.subr.bf16.mxu0 0
        %3054 = vmatpush1.bf16.msra.mxu0 %v2989
        %3055 = vmatprep.subr.bf16.mxu0 0
        %3056 = vmatpush1.bf16.msra.mxu0 %v2990
        %3057 = vmatprep.subr.bf16.mxu0 0
        %3058 = vmatpush1.bf16.msra.mxu0 %v2991
        %3059 = vmatprep.subr.bf16.mxu0 0
        %3060 = vmatpush1.bf16.msra.mxu0 %v2992
        %3061 = vmatprep.subr.bf16.mxu0 0
        %3062 = vmatpush1.bf16.msra.mxu0 %v2993
        %3063 = vmatprep.subr.bf16.mxu0 0
        %3064 = vmatpush1.bf16.msra.mxu0 %v2994
        %3065 = vmatprep.subr.bf16.mxu0 0
        %3066 = vmatpush1.bf16.msra.mxu0 %v2995
        %3067 = vmatprep.subr.bf16.mxu0 0
        %3068 = vmatpush1.bf16.msra.mxu0 %v2996
        %3069 = vmatprep.subr.bf16.mxu0 0
        %3070 = vmatpush1.bf16.msra.mxu0 %v2997
        %3071 = vmatprep.subr.bf16.mxu0 0
        %3072 = vmatpush1.bf16.msra.mxu0 %v2998
        %3073 = vmatprep.subr.bf16.mxu0 0
        %3074 = vmatpush1.bf16.msra.mxu0 %v2999
        %3075 = vmatprep.subr.bf16.mxu0 0
        %3076 = vmatpush1.bf16.msra.mxu0 %v3000
        %3077 = vmatprep.subr.bf16.mxu0 0
        %3078 = vmatpush1.bf16.msra.mxu0 %v3001
        %3079 = vmatprep.subr.bf16.mxu0 0
        %3080 = vmatpush1.bf16.msra.mxu0 %v3002
        %3081 = vmatprep.subr.bf16.mxu0 0
        %3082 = vmatpush1.bf16.msra.mxu0 %v3003
        %3083 = vmatprep.subr.bf16.mxu0 0
        %3084 = vmatpush1.bf16.msra.mxu0 %v3004
        %3085 = vmatprep.mubr.bf16.mxu0 %v2854
        %3086 = vmatmul.mubr.bf16.gmra.mrb[0].mxu0 %v2853
        %v3087 = vpop.f32.mrb[0].mxu0
        %v3088 = vadd.f32 0.0, %v3087
        %v3089 = vpop.f32.mrb[0].mxu0
        %v3090 = vpop.f32.mrb[0].mxu0
        %v3091 = vadd.f32 0.0, %v3090
        %v3092 = vpop.f32.mrb[0].mxu0
        %3093 = vmatprep.mubr.bf16.mxu0 %v2858
        %3094 = vmatmul.mubr.bf16.gmra.mrb[0].mxu0 %v2857
        %v3095 = vpop.f32.mrb[0].mxu0
        %v3096 = vadd.f32 0.0, %v3095
        %v3097 = vpop.f32.mrb[0].mxu0
        %v3098 = vpop.f32.mrb[0].mxu0
        %v3099 = vpop.f32.mrb[0].mxu0
        %3100 = vdwg.mxu0
        %3101 = vmatprep.subr.bf16.mxu0 0
        %3102 = vmatpush1.bf16.msra.mxu0 %v3005
        %3103 = vmatprep.subr.bf16.mxu0 0
        %3104 = vmatpush1.bf16.msra.mxu0 %v3006
        %3105 = vmatprep.subr.bf16.mxu0 0
        %3106 = vmatpush1.bf16.msra.mxu0 %v3007
        %3107 = vmatprep.subr.bf16.mxu0 0
        %3108 = vmatpush1.bf16.msra.mxu0 %v3008
        %3109 = vmatprep.subr.bf16.mxu0 0
        %3110 = vmatpush1.bf16.msra.mxu0 %v3009
        %3111 = vmatprep.subr.bf16.mxu0 0
        %3112 = vmatpush1.bf16.msra.mxu0 %v3010
        %3113 = vmatprep.subr.bf16.mxu0 0
        %3114 = vmatpush1.bf16.msra.mxu0 %v3011
        %3115 = vmatprep.subr.bf16.mxu0 0
        %3116 = vmatpush1.bf16.msra.mxu0 %v3012
        %3117 = vmatprep.subr.bf16.mxu0 0
        %3118 = vmatpush1.bf16.msra.mxu0 %v3013
        %3119 = vmatprep.subr.bf16.mxu0 0
        %3120 = vmatpush1.bf16.msra.mxu0 %v3014
        %3121 = vmatprep.subr.bf16.mxu0 0
        %3122 = vmatpush1.bf16.msra.mxu0 %v3015
        %3123 = vmatprep.subr.bf16.mxu0 0
        %3124 = vmatpush1.bf16.msra.mxu0 %v3016
        %3125 = vmatprep.subr.bf16.mxu0 0
        %3126 = vmatpush1.bf16.msra.mxu0 %v3017
        %3127 = vmatprep.subr.bf16.mxu0 0
        %3128 = vmatpush1.bf16.msra.mxu0 %v3018
        %3129 = vmatprep.subr.bf16.mxu0 0
        %3130 = vmatpush1.bf16.msra.mxu0 %v3019
        %3131 = vmatprep.subr.bf16.mxu0 0
        %3132 = vmatpush1.bf16.msra.mxu0 %v3020
        %3133 = vmatprep.mubr.bf16.mxu0 %v2856
        %3134 = vmatmul.mubr.bf16.gmra.mrb[0].mxu0 %v2855
        %v3135 = vpop.f32.mrb[0].mxu0
        %v3136 = vadd.f32 %v3088, %v3135
        %v3137 = vpop.f32.mrb[0].mxu0
        %v3138 = vpop.f32.mrb[0].mxu0
        %v3139 = vadd.f32 %v3091, %v3138
        %v3140 = vpop.f32.mrb[0].mxu0
        %3141 = vmatprep.mubr.bf16.mxu0 %v2860
        %3142 = vmatmul.mubr.bf16.gmra.mrb[0].mxu0 %v2859
        %v3143 = vpop.f32.mrb[0].mxu0
        %v3144 = vadd.f32 %v3096, %v3143
        %v3145 = vpop.f32.mrb[0].mxu0
        %v3146 = vpop.f32.mrb[0].mxu0
        %v3147 = vpop.f32.mrb[0].mxu0
        %3148 = vdwg.mxu0
        %v3149 = vadd.f32 %v1169, %v3136
        %v3150 = vadd.f32 %v1170, %v3139
        %v3151 = vadd.f32 %v1171, %v3144
        %v3152 = vld [vmem:[%s948] sm:$0x1]
        %v3154 = vlaneseq
        %v3155 = vshrl.u32 %v3154, 7
        %v3156 = vsub.s32 0, %v3155
        %v3157 = vrot.slane %v3152, %v3156
        %v3159 = vadd.f32 %v3149, %v3157
        %v3160 = vadd.f32 %v3150, %v3157
        %v3161 = vadd.f32 %v3151, %v3157
        %v3162 = vld [vmem:[%s951] sm:$0x1]
        %v3163 = vld [vmem:[%s954] sm:$0x1]
        %3164 = vadd.xlane.f32.xlu0 %v3159
        %v3165 = vpop.xlane.xlu0 %3164
        %3166 = vadd.xlane.f32.xlu0 %v3160
        %v3167 = vpop.xlane.xlu0 %3166
        %3168 = vadd.xlane.f32.xlu0 %v3161
        %v3169 = vpop.xlane.xlu0 %3168
        %v3170 = vmul.f32 %v3165, 0.015625
        %v3171 = vmul.f32 %v3167, 0.015625
        %v3172 = vmul.f32 %v3169, 0.015625
        %v3173 = vmul.f32 %v3159, %v3159
        %v3174 = vmul.f32 %v3160, %v3160
        %v3175 = vmul.f32 %v3161, %v3161
        %3176 = vadd.xlane.f32.xlu0 %v3173
        %v3177 = vpop.xlane.xlu0 %3176
        %3178 = vadd.xlane.f32.xlu0 %v3174
        %v3179 = vpop.xlane.xlu0 %3178
        %3180 = vadd.xlane.f32.xlu0 %v3175
        %v3181 = vpop.xlane.xlu0 %3180
        %v3182 = vmul.f32 %v3177, 0.015625
        %v3183 = vmul.f32 %v3179, 0.015625
        %v3184 = vmul.f32 %v3181, 0.015625
        %v3185 = vmul.f32 %v3170, %v3170
        %v3186 = vmul.f32 %v3171, %v3171
        %v3187 = vmul.f32 %v3172, %v3172
        %v3188 = vsub.f32 %v3182, %v3185
        %v3189 = vsub.f32 %v3183, %v3186
        %v3190 = vsub.f32 %v3184, %v3187
        %v3191 = vsub.f32 %v3159, %v3170
        %v3192 = vsub.f32 %v3160, %v3171
        %v3193 = vsub.f32 %v3161, %v3172
        %v3194 = vadd.f32 %v3188, 1e-06
        %v3195 = vadd.f32 %v3189, 1e-06
        %v3196 = vadd.f32 %v3190, 1e-06
        %v3197 = vrsqrt.pop %v3194
        %v3198 = vrsqrt.pop %v3195
        %v3199 = vrsqrt.pop %v3196
        %v3200 = vmul.f32 %v3191, %v3197
        %v3201 = vmul.f32 %v3192, %v3198
        %v3202 = vmul.f32 %v3193, %v3199
        %v3204 = vlaneseq
        %v3205 = vshrl.u32 %v3204, 7
        %v3206 = vsub.s32 0, %v3205
        %v3207 = vrot.slane %v3162, %v3206
        %v3209 = vmul.f32 %v3200, %v3207
        %v3210 = vmul.f32 %v3201, %v3207
        %v3211 = vmul.f32 %v3202, %v3207
        %v3213 = vlaneseq
        %v3214 = vshrl.u32 %v3213, 7
        %v3215 = vsub.s32 0, %v3214
        %v3216 = vrot.slane %v3163, %v3215
        %v3218 = vadd.f32 %v3209, %v3216
        %v3219 = vadd.f32 %v3210, %v3216
        %v3220 = vadd.f32 %v3211, %v3216
        %v3221 = vld [vmem:[%s959] sm:$0xff]
        %v3222 = vld [vmem:[%s959 + $0x8] sm:$0xff]
        %v3223 = vld [vmem:[%s959 + $0x10] sm:$0xff]
        %v3224 = vld [vmem:[%s959 + $0x18] sm:$0xff]
        %v3225 = vld [vmem:[%s959 + $0x20] sm:$0xff]
        %v3226 = vld [vmem:[%s959 + $0x28] sm:$0xff]
        %v3227 = vld [vmem:[%s959 + $0x30] sm:$0xff]
        %v3228 = vld [vmem:[%s959 + $0x38] sm:$0xff]
        %v3229 = vld [vmem:[%s959 + $0x40] sm:$0xff]
        %v3230 = vld [vmem:[%s959 + $0x48] sm:$0xff]
        %v3231 = vld [vmem:[%s959 + $0x50] sm:$0xff]
        %v3232 = vld [vmem:[%s959 + $0x58] sm:$0xff]
        %v3233 = vld [vmem:[%s959 + $0x60] sm:$0xff]
        %v3234 = vld [vmem:[%s959 + $0x68] sm:$0xff]
        %v3235 = vld [vmem:[%s959 + $0x70] sm:$0xff]
        %v3236 = vld [vmem:[%s959 + $0x78] sm:$0xff]
        %v3237 = vpack.c.bf16 %v3219, %v3218
        %v3238 = vpack.c.bf16 %v3220, %v3220
        %v3239 = vld [vmem:[%s963] sm:$0x3]
        %v3241 = vlaneseq
        %v3242 = vshrl.u32 %v3241, 7
        %v3243 = vsub.s32 0, %v3242
        %v3244 = vrot.slane %v3239, %v3243
        %v3245 = vlaneseq
        %v3246 = vshrl.u32 %v3245, 7
        %v3247 = vsub.s32 1, %v3246
        %v3248 = vrot.slane %v3239, %v3247
        %v3267 = vunpack.c.l.b16 %v3221
        %v3268 = vunpack.c.h.b16 %v3221
        %v3269 = vunpack.c.l.b16 %v3222
        %v3270 = vunpack.c.h.b16 %v3222
        %v3271 = vunpack.c.l.b16 %v3223
        %v3272 = vunpack.c.h.b16 %v3223
        %v3273 = vunpack.c.l.b16 %v3224
        %v3274 = vunpack.c.h.b16 %v3224
        %v3275 = vunpack.c.l.b16 %v3225
        %v3276 = vunpack.c.h.b16 %v3225
        %v3277 = vunpack.c.l.b16 %v3226
        %v3278 = vunpack.c.h.b16 %v3226
        %v3279 = vunpack.c.l.b16 %v3227
        %v3280 = vunpack.c.h.b16 %v3227
        %v3281 = vunpack.c.l.b16 %v3228
        %v3282 = vunpack.c.h.b16 %v3228
        %v3283 = vunpack.c.l.b16 %v3229
        %v3284 = vunpack.c.h.b16 %v3229
        %v3285 = vunpack.c.l.b16 %v3230
        %v3286 = vunpack.c.h.b16 %v3230
        %v3287 = vunpack.c.l.b16 %v3231
        %v3288 = vunpack.c.h.b16 %v3231
        %v3289 = vunpack.c.l.b16 %v3232
        %v3290 = vunpack.c.h.b16 %v3232
        %v3291 = vunpack.c.l.b16 %v3233
        %v3292 = vunpack.c.h.b16 %v3233
        %v3293 = vunpack.c.l.b16 %v3234
        %v3294 = vunpack.c.h.b16 %v3234
        %v3295 = vunpack.c.l.b16 %v3235
        %v3296 = vunpack.c.h.b16 %v3235
        %v3297 = vunpack.c.l.b16 %v3236
        %v3298 = vunpack.c.h.b16 %v3236
        %v3299 = vpack.c.b16 %v3269, %v3267
        %v3300 = vpack.c.b16 %v3270, %v3268
        %v3301 = vpack.c.b16 %v3273, %v3271
        %v3302 = vpack.c.b16 %v3274, %v3272
        %v3303 = vpack.c.b16 %v3277, %v3275
        %v3304 = vpack.c.b16 %v3278, %v3276
        %v3305 = vpack.c.b16 %v3281, %v3279
        %v3306 = vpack.c.b16 %v3282, %v3280
        %v3307 = vpack.c.b16 %v3285, %v3283
        %v3308 = vpack.c.b16 %v3286, %v3284
        %v3309 = vpack.c.b16 %v3289, %v3287
        %v3310 = vpack.c.b16 %v3290, %v3288
        %v3311 = vpack.c.b16 %v3293, %v3291
        %v3312 = vpack.c.b16 %v3294, %v3292
        %v3313 = vpack.c.b16 %v3297, %v3295
        %v3314 = vpack.c.b16 %v3298, %v3296
        %3331 = vmatprep.subr.bf16.mxu0 %v3300
        %3332 = vmatpush1.bf16.msra.mxu0 %v3299
        %3333 = vmatprep.subr.bf16.mxu0 %v3302
        %3334 = vmatpush1.bf16.msra.mxu0 %v3301
        %3335 = vmatprep.subr.bf16.mxu0 %v3304
        %3336 = vmatpush1.bf16.msra.mxu0 %v3303
        %3337 = vmatprep.subr.bf16.mxu0 %v3306
        %3338 = vmatpush1.bf16.msra.mxu0 %v3305
        %3339 = vmatprep.subr.bf16.mxu0 %v3308
        %3340 = vmatpush1.bf16.msra.mxu0 %v3307
        %3341 = vmatprep.subr.bf16.mxu0 %v3310
        %3342 = vmatpush1.bf16.msra.mxu0 %v3309
        %3343 = vmatprep.subr.bf16.mxu0 %v3312
        %3344 = vmatpush1.bf16.msra.mxu0 %v3311
        %3345 = vmatprep.subr.bf16.mxu0 %v3314
        %3346 = vmatpush1.bf16.msra.mxu0 %v3313
        %3347 = vmatprep.subr.bf16.mxu0 0
        %3348 = vmatpush1.bf16.msra.mxu0 0
        %3349 = vmatprep.subr.bf16.mxu0 0
        %3350 = vmatpush1.bf16.msra.mxu0 0
        %3351 = vmatprep.subr.bf16.mxu0 0
        %3352 = vmatpush1.bf16.msra.mxu0 0
        %3353 = vmatprep.subr.bf16.mxu0 0
        %3354 = vmatpush1.bf16.msra.mxu0 0
        %3355 = vmatprep.subr.bf16.mxu0 0
        %3356 = vmatpush1.bf16.msra.mxu0 0
        %3357 = vmatprep.subr.bf16.mxu0 0
        %3358 = vmatpush1.bf16.msra.mxu0 0
        %3359 = vmatprep.subr.bf16.mxu0 0
        %3360 = vmatpush1.bf16.msra.mxu0 0
        %3361 = vmatprep.subr.bf16.mxu0 0
        %3362 = vmatpush1.bf16.msra.mxu0 0
        %3363 = vmatprep.mubr.bf16.mxu0 0
        %3364 = vmatmul.mubr.bf16.gmra.mrb[0].mxu0 %v3237
        %v3365 = vpop.f32.mrb[0].mxu0
        %v3366 = vadd.f32 %v3244, %v3365
        %v3367 = vpop.f32.mrb[0].mxu0
        %v3368 = vadd.f32 %v3248, %v3367
        %v3369 = vpop.f32.mrb[0].mxu0
        %v3370 = vadd.f32 %v3244, %v3369
        %v3371 = vpop.f32.mrb[0].mxu0
        %v3372 = vadd.f32 %v3248, %v3371
        %3373 = vmatprep.mubr.bf16.mxu0 0
        %3374 = vmatmul.mubr.bf16.gmra.mrb[0].mxu0 %v3238
        %v3375 = vpop.f32.mrb[0].mxu0
        %v3376 = vadd.f32 %v3244, %v3375
        %v3377 = vpop.f32.mrb[0].mxu0
        %v3378 = vadd.f32 %v3248, %v3377
        %v3379 = vpop.f32.mrb[0].mxu0
        %v3380 = vpop.f32.mrb[0].mxu0
        %3381 = vdwg.mxu0
        %v3382 = vmul.f32 %v3366, 0.5
        %v3383 = vmul.f32 %v3368, 0.5
        %v3384 = vmul.f32 %v3370, 0.5
        %v3385 = vmul.f32 %v3372, 0.5
        %v3386 = vmul.f32 %v3376, 0.5
        %v3387 = vmul.f32 %v3378, 0.5
        %v3388 = vmul.f32 %v3366, 0.70710677
        %v3389 = vmul.f32 %v3368, 0.70710677
        %v3390 = vmul.f32 %v3370, 0.70710677
        %v3391 = vmul.f32 %v3372, 0.70710677
        %v3392 = vmul.f32 %v3376, 0.70710677
        %v3393 = vmul.f32 %v3378, 0.70710677
        %v3394 = vand.u32 2147483647, %v3388
        %v3395 = vand.u32 2147483647, %v3389
        %v3396 = vand.u32 2147483647, %v3390
        %v3397 = vand.u32 2147483647, %v3391
        %v3398 = vand.u32 2147483647, %v3392
        %v3399 = vand.u32 2147483647, %v3393
        %v3400 = vmul.f32 %v3394, 0.3275911
        %v3401 = vmul.f32 %v3395, 0.3275911
        %v3402 = vmul.f32 %v3396, 0.3275911
        %v3403 = vmul.f32 %v3397, 0.3275911
        %v3404 = vmul.f32 %v3398, 0.3275911
        %v3405 = vmul.f32 %v3399, 0.3275911
        %v3406 = vadd.f32 %v3400, 1.0
        %v3407 = vadd.f32 %v3401, 1.0
        %v3408 = vadd.f32 %v3402, 1.0
        %v3409 = vadd.f32 %v3403, 1.0
        %v3410 = vadd.f32 %v3404, 1.0
        %v3411 = vadd.f32 %v3405, 1.0
        %v3412 = vrcp.pop %v3406
        %v3413 = vmul.f32 1.0, %v3412
        %v3414 = vrcp.pop %v3407
        %v3415 = vmul.f32 1.0, %v3414
        %v3416 = vrcp.pop %v3408
        %v3417 = vmul.f32 1.0, %v3416
        %v3418 = vrcp.pop %v3409
        %v3419 = vmul.f32 1.0, %v3418
        %v3420 = vrcp.pop %v3410
        %v3421 = vmul.f32 1.0, %v3420
        %v3422 = vrcp.pop %v3411
        %v3423 = vmul.f32 1.0, %v3422
        %v3424 = vmul.f32 %v3413, 1.0614054
        %v3425 = vmul.f32 %v3415, 1.0614054
        %v3426 = vmul.f32 %v3417, 1.0614054
        %v3427 = vmul.f32 %v3419, 1.0614054
        %v3428 = vmul.f32 %v3421, 1.0614054
        %v3429 = vmul.f32 %v3423, 1.0614054
        %v3430 = vadd.f32 %v3424, -1.4531521
        %v3431 = vadd.f32 %v3425, -1.4531521
        %v3432 = vadd.f32 %v3426, -1.4531521
        %v3433 = vadd.f32 %v3427, -1.4531521
        %v3434 = vadd.f32 %v3428, -1.4531521
        %v3435 = vadd.f32 %v3429, -1.4531521
        %v3436 = vmul.f32 %v3413, %v3430
        %v3437 = vmul.f32 %v3415, %v3431
        %v3438 = vmul.f32 %v3417, %v3432
        %v3439 = vmul.f32 %v3419, %v3433
        %v3440 = vmul.f32 %v3421, %v3434
        %v3441 = vmul.f32 %v3423, %v3435
        %v3442 = vadd.f32 %v3436, 1.4214138
        %v3443 = vadd.f32 %v3437, 1.4214138
        %v3444 = vadd.f32 %v3438, 1.4214138
        %v3445 = vadd.f32 %v3439, 1.4214138
        %v3446 = vadd.f32 %v3440, 1.4214138
        %v3447 = vadd.f32 %v3441, 1.4214138
        %v3448 = vmul.f32 %v3413, %v3442
        %v3449 = vmul.f32 %v3415, %v3443
        %v3450 = vmul.f32 %v3417, %v3444
        %v3451 = vmul.f32 %v3419, %v3445
        %v3452 = vmul.f32 %v3421, %v3446
        %v3453 = vmul.f32 %v3423, %v3447
        %v3454 = vadd.f32 %v3448, -0.28449672
        %v3455 = vadd.f32 %v3449, -0.28449672
        %v3456 = vadd.f32 %v3450, -0.28449672
        %v3457 = vadd.f32 %v3451, -0.28449672
        %v3458 = vadd.f32 %v3452, -0.28449672
        %v3459 = vadd.f32 %v3453, -0.28449672
        %v3460 = vmul.f32 %v3413, %v3454
        %v3461 = vmul.f32 %v3415, %v3455
        %v3462 = vmul.f32 %v3417, %v3456
        %v3463 = vmul.f32 %v3419, %v3457
        %v3464 = vmul.f32 %v3421, %v3458
        %v3465 = vmul.f32 %v3423, %v3459
        %v3466 = vadd.f32 %v3460, 0.2548296
        %v3467 = vadd.f32 %v3461, 0.2548296
        %v3468 = vadd.f32 %v3462, 0.2548296
        %v3469 = vadd.f32 %v3463, 0.2548296
        %v3470 = vadd.f32 %v3464, 0.2548296
        %v3471 = vadd.f32 %v3465, 0.2548296
        %v3472 = vmul.f32 %v3413, %v3466
        %v3473 = vmul.f32 %v3415, %v3467
        %v3474 = vmul.f32 %v3417, %v3468
        %v3475 = vmul.f32 %v3419, %v3469
        %v3476 = vmul.f32 %v3421, %v3470
        %v3477 = vmul.f32 %v3423, %v3471
        %v3478 = vsub.f32 0.0, %v3394
        %v3479 = vsub.f32 0.0, %v3395
        %v3480 = vsub.f32 0.0, %v3396
        %v3481 = vsub.f32 0.0, %v3397
        %v3482 = vsub.f32 0.0, %v3398
        %v3483 = vsub.f32 0.0, %v3399
        %v3484 = vmul.f32 %v3478, %v3394
        %v3485 = vmul.f32 %v3479, %v3395
        %v3486 = vmul.f32 %v3480, %v3396
        %v3487 = vmul.f32 %v3481, %v3397
        %v3488 = vmul.f32 %v3482, %v3398
        %v3489 = vmul.f32 %v3483, %v3399
        %v3490 = vmul.f32 %v3484, 1.442695
        %v3491 = vpow.pop %v3490
        %v3492 = vmul.f32 %v3485, 1.442695
        %v3493 = vpow.pop %v3492
        %v3494 = vmul.f32 %v3486, 1.442695
        %v3495 = vpow.pop %v3494
        %v3496 = vmul.f32 %v3487, 1.442695
        %v3497 = vpow.pop %v3496
        %v3498 = vmul.f32 %v3488, 1.442695
        %v3499 = vpow.pop %v3498
        %v3500 = vmul.f32 %v3489, 1.442695
        %v3501 = vpow.pop %v3500
        %v3502 = vmul.f32 %v3472, %v3491
        %v3503 = vmul.f32 %v3473, %v3493
        %v3504 = vmul.f32 %v3474, %v3495
        %v3505 = vmul.f32 %v3475, %v3497
        %v3506 = vmul.f32 %v3476, %v3499
        %v3507 = vmul.f32 %v3477, %v3501
        %v3508 = vsub.f32 1.0, %v3502
        %v3509 = vsub.f32 1.0, %v3503
        %v3510 = vsub.f32 1.0, %v3504
        %v3511 = vsub.f32 1.0, %v3505
        %v3512 = vsub.f32 1.0, %v3506
        %v3513 = vsub.f32 1.0, %v3507
        %vm3514 = vcmp.ge.f32.partialorder %v3388, 0.0
        %vm3515 = vcmp.ge.f32.partialorder %v3389, 0.0
        %vm3516 = vcmp.ge.f32.partialorder %v3390, 0.0
        %vm3517 = vcmp.ge.f32.partialorder %v3391, 0.0
        %vm3518 = vcmp.ge.f32.partialorder %v3392, 0.0
        %vm3519 = vcmp.ge.f32.partialorder %v3393, 0.0
        %v3520 = vsub.f32 0.0, %v3508
        %v3521 = vsub.f32 0.0, %v3509
        %v3522 = vsub.f32 0.0, %v3510
        %v3523 = vsub.f32 0.0, %v3511
        %v3524 = vsub.f32 0.0, %v3512
        %v3525 = vsub.f32 0.0, %v3513
        %v3526 = vsel %vm3514, %v3508, %v3520
        %v3527 = vsel %vm3515, %v3509, %v3521
        %v3528 = vsel %vm3516, %v3510, %v3522
        %v3529 = vsel %vm3517, %v3511, %v3523
        %v3530 = vsel %vm3518, %v3512, %v3524
        %v3531 = vsel %vm3519, %v3513, %v3525
        %v3532 = vadd.f32 %v3526, 1.0
        %v3533 = vadd.f32 %v3527, 1.0
        %v3534 = vadd.f32 %v3528, 1.0
        %v3535 = vadd.f32 %v3529, 1.0
        %v3536 = vadd.f32 %v3530, 1.0
        %v3537 = vadd.f32 %v3531, 1.0
        %v3538 = vmul.f32 %v3382, %v3532
        %v3539 = vmul.f32 %v3383, %v3533
        %v3540 = vmul.f32 %v3384, %v3534
        %v3541 = vmul.f32 %v3385, %v3535
        %v3542 = vmul.f32 %v3386, %v3536
        %v3543 = vmul.f32 %v3387, %v3537
        %v3544 = vld [vmem:[%s968] sm:$0xf]
        %v3545 = vld [vmem:[%s968 + $0x4] sm:$0xf]
        %v3546 = vld [vmem:[%s968 + $0x8] sm:$0xf]
        %v3547 = vld [vmem:[%s968 + $0xc] sm:$0xf]
        %v3548 = vld [vmem:[%s968 + $0x10] sm:$0xf]
        %v3549 = vld [vmem:[%s968 + $0x14] sm:$0xf]
        %v3550 = vld [vmem:[%s968 + $0x18] sm:$0xf]
        %v3551 = vld [vmem:[%s968 + $0x1c] sm:$0xf]
        %v3552 = vld [vmem:[%s968 + $0x20] sm:$0xf]
        %v3553 = vld [vmem:[%s968 + $0x24] sm:$0xf]
        %v3554 = vld [vmem:[%s968 + $0x28] sm:$0xf]
        %v3555 = vld [vmem:[%s968 + $0x2c] sm:$0xf]
        %v3556 = vld [vmem:[%s968 + $0x30] sm:$0xf]
        %v3557 = vld [vmem:[%s968 + $0x34] sm:$0xf]
        %v3558 = vld [vmem:[%s968 + $0x38] sm:$0xf]
        %v3559 = vld [vmem:[%s968 + $0x3c] sm:$0xf]
        %v3560 = vld [vmem:[%s968 + $0x40] sm:$0xf]
        %v3561 = vld [vmem:[%s968 + $0x44] sm:$0xf]
        %v3562 = vld [vmem:[%s968 + $0x48] sm:$0xf]
        %v3563 = vld [vmem:[%s968 + $0x4c] sm:$0xf]
        %v3564 = vld [vmem:[%s968 + $0x50] sm:$0xf]
        %v3565 = vld [vmem:[%s968 + $0x54] sm:$0xf]
        %v3566 = vld [vmem:[%s968 + $0x58] sm:$0xf]
        %v3567 = vld [vmem:[%s968 + $0x5c] sm:$0xf]
        %v3568 = vld [vmem:[%s968 + $0x60] sm:$0xf]
        %v3569 = vld [vmem:[%s968 + $0x64] sm:$0xf]
        %v3570 = vld [vmem:[%s968 + $0x68] sm:$0xf]
        %v3571 = vld [vmem:[%s968 + $0x6c] sm:$0xf]
        %v3572 = vld [vmem:[%s968 + $0x70] sm:$0xf]
        %v3573 = vld [vmem:[%s968 + $0x74] sm:$0xf]
        %v3574 = vld [vmem:[%s968 + $0x78] sm:$0xf]
        %v3575 = vld [vmem:[%s968 + $0x7c] sm:$0xf]
        %v3576 = vpack.c.bf16 %v3540, %v3538
        %v3577 = vpack.c.bf16 %v3541, %v3539
        %v3578 = vpack.c.bf16 %v3542, %v3542
        %v3579 = vpack.c.bf16 %v3543, %v3543
        %v3612 = vunpack.c.l.b16 %v3544
        %v3613 = vunpack.c.l.b16 %v3545
        %v3614 = vunpack.c.l.b16 %v3546
        %v3615 = vunpack.c.l.b16 %v3547
        %v3616 = vunpack.c.l.b16 %v3548
        %v3617 = vunpack.c.l.b16 %v3549
        %v3618 = vunpack.c.l.b16 %v3550
        %v3619 = vunpack.c.l.b16 %v3551
        %v3620 = vunpack.c.l.b16 %v3552
        %v3621 = vunpack.c.l.b16 %v3553
        %v3622 = vunpack.c.l.b16 %v3554
        %v3623 = vunpack.c.l.b16 %v3555
        %v3624 = vunpack.c.l.b16 %v3556
        %v3625 = vunpack.c.l.b16 %v3557
        %v3626 = vunpack.c.l.b16 %v3558
        %v3627 = vunpack.c.l.b16 %v3559
        %v3628 = vunpack.c.l.b16 %v3560
        %v3629 = vunpack.c.l.b16 %v3561
        %v3630 = vunpack.c.l.b16 %v3562
        %v3631 = vunpack.c.l.b16 %v3563
        %v3632 = vunpack.c.l.b16 %v3564
        %v3633 = vunpack.c.l.b16 %v3565
        %v3634 = vunpack.c.l.b16 %v3566
        %v3635 = vunpack.c.l.b16 %v3567
        %v3636 = vunpack.c.l.b16 %v3568
        %v3637 = vunpack.c.l.b16 %v3569
        %v3638 = vunpack.c.l.b16 %v3570
        %v3639 = vunpack.c.l.b16 %v3571
        %v3640 = vunpack.c.l.b16 %v3572
        %v3641 = vunpack.c.l.b16 %v3573
        %v3642 = vunpack.c.l.b16 %v3574
        %v3643 = vunpack.c.l.b16 %v3575
        %v3644 = vpack.c.b16 %v3613, %v3612
        %v3645 = vpack.c.b16 %v3615, %v3614
        %v3646 = vpack.c.b16 %v3617, %v3616
        %v3647 = vpack.c.b16 %v3619, %v3618
        %v3648 = vpack.c.b16 %v3621, %v3620
        %v3649 = vpack.c.b16 %v3623, %v3622
        %v3650 = vpack.c.b16 %v3625, %v3624
        %v3651 = vpack.c.b16 %v3627, %v3626
        %v3652 = vpack.c.b16 %v3629, %v3628
        %v3653 = vpack.c.b16 %v3631, %v3630
        %v3654 = vpack.c.b16 %v3633, %v3632
        %v3655 = vpack.c.b16 %v3635, %v3634
        %v3656 = vpack.c.b16 %v3637, %v3636
        %v3657 = vpack.c.b16 %v3639, %v3638
        %v3658 = vpack.c.b16 %v3641, %v3640
        %v3659 = vpack.c.b16 %v3643, %v3642
        %3676 = vmatprep.subr.bf16.mxu0 0
        %3677 = vmatpush1.bf16.msra.mxu0 %v3644
        %3678 = vmatprep.subr.bf16.mxu0 0
        %3679 = vmatpush1.bf16.msra.mxu0 %v3645
        %3680 = vmatprep.subr.bf16.mxu0 0
        %3681 = vmatpush1.bf16.msra.mxu0 %v3646
        %3682 = vmatprep.subr.bf16.mxu0 0
        %3683 = vmatpush1.bf16.msra.mxu0 %v3647
        %3684 = vmatprep.subr.bf16.mxu0 0
        %3685 = vmatpush1.bf16.msra.mxu0 %v3648
        %3686 = vmatprep.subr.bf16.mxu0 0
        %3687 = vmatpush1.bf16.msra.mxu0 %v3649
        %3688 = vmatprep.subr.bf16.mxu0 0
        %3689 = vmatpush1.bf16.msra.mxu0 %v3650
        %3690 = vmatprep.subr.bf16.mxu0 0
        %3691 = vmatpush1.bf16.msra.mxu0 %v3651
        %3692 = vmatprep.subr.bf16.mxu0 0
        %3693 = vmatpush1.bf16.msra.mxu0 %v3652
        %3694 = vmatprep.subr.bf16.mxu0 0
        %3695 = vmatpush1.bf16.msra.mxu0 %v3653
        %3696 = vmatprep.subr.bf16.mxu0 0
        %3697 = vmatpush1.bf16.msra.mxu0 %v3654
        %3698 = vmatprep.subr.bf16.mxu0 0
        %3699 = vmatpush1.bf16.msra.mxu0 %v3655
        %3700 = vmatprep.subr.bf16.mxu0 0
        %3701 = vmatpush1.bf16.msra.mxu0 %v3656
        %3702 = vmatprep.subr.bf16.mxu0 0
        %3703 = vmatpush1.bf16.msra.mxu0 %v3657
        %3704 = vmatprep.subr.bf16.mxu0 0
        %3705 = vmatpush1.bf16.msra.mxu0 %v3658
        %3706 = vmatprep.subr.bf16.mxu0 0
        %3707 = vmatpush1.bf16.msra.mxu0 %v3659
        %3708 = vmatprep.mubr.bf16.mxu0 %v3577
        %3709 = vmatmul.mubr.bf16.gmra.mrb[0].mxu0 %v3576
        %v3710 = vpop.f32.mrb[0].mxu0
        %v3711 = vadd.f32 0.0, %v3710
        %v3712 = vpop.f32.mrb[0].mxu0
        %v3713 = vpop.f32.mrb[0].mxu0
        %v3714 = vadd.f32 0.0, %v3713
        %v3715 = vpop.f32.mrb[0].mxu0
        %3716 = vmatprep.mubr.bf16.mxu0 %v3579
        %3717 = vmatmul.mubr.bf16.gmra.mrb[0].mxu0 %v3578
        %v3718 = vpop.f32.mrb[0].mxu0
        %v3719 = vadd.f32 0.0, %v3718
        %v3720 = vpop.f32.mrb[0].mxu0
        %v3721 = vpop.f32.mrb[0].mxu0
        %v3722 = vpop.f32.mrb[0].mxu0
        %3723 = vdwg.mxu0
        %v3724 = vadd.f32 %v3159, %v3711
        %v3725 = vadd.f32 %v3160, %v3714
        %v3726 = vadd.f32 %v3161, %v3719
        %v3727 = vld [vmem:[%s971] sm:$0x1]
        %v3729 = vlaneseq
        %v3730 = vshrl.u32 %v3729, 7
        %v3731 = vsub.s32 0, %v3730
        %v3732 = vrot.slane %v3727, %v3731
        %v3734 = vadd.f32 %v3724, %v3732
        %v3735 = vadd.f32 %v3725, %v3732
        %v3736 = vadd.f32 %v3726, %v3732
        %v3737 = vsel %vm1179, 1, 0
        %v3738 = vsel %vm1180, 1, 0
        %v3739 = vsel %vm1181, 1, 0
        %vm3740 = vcmp.eq.s32.totalorder %v3737, 1
        %vm3741 = vcmp.eq.s32.totalorder %v3738, 1
        %vm3742 = vcmp.eq.s32.totalorder %v3739, 1
        %v3743 = vsel %vm3740, %v3734, 0.0
        %v3744 = vsel %vm3741, %v3735, 0.0
        %v3745 = vsel %vm3742, %v3736, 0.0
        %3746 = vst [vmem:[#allocation2] sm:$0xff] %v3743
        %3747 = vst [vmem:[#allocation2 + $0x8] sm:$0xff] %v3744
        %3748 = vst [vmem:[#allocation2 + $0x10] sm:$0xff] %v3745
        %p3749 = scmp.eq.s32.totalorder %s44, 1
        // Predicated region
        $region125: #{vit_forward.1} parent=119 // pred_check
          %p3750 = pneg %p3749
        $region126: #{vit_forward.1} parent=119 // pred_check_branch
          %3752 = sbr.rel (%p3750) target = $region128
        $region127: #{vit_forward.1} parent=119 // pred_region
          %v3753 = vld [vmem:[%s15] sm:$0x1]
          %v3754 = vld [vmem:[%s16] sm:$0x1]
          %vm3755 = vcmask 1040384
          %v3756 = vsel %vm3755, %v3743, 0.0
          %3757 = vadd.xlane.f32.xlu0 %v3756
          %v3758 = vpop.xlane.xlu0 %3757
          %v3759 = vmul.f32 %v3758, 0.015625
          %v3760 = vmul.f32 %v3743, %v3743
          %v3761 = vsel %vm3755, %v3760, 0.0
          %3762 = vadd.xlane.f32.xlu0 %v3761
          %v3763 = vpop.xlane.xlu0 %3762
          %v3764 = vmul.f32 %v3763, 0.015625
          %v3765 = vmul.f32 %v3759, %v3759
          %v3766 = vsub.f32 %v3764, %v3765
          %v3767 = vsub.f32 %v3743, %v3759
          %v3768 = vadd.f32 %v3766, 1e-06
          %v3769 = vrsqrt.pop %v3768
          %v3770 = vmul.f32 %v3767, %v3769
          %v3771 = vmul.f32 %v3770, %v3753
          %v3772 = vadd.f32 %v3771, %v3754
          %v3773 = vld [vmem:[%s17] sm:$0x1]
          %v3774 = vld [vmem:[%s18] sm:$0x1]
          %v3775 = vsel %vm3755, %v3772, 0.0
          %3776 = vadd.xlane.f32.xlu0 %v3775
          %v3777 = vpop.xlane.xlu0 %3776
          %v3778 = vmul.f32 %v3777, 0.015625
          %v3779 = vmul.f32 %v3772, %v3772
          %v3780 = vsel %vm3755, %v3779, 0.0
          %3781 = vadd.xlane.f32.xlu0 %v3780
          %v3782 = vpop.xlane.xlu0 %3781
          %v3783 = vmul.f32 %v3782, 0.015625
          %v3784 = vmul.f32 %v3778, %v3778
          %v3785 = vsub.f32 %v3783, %v3784
          %v3786 = vsub.f32 %v3772, %v3778
          %v3787 = vadd.f32 %v3785, 1e-05
          %v3788 = vrsqrt.pop %v3787
          %v3789 = vmul.f32 %v3786, %v3788
          %v3790 = vmul.f32 %v3789, %v3773
          %v3791 = vadd.f32 %v3790, %v3774
          %v3792 = vld [vmem:[%s19] sm:$0xf]
          %v3793 = vld [vmem:[%s19 + $0x4] sm:$0xf]
          %v3794 = vld [vmem:[%s19 + $0x8] sm:$0xf]
          %v3795 = vld [vmem:[%s19 + $0xc] sm:$0xf]
          %v3796 = vld [vmem:[%s19 + $0x10] sm:$0xf]
          %v3797 = vld [vmem:[%s19 + $0x14] sm:$0xf]
          %v3798 = vld [vmem:[%s19 + $0x18] sm:$0xf]
          %v3799 = vld [vmem:[%s19 + $0x1c] sm:$0xf]
          %v3800 = vld [vmem:[%s19 + $0x20] sm:$0xf]
          %v3801 = vld [vmem:[%s19 + $0x24] sm:$0xf]
          %v3802 = vld [vmem:[%s19 + $0x28] sm:$0xf]
          %v3803 = vld [vmem:[%s19 + $0x2c] sm:$0xf]
          %v3804 = vld [vmem:[%s19 + $0x30] sm:$0xf]
          %v3805 = vld [vmem:[%s19 + $0x34] sm:$0xf]
          %v3806 = vld [vmem:[%s19 + $0x38] sm:$0xf]
          %v3807 = vld [vmem:[%s19 + $0x3c] sm:$0xf]
          %v3808 = vpack.c.bf16 %v3791, %v3791
          %v3809 = vld [vmem:[%s20] sm:$0x1]
          %v3826 = vunpack.c.l.b16 %v3792
          %v3827 = vunpack.c.l.b16 %v3793
          %v3828 = vunpack.c.l.b16 %v3794
          %v3829 = vunpack.c.l.b16 %v3795
          %v3830 = vunpack.c.l.b16 %v3796
          %v3831 = vunpack.c.l.b16 %v3797
          %v3832 = vunpack.c.l.b16 %v3798
          %v3833 = vunpack.c.l.b16 %v3799
          %v3834 = vunpack.c.l.b16 %v3800
          %v3835 = vunpack.c.l.b16 %v3801
          %v3836 = vunpack.c.l.b16 %v3802
          %v3837 = vunpack.c.l.b16 %v3803
          %v3838 = vunpack.c.l.b16 %v3804
          %v3839 = vunpack.c.l.b16 %v3805
          %v3840 = vunpack.c.l.b16 %v3806
          %v3841 = vunpack.c.l.b16 %v3807
          %v3842 = vpack.c.b16 %v3827, %v3826
          %v3843 = vpack.c.b16 %v3829, %v3828
          %v3844 = vpack.c.b16 %v3831, %v3830
          %v3845 = vpack.c.b16 %v3833, %v3832
          %v3846 = vpack.c.b16 %v3835, %v3834
          %v3847 = vpack.c.b16 %v3837, %v3836
          %v3848 = vpack.c.b16 %v3839, %v3838
          %v3849 = vpack.c.b16 %v3841, %v3840
          %3858 = vmatprep.subr.bf16.mxu0 0
          %3859 = vmatpush1.bf16.msra.mxu0 %v3842
          %3860 = vmatprep.subr.bf16.mxu0 0
          %3861 = vmatpush1.bf16.msra.mxu0 %v3843
          %3862 = vmatprep.subr.bf16.mxu0 0
          %3863 = vmatpush1.bf16.msra.mxu0 %v3844
          %3864 = vmatprep.subr.bf16.mxu0 0
          %3865 = vmatpush1.bf16.msra.mxu0 %v3845
          %3866 = vmatprep.subr.bf16.mxu0 0
          %3867 = vmatpush1.bf16.msra.mxu0 %v3846
          %3868 = vmatprep.subr.bf16.mxu0 0
          %3869 = vmatpush1.bf16.msra.mxu0 %v3847
          %3870 = vmatprep.subr.bf16.mxu0 0
          %3871 = vmatpush1.bf16.msra.mxu0 %v3848
          %3872 = vmatprep.subr.bf16.mxu0 0
          %3873 = vmatpush1.bf16.msra.mxu0 %v3849
          %3874 = vmatprep.subr.bf16.mxu0 0
          %3875 = vmatpush1.bf16.msra.mxu0 0
          %3876 = vmatprep.subr.bf16.mxu0 0
          %3877 = vmatpush1.bf16.msra.mxu0 0
          %3878 = vmatprep.subr.bf16.mxu0 0
          %3879 = vmatpush1.bf16.msra.mxu0 0
          %3880 = vmatprep.subr.bf16.mxu0 0
          %3881 = vmatpush1.bf16.msra.mxu0 0
          %3882 = vmatprep.subr.bf16.mxu0 0
          %3883 = vmatpush1.bf16.msra.mxu0 0
          %3884 = vmatprep.subr.bf16.mxu0 0
          %3885 = vmatpush1.bf16.msra.mxu0 0
          %3886 = vmatprep.subr.bf16.mxu0 0
          %3887 = vmatpush1.bf16.msra.mxu0 0
          %3888 = vmatprep.subr.bf16.mxu0 0
          %3889 = vmatpush1.bf16.msra.mxu0 0
          %3890 = vmatprep.mubr.bf16.mxu0 0
          %3891 = vmatmul.mubr.bf16.gmra.mrb[0].mxu0 %v3808
          %v3892 = vpop.f32.mrb[0].mxu0
          %v3893 = vadd.f32 %v3809, %v3892
          %v3894 = vpop.f32.mrb[0].mxu0
          %v3895 = vpop.f32.mrb[0].mxu0
          %v3896 = vpop.f32.mrb[0].mxu0
          %3897 = vdwg.mxu0
          %v3898 = vmul.f32 %v3893, 0.5
          %v3899 = vmul.f32 %v3893, 0.70710677
          %v3900 = vand.u32 2147483647, %v3899
          %v3901 = vmul.f32 %v3900, 0.3275911
          %v3902 = vadd.f32 %v3901, 1.0
          %v3903 = vrcp.pop %v3902
          %v3904 = vmul.f32 1.0, %v3903
          %v3905 = vmul.f32 %v3904, 1.0614054
          %v3906 = vadd.f32 %v3905, -1.4531521
          %v3907 = vmul.f32 %v3904, %v3906
          %v3908 = vadd.f32 %v3907, 1.4214138
          %v3909 = vmul.f32 %v3904, %v3908
          %v3910 = vadd.f32 %v3909, -0.28449672
          %v3911 = vmul.f32 %v3904, %v3910
          %v3912 = vadd.f32 %v3911, 0.2548296
          %v3913 = vmul.f32 %v3904, %v3912
          %v3914 = vsub.f32 0.0, %v3900
          %v3915 = vmul.f32 %v3914, %v3900
          %v3916 = vmul.f32 %v3915, 1.442695
          %v3917 = vpow.pop %v3916
          %v3918 = vmul.f32 %v3913, %v3917
          %v3919 = vsub.f32 1.0, %v3918
          %vm3920 = vcmp.ge.f32.partialorder %v3899, 0.0
          %v3921 = vsub.f32 0.0, %v3919
          %v3922 = vsel %vm3920, %v3919, %v3921
          %v3923 = vadd.f32 %v3922, 1.0
          %v3924 = vmul.f32 %v3898, %v3923
          %v3925 = vld [vmem:[%s21] sm:$0xf]
          %v3926 = vld [vmem:[%s21 + $0x4] sm:$0xf]
          %v3927 = vld [vmem:[%s21 + $0x8] sm:$0xf]
          %v3928 = vld [vmem:[%s21 + $0xc] sm:$0xf]
          %v3929 = vld [vmem:[%s21 + $0x10] sm:$0xf]
          %v3930 = vld [vmem:[%s21 + $0x14] sm:$0xf]
          %v3931 = vld [vmem:[%s21 + $0x18] sm:$0xf]
          %v3932 = vld [vmem:[%s21 + $0x1c] sm:$0xf]
          %v3933 = vld [vmem:[%s21 + $0x20] sm:$0xf]
          %v3934 = vld [vmem:[%s21 + $0x24] sm:$0xf]
          %v3935 = vld [vmem:[%s21 + $0x28] sm:$0xf]
          %v3936 = vld [vmem:[%s21 + $0x2c] sm:$0xf]
          %v3937 = vld [vmem:[%s21 + $0x30] sm:$0xf]
          %v3938 = vld [vmem:[%s21 + $0x34] sm:$0xf]
          %v3939 = vld [vmem:[%s21 + $0x38] sm:$0xf]
          %v3940 = vld [vmem:[%s21 + $0x3c] sm:$0xf]
          %v3941 = vpack.c.bf16 %v3924, %v3924
          %v3942 = vld [vmem:[%s22] sm:$0x1]
          %v3959 = vunpack.c.l.b16 %v3925
          %v3960 = vunpack.c.l.b16 %v3926
          %v3961 = vunpack.c.l.b16 %v3927
          %v3962 = vunpack.c.l.b16 %v3928
          %v3963 = vunpack.c.l.b16 %v3929
          %v3964 = vunpack.c.l.b16 %v3930
          %v3965 = vunpack.c.l.b16 %v3931
          %v3966 = vunpack.c.l.b16 %v3932
          %v3967 = vunpack.c.l.b16 %v3933
          %v3968 = vunpack.c.l.b16 %v3934
          %v3969 = vunpack.c.l.b16 %v3935
          %v3970 = vunpack.c.l.b16 %v3936
          %v3971 = vunpack.c.l.b16 %v3937
          %v3972 = vunpack.c.l.b16 %v3938
          %v3973 = vunpack.c.l.b16 %v3939
          %v3974 = vunpack.c.l.b16 %v3940
          %v3975 = vpack.c.b16 %v3960, %v3959
          %v3976 = vpack.c.b16 %v3962, %v3961
          %v3977 = vpack.c.b16 %v3964, %v3963
          %v3978 = vpack.c.b16 %v3966, %v3965
          %v3979 = vpack.c.b16 %v3968, %v3967
          %v3980 = vpack.c.b16 %v3970, %v3969
          %v3981 = vpack.c.b16 %v3972, %v3971
          %v3982 = vpack.c.b16 %v3974, %v3973
          %3991 = vmatprep.subr.bf16.mxu0 0
          %3992 = vmatpush1.bf16.msra.mxu0 %v3975
          %3993 = vmatprep.subr.bf16.mxu0 0
          %3994 = vmatpush1.bf16.msra.mxu0 %v3976
          %3995 = vmatprep.subr.bf16.mxu0 0
          %3996 = vmatpush1.bf16.msra.mxu0 %v3977
          %3997 = vmatprep.subr.bf16.mxu0 0
          %3998 = vmatpush1.bf16.msra.mxu0 %v3978
          %3999 = vmatprep.subr.bf16.mxu0 0
          %4000 = vmatpush1.bf16.msra.mxu0 %v3979
          %4001 = vmatprep.subr.bf16.mxu0 0
          %4002 = vmatpush1.bf16.msra.mxu0 %v3980
          %4003 = vmatprep.subr.bf16.mxu0 0
          %4004 = vmatpush1.bf16.msra.mxu0 %v3981
          %4005 = vmatprep.subr.bf16.mxu0 0
          %4006 = vmatpush1.bf16.msra.mxu0 %v3982
          %4007 = vmatprep.subr.bf16.mxu0 0
          %4008 = vmatpush1.bf16.msra.mxu0 0
          %4009 = vmatprep.subr.bf16.mxu0 0
          %4010 = vmatpush1.bf16.msra.mxu0 0
          %4011 = vmatprep.subr.bf16.mxu0 0
          %4012 = vmatpush1.bf16.msra.mxu0 0
          %4013 = vmatprep.subr.bf16.mxu0 0
          %4014 = vmatpush1.bf16.msra.mxu0 0
          %4015 = vmatprep.subr.bf16.mxu0 0
          %4016 = vmatpush1.bf16.msra.mxu0 0
          %4017 = vmatprep.subr.bf16.mxu0 0
          %4018 = vmatpush1.bf16.msra.mxu0 0
          %4019 = vmatprep.subr.bf16.mxu0 0
          %4020 = vmatpush1.bf16.msra.mxu0 0
          %4021 = vmatprep.subr.bf16.mxu0 0
          %4022 = vmatpush1.bf16.msra.mxu0 0
          %4023 = vmatprep.mubr.bf16.mxu0 0
          %4024 = vmatmul.mubr.bf16.gmra.mrb[0].mxu0 %v3941
          %v4025 = vpop.f32.mrb[0].mxu0
          %v4026 = vadd.f32 %v3942, %v4025
          %v4027 = vpop.f32.mrb[0].mxu0
          %v4028 = vpop.f32.mrb[0].mxu0
          %v4029 = vpop.f32.mrb[0].mxu0
          %4030 = vdwg.mxu0
          %v4031 = vmul.f32 %v4026, 0.5
          %v4032 = vmul.f32 %v4026, 0.70710677
          %v4033 = vand.u32 2147483647, %v4032
          %v4034 = vmul.f32 %v4033, 0.3275911
          %v4035 = vadd.f32 %v4034, 1.0
          %v4036 = vrcp.pop %v4035
          %v4037 = vmul.f32 1.0, %v4036
          %v4038 = vmul.f32 %v4037, 1.0614054
          %v4039 = vadd.f32 %v4038, -1.4531521
          %v4040 = vmul.f32 %v4037, %v4039
          %v4041 = vadd.f32 %v4040, 1.4214138
          %v4042 = vmul.f32 %v4037, %v4041
          %v4043 = vadd.f32 %v4042, -0.28449672
          %v4044 = vmul.f32 %v4037, %v4043
          %v4045 = vadd.f32 %v4044, 0.2548296
          %v4046 = vmul.f32 %v4037, %v4045
          %v4047 = vsub.f32 0.0, %v4033
          %v4048 = vmul.f32 %v4047, %v4033
          %v4049 = vmul.f32 %v4048, 1.442695
          %v4050 = vpow.pop %v4049
          %v4051 = vmul.f32 %v4046, %v4050
          %v4052 = vsub.f32 1.0, %v4051
          %vm4053 = vcmp.ge.f32.partialorder %v4032, 0.0
          %v4054 = vsub.f32 0.0, %v4052
          %v4055 = vsel %vm4053, %v4052, %v4054
          %v4056 = vadd.f32 %v4055, 1.0
          %v4057 = vmul.f32 %v4031, %v4056
          %v4058 = vld [vmem:[%s23] sm:$0xf]
          %v4059 = vld [vmem:[%s23 + $0x4] sm:$0xf]
          %v4060 = vld [vmem:[%s23 + $0x8] sm:$0xf]
          %v4061 = vld [vmem:[%s23 + $0xc] sm:$0xf]
          %v4062 = vld [vmem:[%s23 + $0x10] sm:$0xf]
          %v4063 = vld [vmem:[%s23 + $0x14] sm:$0xf]
          %v4064 = vld [vmem:[%s23 + $0x18] sm:$0xf]
          %v4065 = vld [vmem:[%s23 + $0x1c] sm:$0xf]
          %v4066 = vld [vmem:[%s23 + $0x20] sm:$0xf]
          %v4067 = vld [vmem:[%s23 + $0x24] sm:$0xf]
          %v4068 = vld [vmem:[%s23 + $0x28] sm:$0xf]
          %v4069 = vld [vmem:[%s23 + $0x2c] sm:$0xf]
          %v4070 = vld [vmem:[%s23 + $0x30] sm:$0xf]
          %v4071 = vld [vmem:[%s23 + $0x34] sm:$0xf]
          %v4072 = vld [vmem:[%s23 + $0x38] sm:$0xf]
          %v4073 = vld [vmem:[%s23 + $0x3c] sm:$0xf]
          %v4074 = vpack.c.bf16 %v4057, %v4057
          %v4075 = vld [vmem:[%s24] sm:$0x1]
          %v4092 = vunpack.c.l.b16 %v4058
          %v4093 = vunpack.c.l.b16 %v4059
          %v4094 = vunpack.c.l.b16 %v4060
          %v4095 = vunpack.c.l.b16 %v4061
          %v4096 = vunpack.c.l.b16 %v4062
          %v4097 = vunpack.c.l.b16 %v4063
          %v4098 = vunpack.c.l.b16 %v4064
          %v4099 = vunpack.c.l.b16 %v4065
          %v4100 = vunpack.c.l.b16 %v4066
          %v4101 = vunpack.c.l.b16 %v4067
          %v4102 = vunpack.c.l.b16 %v4068
          %v4103 = vunpack.c.l.b16 %v4069
          %v4104 = vunpack.c.l.b16 %v4070
          %v4105 = vunpack.c.l.b16 %v4071
          %v4106 = vunpack.c.l.b16 %v4072
          %v4107 = vunpack.c.l.b16 %v4073
          %v4108 = vpack.c.b16 %v4093, %v4092
          %v4109 = vpack.c.b16 %v4095, %v4094
          %v4110 = vpack.c.b16 %v4097, %v4096
          %v4111 = vpack.c.b16 %v4099, %v4098
          %v4112 = vpack.c.b16 %v4101, %v4100
          %v4113 = vpack.c.b16 %v4103, %v4102
          %v4114 = vpack.c.b16 %v4105, %v4104
          %v4115 = vpack.c.b16 %v4107, %v4106
          %4124 = vmatprep.subr.bf16.mxu0 0
          %4125 = vmatpush1.bf16.msra.mxu0 %v4108
          %4126 = vmatprep.subr.bf16.mxu0 0
          %4127 = vmatpush1.bf16.msra.mxu0 %v4109
          %4128 = vmatprep.subr.bf16.mxu0 0
          %4129 = vmatpush1.bf16.msra.mxu0 %v4110
          %4130 = vmatprep.subr.bf16.mxu0 0
          %4131 = vmatpush1.bf16.msra.mxu0 %v4111
          %4132 = vmatprep.subr.bf16.mxu0 0
          %4133 = vmatpush1.bf16.msra.mxu0 %v4112
          %4134 = vmatprep.subr.bf16.mxu0 0
          %4135 = vmatpush1.bf16.msra.mxu0 %v4113
          %4136 = vmatprep.subr.bf16.mxu0 0
          %4137 = vmatpush1.bf16.msra.mxu0 %v4114
          %4138 = vmatprep.subr.bf16.mxu0 0
          %4139 = vmatpush1.bf16.msra.mxu0 %v4115
          %4140 = vmatprep.subr.bf16.mxu0 0
          %4141 = vmatpush1.bf16.msra.mxu0 0
          %4142 = vmatprep.subr.bf16.mxu0 0
          %4143 = vmatpush1.bf16.msra.mxu0 0
          %4144 = vmatprep.subr.bf16.mxu0 0
          %4145 = vmatpush1.bf16.msra.mxu0 0
          %4146 = vmatprep.subr.bf16.mxu0 0
          %4147 = vmatpush1.bf16.msra.mxu0 0
          %4148 = vmatprep.subr.bf16.mxu0 0
          %4149 = vmatpush1.bf16.msra.mxu0 0
          %4150 = vmatprep.subr.bf16.mxu0 0
          %4151 = vmatpush1.bf16.msra.mxu0 0
          %4152 = vmatprep.subr.bf16.mxu0 0
          %4153 = vmatpush1.bf16.msra.mxu0 0
          %4154 = vmatprep.subr.bf16.mxu0 0
          %4155 = vmatpush1.bf16.msra.mxu0 0
          %4156 = vmatprep.mubr.bf16.mxu0 0
          %4157 = vmatmul.mubr.bf16.gmra.mrb[0].mxu0 %v4074
          %v4158 = vpop.f32.mrb[0].mxu0
          %v4159 = vadd.f32 %v4075, %v4158
          %v4160 = vpop.f32.mrb[0].mxu0
          %v4161 = vpop.f32.mrb[0].mxu0
          %v4162 = vpop.f32.mrb[0].mxu0
          %4163 = vdwg.mxu0
          %4164 = vst [vmem:[%s920] sm:$0x1] %v4159
        $region128: #{vit_forward.1} parent=119 // pred_fallthru
          _
        %s4165 = sand.u32 %s649, 1
        %s4166 = scalar_lea.sflag [#allocation4], %s4165
        %s4167 = sand.u32 %s649, 1
        %s4168 = scalar_lea.vmem [#allocation3], %s4167
        // Predicated region
        $region129: #{vit_forward.1} parent=119 // pred_check
          %p4169 = pneg %p659
        $region130: #{vit_forward.1} parent=119 // pred_check_branch
          %4171 = sbr.rel (%p4169) target = $region132
        $region131: #{vit_forward.1} parent=119 // pred_region
          %s4173 = ssub.s32 16, 16
          %4174 = vsyncadd %s4166, %s4173
          %s4175 = smul.addr %s43, 16
          %s4176 = scalar_lea.hbm %s25, %s4175
          %s4178 = sshll.u32 %s4168, 4
          %s4179 = int_to_ptr.vmem [resolvable:$true] %s4178
          %4181 = dma.vmem_to_hbm [thread:$0]  %s4179, 16, %s4176, %s4166
        $region132: #{vit_forward.1} parent=119 // pred_fallthru
          _
      $region120: #{vit_forward.1} parent=5 // pred_fallthru
        _
      %p4182 = scmp.le.s32.totalorder 2, %s34
      // Predicated region
      $region133: #{vit_forward.1} parent=5 // pred_check
        %p4183 = pneg %p4182
      $region134: #{vit_forward.1} parent=5 // pred_check_branch
        %4185 = sbr.rel (%p4183) target = $region136
      $region135: #{vit_forward.1} parent=5 // pred_region
        %s4186 = ssub.s32 %s34, 2
        // Predicated region
        $region137: #{vit_forward.1} parent=135 // pred_check
          %p4187 = pneg %p665
        $region138: #{vit_forward.1} parent=135 // pred_check_branch
          %4189 = sbr.rel (%p4187) target = $region140
        $region139: #{vit_forward.1} parent=135 // pred_region
          %s4190 = sand.u32 %s650, 1
          %s4191 = scalar_lea.sflag [#allocation4], %s4190
          %s4192 = sand.u32 %s650, 1
          %s4193 = scalar_lea.vmem [#allocation3], %s4192
          %4194 = dma.done %s4191, 16
        $region140: #{vit_forward.1} parent=135 // pred_fallthru
          _
      $region136: #{vit_forward.1} parent=5 // pred_fallthru
        _
    $region6: #{vit_forward.1} parent=1 // loop_footer
      %s38 = sadd.s32 1, %s34
    $region7: #{vit_forward.1} parent=1 // loop_footer_branch
      %33 = sbr.rel target = $region3
    $region8: #{vit_forward.1} parent=1 // loop_exit
      _
    %4195 = vsyncpa [#allocation4], 1
    %s4196 = scalar_lea.sflag [#allocation4], 1
    %4197 = vsyncpa %s4196, 1

</llo_original>
